<compile_context>
chip_gen: v7x
topology: tpu7x:2x2x1
jax: 0.10.0
libtpu: 0.0.40
codegen_flags: <defaults>
</compile_context>

<pallas_src>
import numpy as np
import jax
import jax.numpy as jnp
from jax import lax
from jax.experimental import pallas as pl
from jax.experimental.pallas import tpu as pltpu

# --------------------------- module configuration ----------------------------
BATCH = 2
COND_SHAPE = (4, 16, 16)      # (C, H, W) of the conditioning image
NUM_COND_CHANS = 4            # CondNet3 default
NUM_BLOCK = 5                 # CondNet3 default
NUM_NONCOND_BLOCKS = 0        # CondNet3 default (no leading Squeeze blocks)
LEAKY_SLOPE = 0.01            # nn.LeakyReLU() default


def _round_up(x, m):
    return (x + m - 1) // m * m


def _block_configs():
    """Static per-block (spatial, channel, stride) configuration of CondNet3."""
    # TODO(synk): NUM_NONCOND_BLOCKS > 0 would need the Squeeze() space-to-depth
    # preprocessing whose source is not in the spec; the default config (0)
    # never calls it, so it is not implemented here.
    assert NUM_NONCOND_BLOCKS == 0
    C = COND_SHAPE[0] * 4 ** NUM_NONCOND_BLOCKS
    H = COND_SHAPE[1] // 2 ** NUM_NONCOND_BLOCKS
    W = COND_SHAPE[2] // 2 ** NUM_NONCOND_BLOCKS
    ncc = NUM_COND_CHANS
    cfgs = [dict(H=H, W=W, Cin=C, Cmid=ncc, Cout=ncc, stride=1)]
    for _ in range(NUM_BLOCK - NUM_NONCOND_BLOCKS - 1):
        cfgs.append(dict(H=H, W=W, Cin=ncc, Cmid=ncc, Cout=2 * ncc, stride=2))
        H //= 2
        W //= 2
        ncc *= 2
    return cfgs


def _geom(H, W):
    """Flat-padded geometry: (row pitch, buffer length, first interior q, span)."""
    Wp = W + 2
    Np = (H + 2) * Wp
    q_lo = W + 3                 # flat index of interior position (1, 1)
    M = H * Wp - 2               # contiguous span covering every interior position
    return Wp, Np, q_lo, M


def _make_plan():
    cfgs = _block_configs()
    convs = []
    row = 0
    for cfg in cfgs:
        for (ci, co) in ((cfg["Cin"], cfg["Cmid"]), (cfg["Cmid"], cfg["Cout"])):
            convs.append(dict(row=row, Cin=ci, Cout=co, K=9 * ci))
            row += _round_up(co, 8)                       # 8-aligned slab rows
    mask_rows = {}
    for cfg in cfgs:
        key = (cfg["H"], cfg["W"])
        if key not in mask_rows:
            mask_rows[key] = row                          # one mask row per geometry
            row += 1
    wrows = _round_up(row, 8)
    kmax = max(c["K"] for c in convs) + 1                 # +1: bias as a ones-row

    sels = []                                             # block k (stride2) -> k+1 input
    srow = 0
    for k in range(1, len(cfgs) - 1):
        Hs, Ws = cfgs[k]["H"], cfgs[k]["W"]
        Ht, Wt = cfgs[k + 1]["H"], cfgs[k + 1]["W"]
        Ms = _geom(Hs, Ws)[3]
        Mt = _geom(Ht, Wt)[3]
        sels.append(dict(row=srow, Ms=Ms, Mt=Mt, Hs=Hs, Ws=Ws, Ht=Ht, Wt=Wt))
        srow += _round_up(Ms, 8)
    srows = _round_up(max(srow, 8), 8)
    scols = max(s["Mt"] for s in sels)
    mmax = max(_geom(c["H"], c["W"])[3] for c in cfgs)
    return cfgs, convs, mask_rows, wrows, kmax, sels, srows, scols, mmax


(_CFGS, _CONVS, _MASK_ROWS, _WROWS, _KMAX,
 _SELS, _SROWS, _SCOLS, _MMAX) = _make_plan()


def _weight_base_np():
    """Constant part of the weight slab: interior-column 0/1 masks per geometry."""
    base = np.zeros((_WROWS, _KMAX), np.float32)
    for (H, W), r in _MASK_ROWS.items():
        Wp, _, q_lo, M = _geom(H, W)
        cols = (q_lo + np.arange(M)) % Wp
        base[r, :M] = ((cols >= 1) & (cols <= W)).astype(np.float32)
    return base


def _sel_slab_np():
    """0/1 matrices mapping a stride-2 conv's stride-1-resolution output columns
    onto the next block's flat-padded interior span (zero columns at pad cols)."""
    slab = np.zeros((_SROWS, _SCOLS), np.float32)
    for s in _SELS:
        Wps, _, qls, Ms = _geom(s["Hs"], s["Ws"])
        Wpt, _, qlt, Mt = _geom(s["Ht"], s["Wt"])
        T = np.zeros((Ms, Mt), np.float32)
        for mt in range(Mt):
            qt = qlt + mt
            rt, ct = divmod(qt, Wpt)
            if 1 <= ct <= s["Wt"]:
                q = (2 * rt - 1) * Wps + (2 * ct - 1)     # stride-2 center in source
                T[q - qls, mt] = 1.0
        slab[s["row"]:s["row"] + Ms, :Mt] = T
    return slab


_WBASE = _weight_base_np()
_SEL_SLAB = _sel_slab_np()


# ------------------------------- Pallas kernel --------------------------------
def _leaky(v):
    return jnp.where(v >= 0, v, LEAKY_SLOPE * v)


def _condnet3_kernel(x_ref, w_ref, sel_ref, *rest):
    """One grid step = one sample; the whole CondNet3 forward runs in VMEM."""
    cfgs, convs, sels, mask_rows = _CFGS, _CONVS, _SELS, _MASK_ROWS
    nb = len(cfgs)
    out_refs = rest[:nb]
    buf_refs = rest[nb:2 * nb]
    patch_ref = rest[2 * nb]

    def interior_mask(H, W):
        M = _geom(H, W)[3]
        r = mask_rows[(H, W)]
        return w_ref[r:r + 1, 0:M]               # precomputed (1, M) 0/1 lane mask

    def conv3x3(buf, H, W, info):
        """3x3 'same' conv at stride-1 resolution; returns (Cout, M) channel-major."""
        Wp, _, _, M = _geom(H, W)
        Cin, Cout, K, r = info["Cin"], info["Cout"], info["K"], info["row"]
        # K-folded im2col: 9 contiguous lane slices + a ones-row (folds the bias)
        for t in range(9):
            dy, dx = divmod(t, 3)
            off = dy * Wp + dx
            patch_ref[t * Cin:(t + 1) * Cin, 0:M] = buf[0:Cin, off:off + M]
        patch_ref[K:K + 1, 0:M] = jnp.ones((1, M), jnp.float32)
        w = w_ref[r:r + Cout, 0:K + 1]           # (Cout, 9*Cin + 1), bias in last col
        return jnp.dot(w, patch_ref[0:K + 1, 0:M],
                       preferred_element_type=jnp.float32)

    # block 0 input: the (already zero-padded, flattened) conditioning image
    buf_refs[0][...] = x_ref[0]

    prev = None          # previous block's conv2 output at stride-1 resolution
    conv_i = 0
    sel_i = 0
    for blk, cfg in enumerate(cfgs):
        H, W, C = cfg["H"], cfg["W"], cfg["Cin"]
        _, Np, q_lo, M = _geom(H, W)
        buf = buf_refs[blk]

        if blk > 0:
            # halo-only zeroing: the two end spans outside the interior window
            buf[0:C, 0:q_lo] = jnp.zeros((C, q_lo), jnp.float32)
            buf[0:C, q_lo + M:Np] = jnp.zeros((C, q_lo), jnp.float32)
            if cfgs[blk - 1]["stride"] == 1:
                # same geometry handoff: LeakyReLU + re-zero in-span pad columns
                buf[0:C, q_lo:q_lo + M] = _leaky(prev) * interior_mask(H, W)
            else:
                # stride-2 handoff: downsample + re-pad via 0/1 selection matmul
                s = sels[sel_i]
                sel_i += 1
                T = sel_ref[s["row"]:s["row"] + s["Ms"], 0:s["Mt"]]
                buf[0:C, q_lo:q_lo + M] = jnp.dot(
                    _leaky(prev), T, preferred_element_type=jnp.float32)

        # conv1 (+ LeakyReLU), result written back into the same buffer
        h1 = conv3x3(buf, H, W, convs[conv_i]); conv_i += 1
        buf[0:C, q_lo:q_lo + M] = _leaky(h1) * interior_mask(H, W)

        # conv2, computed at stride-1 resolution (valid positions extracted by the
        # wrapper / the next block's selection matmul)
        h2 = conv3x3(buf, H, W, convs[conv_i]); conv_i += 1

        out_refs[blk][0] = h2                    # lane-dense channel-major store
        prev = h2


# ------------------------------ public forward --------------------------------
@jax.jit
def condnet3_forward(params, cond_nchw):
    """CondNet3.forward(c): returns [block0_out, ..., block4_out] in NCHW."""
    cfgs, convs = _CFGS, _CONVS
    B = cond_nchw.shape[0]
    C0, H0, W0 = COND_SHAPE
    Np0 = (H0 + 2) * (W0 + 2)

    # flat-padded NCHW input (layout prep is free XLA glue outside the kernel)
    x_flat = jnp.pad(cond_nchw.astype(jnp.float32),
                     ((0, 0), (0, 0), (1, 1), (1, 1))).reshape(B, C0, Np0)

    # pack every conv's (pre-transposed) weights + bias into one lane-dense slab
    w_slab = jnp.asarray(_WBASE)
    idx = 0
    for blk in range(len(cfgs)):
        p = params[f"block{blk}"]
        for j in (1, 2):
            info = convs[idx]; idx += 1
            co, K, r = info["Cout"], info["K"], info["row"]
            wp = jnp.transpose(p[f"w{j}"], (3, 0, 1, 2)).reshape(co, K)
            wb = jnp.concatenate([wp, p[f"b{j}"].reshape(co, 1)], axis=1)
            w_slab = lax.dynamic_update_slice(w_slab, wb.astype(jnp.float32), (r, 0))
    sel_slab = jnp.asarray(_SEL_SLAB)

    in_specs = [
        pl.BlockSpec((1, C0, Np0), lambda b: (b, 0, 0)),
        pl.BlockSpec((_WROWS, _KMAX), lambda b: (0, 0)),
        pl.BlockSpec((_SROWS, _SCOLS), lambda b: (0, 0)),
    ]
    out_shapes, out_specs, scratch = [], [], []
    for cfg in cfgs:
        _, Np, _, M = _geom(cfg["H"], cfg["W"])
        out_shapes.append(jax.ShapeDtypeStruct((B, cfg["Cout"], M), jnp.float32))
        out_specs.append(pl.BlockSpec((1, cfg["Cout"], M), lambda b: (b, 0, 0)))
        scratch.append(pltpu.VMEM((cfg["Cin"], Np), jnp.float32))
    scratch.append(pltpu.VMEM((_KMAX, _MMAX), jnp.float32))   # shared patch matrix

    outs = pl.pallas_call(
        _condnet3_kernel,
        grid=(B,),
        out_shape=tuple(out_shapes),
        in_specs=in_specs,
        out_specs=tuple(out_specs),
        scratch_shapes=scratch,
        compiler_params=pltpu.CompilerParams(
            dimension_semantics=("parallel",)),
    )(x_flat, w_slab, sel_slab)

    # un-pad / stride-extract the padded-flat outputs (free XLA slicing)
    results = []
    for o, cfg in zip(outs, cfgs):
        H, W, stride, Cout = cfg["H"], cfg["W"], cfg["stride"], cfg["Cout"]
        _, Np, q_lo, M = _geom(H, W)
        full = jnp.pad(o, ((0, 0), (0, 0), (q_lo, q_lo)))
        full = full.reshape(B, Cout, H + 2, W + 2)
        if stride == 1:
            results.append(full[:, :, 1:H + 1, 1:W + 1])
        else:
            results.append(full[:, :, 1:H:2, 1:W:2])
    return results


# ------------------------------ parameter init --------------------------------
def init_params(seed=1):
    key = jax.random.PRNGKey(seed)
    params = {}
    for blk, cfg in enumerate(_CFGS):
        p = {}
        for i, (ci, co) in enumerate(
                ((cfg["Cin"], cfg["Cmid"]), (cfg["Cmid"], cfg["Cout"])), start=1):
            key, kw, kb = jax.random.split(key, 3)
            std = float(np.sqrt(2.0 / (9 * ci)))
            p[f"w{i}"] = std * jax.random.normal(kw, (3, 3, ci, co), jnp.float32)
            p[f"b{i}"] = 0.01 * jax.random.normal(kb, (1, co), jnp.float32)
        params[f"block{blk}"] = p
    return params


# --------------------------- pure-JAX reference -------------------------------
def _ref_conv(x, w, b, stride):
    y = lax.conv_general_dilated(
        x, w, window_strides=(stride, stride), padding=((1, 1), (1, 1)),
        dimension_numbers=("NCHW", "HWIO", "NCHW"),
        precision=lax.Precision.HIGHEST)
    return y + b.reshape(1, -1, 1, 1)


def reference_forward(params, cond_nchw):
    outs = []
    h = cond_nchw
    for blk, cfg in enumerate(_CFGS):
        p = params[f"block{blk}"]
        x = h if blk == 0 else jax.nn.leaky_relu(h, LEAKY_SLOPE)
        y = _ref_conv(x, p["w1"], p["b1"], 1)
        y = jax.nn.leaky_relu(y, LEAKY_SLOPE)
        y = _ref_conv(y, p["w2"], p["b2"], cfg["stride"])
        outs.append(y)
        h = y
    return outs


# ----------------------------------- main --------------------------------------
if __name__ == "__main__":
    cond = jax.random.normal(jax.random.PRNGKey(0), (BATCH,) + COND_SHAPE,
                             dtype=jnp.float32)
    params = init_params(seed=1)

    outs = jax.block_until_ready(condnet3_forward(params, cond))
    refs = jax.block_until_ready(jax.jit(reference_forward)(params, cond))

    expected = []
    for cfg in _CFGS:
        Ho, Wo = cfg["H"] // cfg["stride"], cfg["W"] // cfg["stride"]
        expected.append((BATCH, cfg["Cout"], Ho, Wo))
    assert [tuple(o.shape) for o in outs] == expected, [o.shape for o in outs]

    for o, r in zip(outs, refs):
        assert bool(jnp.all(jnp.isfinite(o)))
        np.testing.assert_allclose(np.asarray(o), np.asarray(r),
                                   rtol=5e-2, atol=2e-2)
    print("KERNEL_OK")
</pallas_src>

<mosaic_0001>
module attributes {stable_mosaic.version = 11 : i64} {
  func.func @_condnet3_kernel(%arg0: i32, %arg1: memref<1x4x324xf32, #tpu.memory_space<vmem>>, %arg2: memref<208x289xf32, #tpu.memory_space<vmem>>, %arg3: memref<392x78xf32, #tpu.memory_space<vmem>>, %arg4: memref<1x4x286xf32, #tpu.memory_space<vmem>>, %arg5: memref<1x8x286xf32, #tpu.memory_space<vmem>>, %arg6: memref<1x16x78xf32, #tpu.memory_space<vmem>>, %arg7: memref<1x32x22xf32, #tpu.memory_space<vmem>>, %arg8: memref<1x64x6xf32, #tpu.memory_space<vmem>>, %arg9: memref<4x324xf32, #tpu.memory_space<vmem>>, %arg10: memref<4x324xf32, #tpu.memory_space<vmem>>, %arg11: memref<8x100xf32, #tpu.memory_space<vmem>>, %arg12: memref<16x36xf32, #tpu.memory_space<vmem>>, %arg13: memref<32x16xf32, #tpu.memory_space<vmem>>, %arg14: memref<289x286xf32, #tpu.memory_space<vmem>>) attributes {dimension_semantics = [#tpu.dimension_semantics<parallel>], iteration_bounds = array<i64: 2>, scalar_prefetch = 0 : i64, scratch_operands = 6 : i64, tpu.core_type = #tpu.core_type<tc>, window_params = [{transform_indices = @transform_0, window_bounds = array<i64: 1, 4, 324>}, {pipeline_mode = #tpu.pipeline_mode<synchronous>, transform_indices = @transform_1, window_bounds = array<i64: 208, 289>}, {pipeline_mode = #tpu.pipeline_mode<synchronous>, transform_indices = @transform_2, window_bounds = array<i64: 392, 78>}, {transform_indices = @transform_3, window_bounds = array<i64: 1, 4, 286>}, {transform_indices = @transform_4, window_bounds = array<i64: 1, 8, 286>}, {transform_indices = @transform_5, window_bounds = array<i64: 1, 16, 78>}, {transform_indices = @transform_6, window_bounds = array<i64: 1, 32, 22>}, {transform_indices = @transform_7, window_bounds = array<i64: 1, 64, 6>}]} {
    %c0 = arith.constant 0 : index
    %c0_0 = arith.constant 0 : index
    %c0_1 = arith.constant 0 : index
    %0 = vector.load %arg1[%c0, %c0_0, %c0_1] : memref<1x4x324xf32, #tpu.memory_space<vmem>>, vector<1x4x324xf32>
    %1 = vector.shape_cast %0 : vector<1x4x324xf32> to vector<4x324xf32>
    %c0_2 = arith.constant 0 : index
    %c0_3 = arith.constant 0 : index
    %2 = vector.load %arg9[%c0_2, %c0_3] : memref<4x324xf32, #tpu.memory_space<vmem>>, vector<4x324xf32>
    tpu.vector_store %arg9[%c0_2, %c0_3], %1 {strides = array<i32>} : memref<4x324xf32, #tpu.memory_space<vmem>>, vector<4x324xf32>,
    %c0_4 = arith.constant 0 : index
    %c0_5 = arith.constant 0 : index
    %3 = vector.load %arg9[%c0_4, %c0_5] : memref<4x324xf32, #tpu.memory_space<vmem>>, vector<4x286xf32>
    %c0_6 = arith.constant 0 : index
    %c0_7 = arith.constant 0 : index
    %4 = vector.load %arg14[%c0_6, %c0_7] : memref<289x286xf32, #tpu.memory_space<vmem>>, vector<4x286xf32>
    tpu.vector_store %arg14[%c0_6, %c0_7], %3 {strides = array<i32>} : memref<289x286xf32, #tpu.memory_space<vmem>>, vector<4x286xf32>,
    %c0_8 = arith.constant 0 : index
    %c1 = arith.constant 1 : index
    %5 = vector.load %arg9[%c0_8, %c1] : memref<4x324xf32, #tpu.memory_space<vmem>>, vector<4x286xf32>
    %c4 = arith.constant 4 : index
    %c0_9 = arith.constant 0 : index
    %6 = vector.load %arg14[%c4, %c0_9] : memref<289x286xf32, #tpu.memory_space<vmem>>, vector<4x286xf32>
    tpu.vector_store %arg14[%c4, %c0_9], %5 {strides = array<i32>} : memref<289x286xf32, #tpu.memory_space<vmem>>, vector<4x286xf32>,
    %c0_10 = arith.constant 0 : index
    %c2 = arith.constant 2 : index
    %7 = vector.load %arg9[%c0_10, %c2] : memref<4x324xf32, #tpu.memory_space<vmem>>, vector<4x286xf32>
    %c8 = arith.constant 8 : index
    %c0_11 = arith.constant 0 : index
    %8 = vector.load %arg14[%c8, %c0_11] : memref<289x286xf32, #tpu.memory_space<vmem>>, vector<4x286xf32>
    tpu.vector_store %arg14[%c8, %c0_11], %7 {strides = array<i32>} : memref<289x286xf32, #tpu.memory_space<vmem>>, vector<4x286xf32>,
    %c0_12 = arith.constant 0 : index
    %c18 = arith.constant 18 : index
    %9 = vector.load %arg9[%c0_12, %c18] : memref<4x324xf32, #tpu.memory_space<vmem>>, vector<4x286xf32>
    %c12 = arith.constant 12 : index
    %c0_13 = arith.constant 0 : index
    %10 = vector.load %arg14[%c12, %c0_13] : memref<289x286xf32, #tpu.memory_space<vmem>>, vector<4x286xf32>
    tpu.vector_store %arg14[%c12, %c0_13], %9 {strides = array<i32>} : memref<289x286xf32, #tpu.memory_space<vmem>>, vector<4x286xf32>,
    %c0_14 = arith.constant 0 : index
    %c19 = arith.constant 19 : index
    %11 = vector.load %arg9[%c0_14, %c19] : memref<4x324xf32, #tpu.memory_space<vmem>>, vector<4x286xf32>
    %c16 = arith.constant 16 : index
    %c0_15 = arith.constant 0 : index
    %12 = vector.load %arg14[%c16, %c0_15] : memref<289x286xf32, #tpu.memory_space<vmem>>, vector<4x286xf32>
    tpu.vector_store %arg14[%c16, %c0_15], %11 {strides = array<i32>} : memref<289x286xf32, #tpu.memory_space<vmem>>, vector<4x286xf32>,
    %c0_16 = arith.constant 0 : index
    %c20 = arith.constant 20 : index
    %13 = vector.load %arg9[%c0_16, %c20] : memref<4x324xf32, #tpu.memory_space<vmem>>, vector<4x286xf32>
    %c20_17 = arith.constant 20 : index
    %c0_18 = arith.constant 0 : index
    %14 = vector.load %arg14[%c20_17, %c0_18] : memref<289x286xf32, #tpu.memory_space<vmem>>, vector<4x286xf32>
    tpu.vector_store %arg14[%c20_17, %c0_18], %13 {strides = array<i32>} : memref<289x286xf32, #tpu.memory_space<vmem>>, vector<4x286xf32>,
    %c0_19 = arith.constant 0 : index
    %c36 = arith.constant 36 : index
    %15 = vector.load %arg9[%c0_19, %c36] : memref<4x324xf32, #tpu.memory_space<vmem>>, vector<4x286xf32>
    %c24 = arith.constant 24 : index
    %c0_20 = arith.constant 0 : index
    %16 = vector.load %arg14[%c24, %c0_20] : memref<289x286xf32, #tpu.memory_space<vmem>>, vector<4x286xf32>
    tpu.vector_store %arg14[%c24, %c0_20], %15 {strides = array<i32>} : memref<289x286xf32, #tpu.memory_space<vmem>>, vector<4x286xf32>,
    %c0_21 = arith.constant 0 : index
    %c37 = arith.constant 37 : index
    %17 = vector.load %arg9[%c0_21, %c37] : memref<4x324xf32, #tpu.memory_space<vmem>>, vector<4x286xf32>
    %c28 = arith.constant 28 : index
    %c0_22 = arith.constant 0 : index
    %18 = vector.load %arg14[%c28, %c0_22] : memref<289x286xf32, #tpu.memory_space<vmem>>, vector<4x286xf32>
    tpu.vector_store %arg14[%c28, %c0_22], %17 {strides = array<i32>} : memref<289x286xf32, #tpu.memory_space<vmem>>, vector<4x286xf32>,
    %c0_23 = arith.constant 0 : index
    %c38 = arith.constant 38 : index
    %19 = vector.load %arg9[%c0_23, %c38] : memref<4x324xf32, #tpu.memory_space<vmem>>, vector<4x286xf32>
    %c32 = arith.constant 32 : index
    %c0_24 = arith.constant 0 : index
    %20 = vector.load %arg14[%c32, %c0_24] : memref<289x286xf32, #tpu.memory_space<vmem>>, vector<4x286xf32>
    tpu.vector_store %arg14[%c32, %c0_24], %19 {strides = array<i32>} : memref<289x286xf32, #tpu.memory_space<vmem>>, vector<4x286xf32>,
    %cst = arith.constant 1.000000e+00 : f32
    %21 = vector.broadcast %cst : f32 to vector<1x286xf32>
    %c36_25 = arith.constant 36 : index
    %c0_26 = arith.constant 0 : index
    %22 = vector.load %arg14[%c36_25, %c0_26] : memref<289x286xf32, #tpu.memory_space<vmem>>, vector<1x286xf32>
    tpu.vector_store %arg14[%c36_25, %c0_26], %21 {strides = array<i32>} : memref<289x286xf32, #tpu.memory_space<vmem>>, vector<1x286xf32>,
    %c0_27 = arith.constant 0 : index
    %c0_28 = arith.constant 0 : index
    %23 = vector.load %arg2[%c0_27, %c0_28] : memref<208x289xf32, #tpu.memory_space<vmem>>, vector<4x37xf32>
    %c0_29 = arith.constant 0 : index
    %c0_30 = arith.constant 0 : index
    %24 = vector.load %arg14[%c0_29, %c0_30] : memref<289x286xf32, #tpu.memory_space<vmem>>, vector<37x286xf32>
    %cst_31 = arith.constant dense<0.000000e+00> : vector<4x286xf32>
    %25 = tpu.matmul %23, %24, %cst_31 {dimension_numbers = #tpu.dot_dimension_numbers<[1], [0], [0], [1], [0, 0, 1, 1], [], []>} : vector<4x37xf32>, vector<37x286xf32>, vector<4x286xf32> -> vector<4x286xf32>
    %cst_32 = arith.constant 0.000000e+00 : f32
    %26 = vector.broadcast %cst_32 : f32 to vector<4x286xf32>
    %27 = arith.cmpf oge, %25, %26 : vector<4x286xf32>
    %cst_33 = arith.constant 0.00999999977 : f32
    %28 = vector.broadcast %cst_33 : f32 to vector<4x286xf32>
    %29 = arith.mulf %28, %25 : vector<4x286xf32>
    %30 = arith.select %27, %25, %29 : vector<4x286xi1>, vector<4x286xf32>
    %c200 = arith.constant 200 : index
    %c0_34 = arith.constant 0 : index
    %31 = vector.load %arg2[%c200, %c0_34] : memref<208x289xf32, #tpu.memory_space<vmem>>, vector<1x286xf32>
    %32 = vector.broadcast %31 : vector<1x286xf32> to vector<4x286xf32>
    %33 = arith.mulf %30, %32 : vector<4x286xf32>
    %c0_35 = arith.constant 0 : index
    %c19_36 = arith.constant 19 : index
    %34 = vector.load %arg9[%c0_35, %c19_36] : memref<4x324xf32, #tpu.memory_space<vmem>>, vector<4x286xf32>
    tpu.vector_store %arg9[%c0_35, %c19_36], %33 {strides = array<i32>} : memref<4x324xf32, #tpu.memory_space<vmem>>, vector<4x286xf32>,
    %c0_37 = arith.constant 0 : index
    %c0_38 = arith.constant 0 : index
    %35 = vector.load %arg9[%c0_37, %c0_38] : memref<4x324xf32, #tpu.memory_space<vmem>>, vector<4x286xf32>
    %c0_39 = arith.constant 0 : index
    %c0_40 = arith.constant 0 : index
    %36 = vector.load %arg14[%c0_39, %c0_40] : memref<289x286xf32, #tpu.memory_space<vmem>>, vector<4x286xf32>
    tpu.vector_store %arg14[%c0_39, %c0_40], %35 {strides = array<i32>} : memref<289x286xf32, #tpu.memory_space<vmem>>, vector<4x286xf32>,
    %c0_41 = arith.constant 0 : index
    %c1_42 = arith.constant 1 : index
    %37 = vector.load %arg9[%c0_41, %c1_42] : memref<4x324xf32, #tpu.memory_space<vmem>>, vector<4x286xf32>
    %c4_43 = arith.constant 4 : index
    %c0_44 = arith.constant 0 : index
    %38 = vector.load %arg14[%c4_43, %c0_44] : memref<289x286xf32, #tpu.memory_space<vmem>>, vector<4x286xf32>
    tpu.vector_store %arg14[%c4_43, %c0_44], %37 {strides = array<i32>} : memref<289x286xf32, #tpu.memory_space<vmem>>, vector<4x286xf32>,
    %c0_45 = arith.constant 0 : index
    %c2_46 = arith.constant 2 : index
    %39 = vector.load %arg9[%c0_45, %c2_46] : memref<4x324xf32, #tpu.memory_space<vmem>>, vector<4x286xf32>
    %c8_47 = arith.constant 8 : index
    %c0_48 = arith.constant 0 : index
    %40 = vector.load %arg14[%c8_47, %c0_48] : memref<289x286xf32, #tpu.memory_space<vmem>>, vector<4x286xf32>
    tpu.vector_store %arg14[%c8_47, %c0_48], %39 {strides = array<i32>} : memref<289x286xf32, #tpu.memory_space<vmem>>, vector<4x286xf32>,
    %c0_49 = arith.constant 0 : index
    %c18_50 = arith.constant 18 : index
    %41 = vector.load %arg9[%c0_49, %c18_50] : memref<4x324xf32, #tpu.memory_space<vmem>>, vector<4x286xf32>
    %c12_51 = arith.constant 12 : index
    %c0_52 = arith.constant 0 : index
    %42 = vector.load %arg14[%c12_51, %c0_52] : memref<289x286xf32, #tpu.memory_space<vmem>>, vector<4x286xf32>
    tpu.vector_store %arg14[%c12_51, %c0_52], %41 {strides = array<i32>} : memref<289x286xf32, #tpu.memory_space<vmem>>, vector<4x286xf32>,
    %c0_53 = arith.constant 0 : index
    %c19_54 = arith.constant 19 : index
    %43 = vector.load %arg9[%c0_53, %c19_54] : memref<4x324xf32, #tpu.memory_space<vmem>>, vector<4x286xf32>
    %c16_55 = arith.constant 16 : index
    %c0_56 = arith.constant 0 : index
    %44 = vector.load %arg14[%c16_55, %c0_56] : memref<289x286xf32, #tpu.memory_space<vmem>>, vector<4x286xf32>
    tpu.vector_store %arg14[%c16_55, %c0_56], %43 {strides = array<i32>} : memref<289x286xf32, #tpu.memory_space<vmem>>, vector<4x286xf32>,
    %c0_57 = arith.constant 0 : index
    %c20_58 = arith.constant 20 : index
    %45 = vector.load %arg9[%c0_57, %c20_58] : memref<4x324xf32, #tpu.memory_space<vmem>>, vector<4x286xf32>
    %c20_59 = arith.constant 20 : index
    %c0_60 = arith.constant 0 : index
    %46 = vector.load %arg14[%c20_59, %c0_60] : memref<289x286xf32, #tpu.memory_space<vmem>>, vector<4x286xf32>
    tpu.vector_store %arg14[%c20_59, %c0_60], %45 {strides = array<i32>} : memref<289x286xf32, #tpu.memory_space<vmem>>, vector<4x286xf32>,
    %c0_61 = arith.constant 0 : index
    %c36_62 = arith.constant 36 : index
    %47 = vector.load %arg9[%c0_61, %c36_62] : memref<4x324xf32, #tpu.memory_space<vmem>>, vector<4x286xf32>
    %c24_63 = arith.constant 24 : index
    %c0_64 = arith.constant 0 : index
    %48 = vector.load %arg14[%c24_63, %c0_64] : memref<289x286xf32, #tpu.memory_space<vmem>>, vector<4x286xf32>
    tpu.vector_store %arg14[%c24_63, %c0_64], %47 {strides = array<i32>} : memref<289x286xf32, #tpu.memory_space<vmem>>, vector<4x286xf32>,
    %c0_65 = arith.constant 0 : index
    %c37_66 = arith.constant 37 : index
    %49 = vector.load %arg9[%c0_65, %c37_66] : memref<4x324xf32, #tpu.memory_space<vmem>>, vector<4x286xf32>
    %c28_67 = arith.constant 28 : index
    %c0_68 = arith.constant 0 : index
    %50 = vector.load %arg14[%c28_67, %c0_68] : memref<289x286xf32, #tpu.memory_space<vmem>>, vector<4x286xf32>
    tpu.vector_store %arg14[%c28_67, %c0_68], %49 {strides = array<i32>} : memref<289x286xf32, #tpu.memory_space<vmem>>, vector<4x286xf32>,
    %c0_69 = arith.constant 0 : index
    %c38_70 = arith.constant 38 : index
    %51 = vector.load %arg9[%c0_69, %c38_70] : memref<4x324xf32, #tpu.memory_space<vmem>>, vector<4x286xf32>
    %c32_71 = arith.constant 32 : index
    %c0_72 = arith.constant 0 : index
    %52 = vector.load %arg14[%c32_71, %c0_72] : memref<289x286xf32, #tpu.memory_space<vmem>>, vector<4x286xf32>
    tpu.vector_store %arg14[%c32_71, %c0_72], %51 {strides = array<i32>} : memref<289x286xf32, #tpu.memory_space<vmem>>, vector<4x286xf32>,
    %cst_73 = arith.constant 1.000000e+00 : f32
    %53 = vector.broadcast %cst_73 : f32 to vector<1x286xf32>
    %c36_74 = arith.constant 36 : index
    %c0_75 = arith.constant 0 : index
    %54 = vector.load %arg14[%c36_74, %c0_75] : memref<289x286xf32, #tpu.memory_space<vmem>>, vector<1x286xf32>
    tpu.vector_store %arg14[%c36_74, %c0_75], %53 {strides = array<i32>} : memref<289x286xf32, #tpu.memory_space<vmem>>, vector<1x286xf32>,
    %c8_76 = arith.constant 8 : index
    %c0_77 = arith.constant 0 : index
    %55 = vector.load %arg2[%c8_76, %c0_77] : memref<208x289xf32, #tpu.memory_space<vmem>>, vector<4x37xf32>
    %c0_78 = arith.constant 0 : index
    %c0_79 = arith.constant 0 : index
    %56 = vector.load %arg14[%c0_78, %c0_79] : memref<289x286xf32, #tpu.memory_space<vmem>>, vector<37x286xf32>
    %cst_80 = arith.constant dense<0.000000e+00> : vector<4x286xf32>
    %57 = tpu.matmul %55, %56, %cst_80 {dimension_numbers = #tpu.dot_dimension_numbers<[1], [0], [0], [1], [0, 0, 1, 1], [], []>} : vector<4x37xf32>, vector<37x286xf32>, vector<4x286xf32> -> vector<4x286xf32>
    %c0_81 = arith.constant 0 : index
    %c0_82 = arith.constant 0 : index
    %c0_83 = arith.constant 0 : index
    %58 = vector.load %arg4[%c0_81, %c0_82, %c0_83] : memref<1x4x286xf32, #tpu.memory_space<vmem>>, vector<1x4x286xf32>
    %59 = vector.shape_cast %58 : vector<1x4x286xf32> to vector<4x286xf32>
    %60 = vector.shape_cast %57 : vector<4x286xf32> to vector<1x4x286xf32>
    tpu.vector_store %arg4[%c0_81, %c0_82, %c0_83], %60 {strides = array<i32>} : memref<1x4x286xf32, #tpu.memory_space<vmem>>, vector<1x4x286xf32>,
    %cst_84 = arith.constant 0.000000e+00 : f32
    %61 = vector.broadcast %cst_84 : f32 to vector<4x19xf32>
    %c0_85 = arith.constant 0 : index
    %c0_86 = arith.constant 0 : index
    %62 = vector.load %arg10[%c0_85, %c0_86] : memref<4x324xf32, #tpu.memory_space<vmem>>, vector<4x19xf32>
    tpu.vector_store %arg10[%c0_85, %c0_86], %61 {strides = array<i32>} : memref<4x324xf32, #tpu.memory_space<vmem>>, vector<4x19xf32>,
    %cst_87 = arith.constant 0.000000e+00 : f32
    %63 = vector.broadcast %cst_87 : f32 to vector<4x19xf32>
    %c0_88 = arith.constant 0 : index
    %c305 = arith.constant 305 : index
    %64 = vector.load %arg10[%c0_88, %c305] : memref<4x324xf32, #tpu.memory_space<vmem>>, vector<4x19xf32>
    tpu.vector_store %arg10[%c0_88, %c305], %63 {strides = array<i32>} : memref<4x324xf32, #tpu.memory_space<vmem>>, vector<4x19xf32>,
    %cst_89 = arith.constant 0.000000e+00 : f32
    %65 = vector.broadcast %cst_89 : f32 to vector<4x286xf32>
    %66 = arith.cmpf oge, %57, %65 : vector<4x286xf32>
    %cst_90 = arith.constant 0.00999999977 : f32
    %67 = vector.broadcast %cst_90 : f32 to vector<4x286xf32>
    %68 = arith.mulf %67, %57 : vector<4x286xf32>
    %69 = arith.select %66, %57, %68 : vector<4x286xi1>, vector<4x286xf32>
    %c200_91 = arith.constant 200 : index
    %c0_92 = arith.constant 0 : index
    %70 = vector.load %arg2[%c200_91, %c0_92] : memref<208x289xf32, #tpu.memory_space<vmem>>, vector<1x286xf32>
    %71 = vector.broadcast %70 : vector<1x286xf32> to vector<4x286xf32>
    %72 = arith.mulf %69, %71 : vector<4x286xf32>
    %c0_93 = arith.constant 0 : index
    %c19_94 = arith.constant 19 : index
    %73 = vector.load %arg10[%c0_93, %c19_94] : memref<4x324xf32, #tpu.memory_space<vmem>>, vector<4x286xf32>
    tpu.vector_store %arg10[%c0_93, %c19_94], %72 {strides = array<i32>} : memref<4x324xf32, #tpu.memory_space<vmem>>, vector<4x286xf32>,
    %c0_95 = arith.constant 0 : index
    %c0_96 = arith.constant 0 : index
    %74 = vector.load %arg10[%c0_95, %c0_96] : memref<4x324xf32, #tpu.memory_space<vmem>>, vector<4x286xf32>
    %c0_97 = arith.constant 0 : index
    %c0_98 = arith.constant 0 : index
    %75 = vector.load %arg14[%c0_97, %c0_98] : memref<289x286xf32, #tpu.memory_space<vmem>>, vector<4x286xf32>
    tpu.vector_store %arg14[%c0_97, %c0_98], %74 {strides = array<i32>} : memref<289x286xf32, #tpu.memory_space<vmem>>, vector<4x286xf32>,
    %c0_99 = arith.constant 0 : index
    %c1_100 = arith.constant 1 : index
    %76 = vector.load %arg10[%c0_99, %c1_100] : memref<4x324xf32, #tpu.memory_space<vmem>>, vector<4x286xf32>
    %c4_101 = arith.constant 4 : index
    %c0_102 = arith.constant 0 : index
    %77 = vector.load %arg14[%c4_101, %c0_102] : memref<289x286xf32, #tpu.memory_space<vmem>>, vector<4x286xf32>
    tpu.vector_store %arg14[%c4_101, %c0_102], %76 {strides = array<i32>} : memref<289x286xf32, #tpu.memory_space<vmem>>, vector<4x286xf32>,
    %c0_103 = arith.constant 0 : index
    %c2_104 = arith.constant 2 : index
    %78 = vector.load %arg10[%c0_103, %c2_104] : memref<4x324xf32, #tpu.memory_space<vmem>>, vector<4x286xf32>
    %c8_105 = arith.constant 8 : index
    %c0_106 = arith.constant 0 : index
    %79 = vector.load %arg14[%c8_105, %c0_106] : memref<289x286xf32, #tpu.memory_space<vmem>>, vector<4x286xf32>
    tpu.vector_store %arg14[%c8_105, %c0_106], %78 {strides = array<i32>} : memref<289x286xf32, #tpu.memory_space<vmem>>, vector<4x286xf32>,
    %c0_107 = arith.constant 0 : index
    %c18_108 = arith.constant 18 : index
    %80 = vector.load %arg10[%c0_107, %c18_108] : memref<4x324xf32, #tpu.memory_space<vmem>>, vector<4x286xf32>
    %c12_109 = arith.constant 12 : index
    %c0_110 = arith.constant 0 : index
    %81 = vector.load %arg14[%c12_109, %c0_110] : memref<289x286xf32, #tpu.memory_space<vmem>>, vector<4x286xf32>
    tpu.vector_store %arg14[%c12_109, %c0_110], %80 {strides = array<i32>} : memref<289x286xf32, #tpu.memory_space<vmem>>, vector<4x286xf32>,
    %c0_111 = arith.constant 0 : index
    %c19_112 = arith.constant 19 : index
    %82 = vector.load %arg10[%c0_111, %c19_112] : memref<4x324xf32, #tpu.memory_space<vmem>>, vector<4x286xf32>
    %c16_113 = arith.constant 16 : index
    %c0_114 = arith.constant 0 : index
    %83 = vector.load %arg14[%c16_113, %c0_114] : memref<289x286xf32, #tpu.memory_space<vmem>>, vector<4x286xf32>
    tpu.vector_store %arg14[%c16_113, %c0_114], %82 {strides = array<i32>} : memref<289x286xf32, #tpu.memory_space<vmem>>, vector<4x286xf32>,
    %c0_115 = arith.constant 0 : index
    %c20_116 = arith.constant 20 : index
    %84 = vector.load %arg10[%c0_115, %c20_116] : memref<4x324xf32, #tpu.memory_space<vmem>>, vector<4x286xf32>
    %c20_117 = arith.constant 20 : index
    %c0_118 = arith.constant 0 : index
    %85 = vector.load %arg14[%c20_117, %c0_118] : memref<289x286xf32, #tpu.memory_space<vmem>>, vector<4x286xf32>
    tpu.vector_store %arg14[%c20_117, %c0_118], %84 {strides = array<i32>} : memref<289x286xf32, #tpu.memory_space<vmem>>, vector<4x286xf32>,
    %c0_119 = arith.constant 0 : index
    %c36_120 = arith.constant 36 : index
    %86 = vector.load %arg10[%c0_119, %c36_120] : memref<4x324xf32, #tpu.memory_space<vmem>>, vector<4x286xf32>
    %c24_121 = arith.constant 24 : index
    %c0_122 = arith.constant 0 : index
    %87 = vector.load %arg14[%c24_121, %c0_122] : memref<289x286xf32, #tpu.memory_space<vmem>>, vector<4x286xf32>
    tpu.vector_store %arg14[%c24_121, %c0_122], %86 {strides = array<i32>} : memref<289x286xf32, #tpu.memory_space<vmem>>, vector<4x286xf32>,
    %c0_123 = arith.constant 0 : index
    %c37_124 = arith.constant 37 : index
    %88 = vector.load %arg10[%c0_123, %c37_124] : memref<4x324xf32, #tpu.memory_space<vmem>>, vector<4x286xf32>
    %c28_125 = arith.constant 28 : index
    %c0_126 = arith.constant 0 : index
    %89 = vector.load %arg14[%c28_125, %c0_126] : memref<289x286xf32, #tpu.memory_space<vmem>>, vector<4x286xf32>
    tpu.vector_store %arg14[%c28_125, %c0_126], %88 {strides = array<i32>} : memref<289x286xf32, #tpu.memory_space<vmem>>, vector<4x286xf32>,
    %c0_127 = arith.constant 0 : index
    %c38_128 = arith.constant 38 : index
    %90 = vector.load %arg10[%c0_127, %c38_128] : memref<4x324xf32, #tpu.memory_space<vmem>>, vector<4x286xf32>
    %c32_129 = arith.constant 32 : index
    %c0_130 = arith.constant 0 : index
    %91 = vector.load %arg14[%c32_129, %c0_130] : memref<289x286xf32, #tpu.memory_space<vmem>>, vector<4x286xf32>
    tpu.vector_store %arg14[%c32_129, %c0_130], %90 {strides = array<i32>} : memref<289x286xf32, #tpu.memory_space<vmem>>, vector<4x286xf32>,
    %cst_131 = arith.constant 1.000000e+00 : f32
    %92 = vector.broadcast %cst_131 : f32 to vector<1x286xf32>
    %c36_132 = arith.constant 36 : index
    %c0_133 = arith.constant 0 : index
    %93 = vector.load %arg14[%c36_132, %c0_133] : memref<289x286xf32, #tpu.memory_space<vmem>>, vector<1x286xf32>
    tpu.vector_store %arg14[%c36_132, %c0_133], %92 {strides = array<i32>} : memref<289x286xf32, #tpu.memory_space<vmem>>, vector<1x286xf32>,
    %c16_134 = arith.constant 16 : index
    %c0_135 = arith.constant 0 : index
    %94 = vector.load %arg2[%c16_134, %c0_135] : memref<208x289xf32, #tpu.memory_space<vmem>>, vector<4x37xf32>
    %c0_136 = arith.constant 0 : index
    %c0_137 = arith.constant 0 : index
    %95 = vector.load %arg14[%c0_136, %c0_137] : memref<289x286xf32, #tpu.memory_space<vmem>>, vector<37x286xf32>
    %cst_138 = arith.constant dense<0.000000e+00> : vector<4x286xf32>
    %96 = tpu.matmul %94, %95, %cst_138 {dimension_numbers = #tpu.dot_dimension_numbers<[1], [0], [0], [1], [0, 0, 1, 1], [], []>} : vector<4x37xf32>, vector<37x286xf32>, vector<4x286xf32> -> vector<4x286xf32>
    %cst_139 = arith.constant 0.000000e+00 : f32
    %97 = vector.broadcast %cst_139 : f32 to vector<4x286xf32>
    %98 = arith.cmpf oge, %96, %97 : vector<4x286xf32>
    %cst_140 = arith.constant 0.00999999977 : f32
    %99 = vector.broadcast %cst_140 : f32 to vector<4x286xf32>
    %100 = arith.mulf %99, %96 : vector<4x286xf32>
    %101 = arith.select %98, %96, %100 : vector<4x286xi1>, vector<4x286xf32>
    %c200_141 = arith.constant 200 : index
    %c0_142 = arith.constant 0 : index
    %102 = vector.load %arg2[%c200_141, %c0_142] : memref<208x289xf32, #tpu.memory_space<vmem>>, vector<1x286xf32>
    %103 = vector.broadcast %102 : vector<1x286xf32> to vector<4x286xf32>
    %104 = arith.mulf %101, %103 : vector<4x286xf32>
    %c0_143 = arith.constant 0 : index
    %c19_144 = arith.constant 19 : index
    %105 = vector.load %arg10[%c0_143, %c19_144] : memref<4x324xf32, #tpu.memory_space<vmem>>, vector<4x286xf32>
    tpu.vector_store %arg10[%c0_143, %c19_144], %104 {strides = array<i32>} : memref<4x324xf32, #tpu.memory_space<vmem>>, vector<4x286xf32>,
    %c0_145 = arith.constant 0 : index
    %c0_146 = arith.constant 0 : index
    %106 = vector.load %arg10[%c0_145, %c0_146] : memref<4x324xf32, #tpu.memory_space<vmem>>, vector<4x286xf32>
    %c0_147 = arith.constant 0 : index
    %c0_148 = arith.constant 0 : index
    %107 = vector.load %arg14[%c0_147, %c0_148] : memref<289x286xf32, #tpu.memory_space<vmem>>, vector<4x286xf32>
    tpu.vector_store %arg14[%c0_147, %c0_148], %106 {strides = array<i32>} : memref<289x286xf32, #tpu.memory_space<vmem>>, vector<4x286xf32>,
    %c0_149 = arith.constant 0 : index
    %c1_150 = arith.constant 1 : index
    %108 = vector.load %arg10[%c0_149, %c1_150] : memref<4x324xf32, #tpu.memory_space<vmem>>, vector<4x286xf32>
    %c4_151 = arith.constant 4 : index
    %c0_152 = arith.constant 0 : index
    %109 = vector.load %arg14[%c4_151, %c0_152] : memref<289x286xf32, #tpu.memory_space<vmem>>, vector<4x286xf32>
    tpu.vector_store %arg14[%c4_151, %c0_152], %108 {strides = array<i32>} : memref<289x286xf32, #tpu.memory_space<vmem>>, vector<4x286xf32>,
    %c0_153 = arith.constant 0 : index
    %c2_154 = arith.constant 2 : index
    %110 = vector.load %arg10[%c0_153, %c2_154] : memref<4x324xf32, #tpu.memory_space<vmem>>, vector<4x286xf32>
    %c8_155 = arith.constant 8 : index
    %c0_156 = arith.constant 0 : index
    %111 = vector.load %arg14[%c8_155, %c0_156] : memref<289x286xf32, #tpu.memory_space<vmem>>, vector<4x286xf32>
    tpu.vector_store %arg14[%c8_155, %c0_156], %110 {strides = array<i32>} : memref<289x286xf32, #tpu.memory_space<vmem>>, vector<4x286xf32>,
    %c0_157 = arith.constant 0 : index
    %c18_158 = arith.constant 18 : index
    %112 = vector.load %arg10[%c0_157, %c18_158] : memref<4x324xf32, #tpu.memory_space<vmem>>, vector<4x286xf32>
    %c12_159 = arith.constant 12 : index
    %c0_160 = arith.constant 0 : index
    %113 = vector.load %arg14[%c12_159, %c0_160] : memref<289x286xf32, #tpu.memory_space<vmem>>, vector<4x286xf32>
    tpu.vector_store %arg14[%c12_159, %c0_160], %112 {strides = array<i32>} : memref<289x286xf32, #tpu.memory_space<vmem>>, vector<4x286xf32>,
    %c0_161 = arith.constant 0 : index
    %c19_162 = arith.constant 19 : index
    %114 = vector.load %arg10[%c0_161, %c19_162] : memref<4x324xf32, #tpu.memory_space<vmem>>, vector<4x286xf32>
    %c16_163 = arith.constant 16 : index
    %c0_164 = arith.constant 0 : index
    %115 = vector.load %arg14[%c16_163, %c0_164] : memref<289x286xf32, #tpu.memory_space<vmem>>, vector<4x286xf32>
    tpu.vector_store %arg14[%c16_163, %c0_164], %114 {strides = array<i32>} : memref<289x286xf32, #tpu.memory_space<vmem>>, vector<4x286xf32>,
    %c0_165 = arith.constant 0 : index
    %c20_166 = arith.constant 20 : index
    %116 = vector.load %arg10[%c0_165, %c20_166] : memref<4x324xf32, #tpu.memory_space<vmem>>, vector<4x286xf32>
    %c20_167 = arith.constant 20 : index
    %c0_168 = arith.constant 0 : index
    %117 = vector.load %arg14[%c20_167, %c0_168] : memref<289x286xf32, #tpu.memory_space<vmem>>, vector<4x286xf32>
    tpu.vector_store %arg14[%c20_167, %c0_168], %116 {strides = array<i32>} : memref<289x286xf32, #tpu.memory_space<vmem>>, vector<4x286xf32>,
    %c0_169 = arith.constant 0 : index
    %c36_170 = arith.constant 36 : index
    %118 = vector.load %arg10[%c0_169, %c36_170] : memref<4x324xf32, #tpu.memory_space<vmem>>, vector<4x286xf32>
    %c24_171 = arith.constant 24 : index
    %c0_172 = arith.constant 0 : index
    %119 = vector.load %arg14[%c24_171, %c0_172] : memref<289x286xf32, #tpu.memory_space<vmem>>, vector<4x286xf32>
    tpu.vector_store %arg14[%c24_171, %c0_172], %118 {strides = array<i32>} : memref<289x286xf32, #tpu.memory_space<vmem>>, vector<4x286xf32>,
    %c0_173 = arith.constant 0 : index
    %c37_174 = arith.constant 37 : index
    %120 = vector.load %arg10[%c0_173, %c37_174] : memref<4x324xf32, #tpu.memory_space<vmem>>, vector<4x286xf32>
    %c28_175 = arith.constant 28 : index
    %c0_176 = arith.constant 0 : index
    %121 = vector.load %arg14[%c28_175, %c0_176] : memref<289x286xf32, #tpu.memory_space<vmem>>, vector<4x286xf32>
    tpu.vector_store %arg14[%c28_175, %c0_176], %120 {strides = array<i32>} : memref<289x286xf32, #tpu.memory_space<vmem>>, vector<4x286xf32>,
    %c0_177 = arith.constant 0 : index
    %c38_178 = arith.constant 38 : index
    %122 = vector.load %arg10[%c0_177, %c38_178] : memref<4x324xf32, #tpu.memory_space<vmem>>, vector<4x286xf32>
    %c32_179 = arith.constant 32 : index
    %c0_180 = arith.constant 0 : index
    %123 = vector.load %arg14[%c32_179, %c0_180] : memref<289x286xf32, #tpu.memory_space<vmem>>, vector<4x286xf32>
    tpu.vector_store %arg14[%c32_179, %c0_180], %122 {strides = array<i32>} : memref<289x286xf32, #tpu.memory_space<vmem>>, vector<4x286xf32>,
    %cst_181 = arith.constant 1.000000e+00 : f32
    %124 = vector.broadcast %cst_181 : f32 to vector<1x286xf32>
    %c36_182 = arith.constant 36 : index
    %c0_183 = arith.constant 0 : index
    %125 = vector.load %arg14[%c36_182, %c0_183] : memref<289x286xf32, #tpu.memory_space<vmem>>, vector<1x286xf32>
    tpu.vector_store %arg14[%c36_182, %c0_183], %124 {strides = array<i32>} : memref<289x286xf32, #tpu.memory_space<vmem>>, vector<1x286xf32>,
    %c24_184 = arith.constant 24 : index
    %c0_185 = arith.constant 0 : index
    %126 = vector.load %arg2[%c24_184, %c0_185] : memref<208x289xf32, #tpu.memory_space<vmem>>, vector<8x37xf32>
    %c0_186 = arith.constant 0 : index
    %c0_187 = arith.constant 0 : index
    %127 = vector.load %arg14[%c0_186, %c0_187] : memref<289x286xf32, #tpu.memory_space<vmem>>, vector<37x286xf32>
    %cst_188 = arith.constant dense<0.000000e+00> : vector<8x286xf32>
    %128 = tpu.matmul %126, %127, %cst_188 {dimension_numbers = #tpu.dot_dimension_numbers<[1], [0], [0], [1], [0, 0, 1, 1], [], []>} : vector<8x37xf32>, vector<37x286xf32>, vector<8x286xf32> -> vector<8x286xf32>
    %c0_189 = arith.constant 0 : index
    %c0_190 = arith.constant 0 : index
    %c0_191 = arith.constant 0 : index
    %129 = vector.load %arg5[%c0_189, %c0_190, %c0_191] : memref<1x8x286xf32, #tpu.memory_space<vmem>>, vector<1x8x286xf32>
    %130 = vector.shape_cast %129 : vector<1x8x286xf32> to vector<8x286xf32>
    %131 = vector.shape_cast %128 : vector<8x286xf32> to vector<1x8x286xf32>
    tpu.vector_store %arg5[%c0_189, %c0_190, %c0_191], %131 {strides = array<i32>} : memref<1x8x286xf32, #tpu.memory_space<vmem>>, vector<1x8x286xf32>,
    %cst_192 = arith.constant 0.000000e+00 : f32
    %132 = vector.broadcast %cst_192 : f32 to vector<8x11xf32>
    %c0_193 = arith.constant 0 : index
    %c0_194 = arith.constant 0 : index
    %133 = vector.load %arg11[%c0_193, %c0_194] : memref<8x100xf32, #tpu.memory_space<vmem>>, vector<8x11xf32>
    tpu.vector_store %arg11[%c0_193, %c0_194], %132 {strides = array<i32>} : memref<8x100xf32, #tpu.memory_space<vmem>>, vector<8x11xf32>,
    %cst_195 = arith.constant 0.000000e+00 : f32
    %134 = vector.broadcast %cst_195 : f32 to vector<8x11xf32>
    %c0_196 = arith.constant 0 : index
    %c89 = arith.constant 89 : index
    %135 = vector.load %arg11[%c0_196, %c89] : memref<8x100xf32, #tpu.memory_space<vmem>>, vector<8x11xf32>
    tpu.vector_store %arg11[%c0_196, %c89], %134 {strides = array<i32>} : memref<8x100xf32, #tpu.memory_space<vmem>>, vector<8x11xf32>,
    %c0_197 = arith.constant 0 : index
    %c0_198 = arith.constant 0 : index
    %136 = vector.load %arg3[%c0_197, %c0_198] : memref<392x78xf32, #tpu.memory_space<vmem>>, vector<286x78xf32>
    %cst_199 = arith.constant 0.000000e+00 : f32
    %137 = vector.broadcast %cst_199 : f32 to vector<8x286xf32>
    %138 = arith.cmpf oge, %128, %137 : vector<8x286xf32>
    %cst_200 = arith.constant 0.00999999977 : f32
    %139 = vector.broadcast %cst_200 : f32 to vector<8x286xf32>
    %140 = arith.mulf %139, %128 : vector<8x286xf32>
    %141 = arith.select %138, %128, %140 : vector<8x286xi1>, vector<8x286xf32>
    %cst_201 = arith.constant dense<0.000000e+00> : vector<8x78xf32>
    %142 = tpu.matmul %141, %136, %cst_201 {dimension_numbers = #tpu.dot_dimension_numbers<[1], [0], [0], [1], [0, 0, 1, 1], [], []>} : vector<8x286xf32>, vector<286x78xf32>, vector<8x78xf32> -> vector<8x78xf32>
    %c0_202 = arith.constant 0 : index
    %c11 = arith.constant 11 : index
    %143 = vector.load %arg11[%c0_202, %c11] : memref<8x100xf32, #tpu.memory_space<vmem>>, vector<8x78xf32>
    tpu.vector_store %arg11[%c0_202, %c11], %142 {strides = array<i32>} : memref<8x100xf32, #tpu.memory_space<vmem>>, vector<8x78xf32>,
    %c0_203 = arith.constant 0 : index
    %c0_204 = arith.constant 0 : index
    %144 = vector.load %arg11[%c0_203, %c0_204] : memref<8x100xf32, #tpu.memory_space<vmem>>, vector<8x78xf32>
    %c0_205 = arith.constant 0 : index
    %c0_206 = arith.constant 0 : index
    %145 = vector.load %arg14[%c0_205, %c0_206] : memref<289x286xf32, #tpu.memory_space<vmem>>, vector<8x78xf32>
    tpu.vector_store %arg14[%c0_205, %c0_206], %144 {strides = array<i32>} : memref<289x286xf32, #tpu.memory_space<vmem>>, vector<8x78xf32>,
    %c0_207 = arith.constant 0 : index
    %c1_208 = arith.constant 1 : index
    %146 = vector.load %arg11[%c0_207, %c1_208] : memref<8x100xf32, #tpu.memory_space<vmem>>, vector<8x78xf32>
    %c8_209 = arith.constant 8 : index
    %c0_210 = arith.constant 0 : index
    %147 = vector.load %arg14[%c8_209, %c0_210] : memref<289x286xf32, #tpu.memory_space<vmem>>, vector<8x78xf32>
    tpu.vector_store %arg14[%c8_209, %c0_210], %146 {strides = array<i32>} : memref<289x286xf32, #tpu.memory_space<vmem>>, vector<8x78xf32>,
    %c0_211 = arith.constant 0 : index
    %c2_212 = arith.constant 2 : index
    %148 = vector.load %arg11[%c0_211, %c2_212] : memref<8x100xf32, #tpu.memory_space<vmem>>, vector<8x78xf32>
    %c16_213 = arith.constant 16 : index
    %c0_214 = arith.constant 0 : index
    %149 = vector.load %arg14[%c16_213, %c0_214] : memref<289x286xf32, #tpu.memory_space<vmem>>, vector<8x78xf32>
    tpu.vector_store %arg14[%c16_213, %c0_214], %148 {strides = array<i32>} : memref<289x286xf32, #tpu.memory_space<vmem>>, vector<8x78xf32>,
    %c0_215 = arith.constant 0 : index
    %c10 = arith.constant 10 : index
    %150 = vector.load %arg11[%c0_215, %c10] : memref<8x100xf32, #tpu.memory_space<vmem>>, vector<8x78xf32>
    %c24_216 = arith.constant 24 : index
    %c0_217 = arith.constant 0 : index
    %151 = vector.load %arg14[%c24_216, %c0_217] : memref<289x286xf32, #tpu.memory_space<vmem>>, vector<8x78xf32>
    tpu.vector_store %arg14[%c24_216, %c0_217], %150 {strides = array<i32>} : memref<289x286xf32, #tpu.memory_space<vmem>>, vector<8x78xf32>,
    %c0_218 = arith.constant 0 : index
    %c11_219 = arith.constant 11 : index
    %152 = vector.load %arg11[%c0_218, %c11_219] : memref<8x100xf32, #tpu.memory_space<vmem>>, vector<8x78xf32>
    %c32_220 = arith.constant 32 : index
    %c0_221 = arith.constant 0 : index
    %153 = vector.load %arg14[%c32_220, %c0_221] : memref<289x286xf32, #tpu.memory_space<vmem>>, vector<8x78xf32>
    tpu.vector_store %arg14[%c32_220, %c0_221], %152 {strides = array<i32>} : memref<289x286xf32, #tpu.memory_space<vmem>>, vector<8x78xf32>,
    %c0_222 = arith.constant 0 : index
    %c12_223 = arith.constant 12 : index
    %154 = vector.load %arg11[%c0_222, %c12_223] : memref<8x100xf32, #tpu.memory_space<vmem>>, vector<8x78xf32>
    %c40 = arith.constant 40 : index
    %c0_224 = arith.constant 0 : index
    %155 = vector.load %arg14[%c40, %c0_224] : memref<289x286xf32, #tpu.memory_space<vmem>>, vector<8x78xf32>
    tpu.vector_store %arg14[%c40, %c0_224], %154 {strides = array<i32>} : memref<289x286xf32, #tpu.memory_space<vmem>>, vector<8x78xf32>,
    %c0_225 = arith.constant 0 : index
    %c20_226 = arith.constant 20 : index
    %156 = vector.load %arg11[%c0_225, %c20_226] : memref<8x100xf32, #tpu.memory_space<vmem>>, vector<8x78xf32>
    %c48 = arith.constant 48 : index
    %c0_227 = arith.constant 0 : index
    %157 = vector.load %arg14[%c48, %c0_227] : memref<289x286xf32, #tpu.memory_space<vmem>>, vector<8x78xf32>
    tpu.vector_store %arg14[%c48, %c0_227], %156 {strides = array<i32>} : memref<289x286xf32, #tpu.memory_space<vmem>>, vector<8x78xf32>,
    %c0_228 = arith.constant 0 : index
    %c21 = arith.constant 21 : index
    %158 = vector.load %arg11[%c0_228, %c21] : memref<8x100xf32, #tpu.memory_space<vmem>>, vector<8x78xf32>
    %c56 = arith.constant 56 : index
    %c0_229 = arith.constant 0 : index
    %159 = vector.load %arg14[%c56, %c0_229] : memref<289x286xf32, #tpu.memory_space<vmem>>, vector<8x78xf32>
    tpu.vector_store %arg14[%c56, %c0_229], %158 {strides = array<i32>} : memref<289x286xf32, #tpu.memory_space<vmem>>, vector<8x78xf32>,
    %c0_230 = arith.constant 0 : index
    %c22 = arith.constant 22 : index
    %160 = vector.load %arg11[%c0_230, %c22] : memref<8x100xf32, #tpu.memory_space<vmem>>, vector<8x78xf32>
    %c64 = arith.constant 64 : index
    %c0_231 = arith.constant 0 : index
    %161 = vector.load %arg14[%c64, %c0_231] : memref<289x286xf32, #tpu.memory_space<vmem>>, vector<8x78xf32>
    tpu.vector_store %arg14[%c64, %c0_231], %160 {strides = array<i32>} : memref<289x286xf32, #tpu.memory_space<vmem>>, vector<8x78xf32>,
    %cst_232 = arith.constant 1.000000e+00 : f32
    %162 = vector.broadcast %cst_232 : f32 to vector<1x78xf32>
    %c72 = arith.constant 72 : index
    %c0_233 = arith.constant 0 : index
    %163 = vector.load %arg14[%c72, %c0_233] : memref<289x286xf32, #tpu.memory_space<vmem>>, vector<1x78xf32>
    tpu.vector_store %arg14[%c72, %c0_233], %162 {strides = array<i32>} : memref<289x286xf32, #tpu.memory_space<vmem>>, vector<1x78xf32>,
    %c32_234 = arith.constant 32 : index
    %c0_235 = arith.constant 0 : index
    %164 = vector.load %arg2[%c32_234, %c0_235] : memref<208x289xf32, #tpu.memory_space<vmem>>, vector<8x73xf32>
    %c0_236 = arith.constant 0 : index
    %c0_237 = arith.constant 0 : index
    %165 = vector.load %arg14[%c0_236, %c0_237] : memref<289x286xf32, #tpu.memory_space<vmem>>, vector<73x78xf32>
    %cst_238 = arith.constant dense<0.000000e+00> : vector<8x78xf32>
    %166 = tpu.matmul %164, %165, %cst_238 {dimension_numbers = #tpu.dot_dimension_numbers<[1], [0], [0], [1], [0, 0, 1, 1], [], []>} : vector<8x73xf32>, vector<73x78xf32>, vector<8x78xf32> -> vector<8x78xf32>
    %cst_239 = arith.constant 0.000000e+00 : f32
    %167 = vector.broadcast %cst_239 : f32 to vector<8x78xf32>
    %168 = arith.cmpf oge, %166, %167 : vector<8x78xf32>
    %cst_240 = arith.constant 0.00999999977 : f32
    %169 = vector.broadcast %cst_240 : f32 to vector<8x78xf32>
    %170 = arith.mulf %169, %166 : vector<8x78xf32>
    %171 = arith.select %168, %166, %170 : vector<8x78xi1>, vector<8x78xf32>
    %c201 = arith.constant 201 : index
    %c0_241 = arith.constant 0 : index
    %172 = vector.load %arg2[%c201, %c0_241] : memref<208x289xf32, #tpu.memory_space<vmem>>, vector<1x78xf32>
    %173 = vector.broadcast %172 : vector<1x78xf32> to vector<8x78xf32>
    %174 = arith.mulf %171, %173 : vector<8x78xf32>
    %c0_242 = arith.constant 0 : index
    %c11_243 = arith.constant 11 : index
    %175 = vector.load %arg11[%c0_242, %c11_243] : memref<8x100xf32, #tpu.memory_space<vmem>>, vector<8x78xf32>
    tpu.vector_store %arg11[%c0_242, %c11_243], %174 {strides = array<i32>} : memref<8x100xf32, #tpu.memory_space<vmem>>, vector<8x78xf32>,
    %c0_244 = arith.constant 0 : index
    %c0_245 = arith.constant 0 : index
    %176 = vector.load %arg11[%c0_244, %c0_245] : memref<8x100xf32, #tpu.memory_space<vmem>>, vector<8x78xf32>
    %c0_246 = arith.constant 0 : index
    %c0_247 = arith.constant 0 : index
    %177 = vector.load %arg14[%c0_246, %c0_247] : memref<289x286xf32, #tpu.memory_space<vmem>>, vector<8x78xf32>
    tpu.vector_store %arg14[%c0_246, %c0_247], %176 {strides = array<i32>} : memref<289x286xf32, #tpu.memory_space<vmem>>, vector<8x78xf32>,
    %c0_248 = arith.constant 0 : index
    %c1_249 = arith.constant 1 : index
    %178 = vector.load %arg11[%c0_248, %c1_249] : memref<8x100xf32, #tpu.memory_space<vmem>>, vector<8x78xf32>
    %c8_250 = arith.constant 8 : index
    %c0_251 = arith.constant 0 : index
    %179 = vector.load %arg14[%c8_250, %c0_251] : memref<289x286xf32, #tpu.memory_space<vmem>>, vector<8x78xf32>
    tpu.vector_store %arg14[%c8_250, %c0_251], %178 {strides = array<i32>} : memref<289x286xf32, #tpu.memory_space<vmem>>, vector<8x78xf32>,
    %c0_252 = arith.constant 0 : index
    %c2_253 = arith.constant 2 : index
    %180 = vector.load %arg11[%c0_252, %c2_253] : memref<8x100xf32, #tpu.memory_space<vmem>>, vector<8x78xf32>
    %c16_254 = arith.constant 16 : index
    %c0_255 = arith.constant 0 : index
    %181 = vector.load %arg14[%c16_254, %c0_255] : memref<289x286xf32, #tpu.memory_space<vmem>>, vector<8x78xf32>
    tpu.vector_store %arg14[%c16_254, %c0_255], %180 {strides = array<i32>} : memref<289x286xf32, #tpu.memory_space<vmem>>, vector<8x78xf32>,
    %c0_256 = arith.constant 0 : index
    %c10_257 = arith.constant 10 : index
    %182 = vector.load %arg11[%c0_256, %c10_257] : memref<8x100xf32, #tpu.memory_space<vmem>>, vector<8x78xf32>
    %c24_258 = arith.constant 24 : index
    %c0_259 = arith.constant 0 : index
    %183 = vector.load %arg14[%c24_258, %c0_259] : memref<289x286xf32, #tpu.memory_space<vmem>>, vector<8x78xf32>
    tpu.vector_store %arg14[%c24_258, %c0_259], %182 {strides = array<i32>} : memref<289x286xf32, #tpu.memory_space<vmem>>, vector<8x78xf32>,
    %c0_260 = arith.constant 0 : index
    %c11_261 = arith.constant 11 : index
    %184 = vector.load %arg11[%c0_260, %c11_261] : memref<8x100xf32, #tpu.memory_space<vmem>>, vector<8x78xf32>
    %c32_262 = arith.constant 32 : index
    %c0_263 = arith.constant 0 : index
    %185 = vector.load %arg14[%c32_262, %c0_263] : memref<289x286xf32, #tpu.memory_space<vmem>>, vector<8x78xf32>
    tpu.vector_store %arg14[%c32_262, %c0_263], %184 {strides = array<i32>} : memref<289x286xf32, #tpu.memory_space<vmem>>, vector<8x78xf32>,
    %c0_264 = arith.constant 0 : index
    %c12_265 = arith.constant 12 : index
    %186 = vector.load %arg11[%c0_264, %c12_265] : memref<8x100xf32, #tpu.memory_space<vmem>>, vector<8x78xf32>
    %c40_266 = arith.constant 40 : index
    %c0_267 = arith.constant 0 : index
    %187 = vector.load %arg14[%c40_266, %c0_267] : memref<289x286xf32, #tpu.memory_space<vmem>>, vector<8x78xf32>
    tpu.vector_store %arg14[%c40_266, %c0_267], %186 {strides = array<i32>} : memref<289x286xf32, #tpu.memory_space<vmem>>, vector<8x78xf32>,
    %c0_268 = arith.constant 0 : index
    %c20_269 = arith.constant 20 : index
    %188 = vector.load %arg11[%c0_268, %c20_269] : memref<8x100xf32, #tpu.memory_space<vmem>>, vector<8x78xf32>
    %c48_270 = arith.constant 48 : index
    %c0_271 = arith.constant 0 : index
    %189 = vector.load %arg14[%c48_270, %c0_271] : memref<289x286xf32, #tpu.memory_space<vmem>>, vector<8x78xf32>
    tpu.vector_store %arg14[%c48_270, %c0_271], %188 {strides = array<i32>} : memref<289x286xf32, #tpu.memory_space<vmem>>, vector<8x78xf32>,
    %c0_272 = arith.constant 0 : index
    %c21_273 = arith.constant 21 : index
    %190 = vector.load %arg11[%c0_272, %c21_273] : memref<8x100xf32, #tpu.memory_space<vmem>>, vector<8x78xf32>
    %c56_274 = arith.constant 56 : index
    %c0_275 = arith.constant 0 : index
    %191 = vector.load %arg14[%c56_274, %c0_275] : memref<289x286xf32, #tpu.memory_space<vmem>>, vector<8x78xf32>
    tpu.vector_store %arg14[%c56_274, %c0_275], %190 {strides = array<i32>} : memref<289x286xf32, #tpu.memory_space<vmem>>, vector<8x78xf32>,
    %c0_276 = arith.constant 0 : index
    %c22_277 = arith.constant 22 : index
    %192 = vector.load %arg11[%c0_276, %c22_277] : memref<8x100xf32, #tpu.memory_space<vmem>>, vector<8x78xf32>
    %c64_278 = arith.constant 64 : index
    %c0_279 = arith.constant 0 : index
    %193 = vector.load %arg14[%c64_278, %c0_279] : memref<289x286xf32, #tpu.memory_space<vmem>>, vector<8x78xf32>
    tpu.vector_store %arg14[%c64_278, %c0_279], %192 {strides = array<i32>} : memref<289x286xf32, #tpu.memory_space<vmem>>, vector<8x78xf32>,
    %cst_280 = arith.constant 1.000000e+00 : f32
    %194 = vector.broadcast %cst_280 : f32 to vector<1x78xf32>
    %c72_281 = arith.constant 72 : index
    %c0_282 = arith.constant 0 : index
    %195 = vector.load %arg14[%c72_281, %c0_282] : memref<289x286xf32, #tpu.memory_space<vmem>>, vector<1x78xf32>
    tpu.vector_store %arg14[%c72_281, %c0_282], %194 {strides = array<i32>} : memref<289x286xf32, #tpu.memory_space<vmem>>, vector<1x78xf32>,
    %c40_283 = arith.constant 40 : index
    %c0_284 = arith.constant 0 : index
    %196 = vector.load %arg2[%c40_283, %c0_284] : memref<208x289xf32, #tpu.memory_space<vmem>>, vector<16x73xf32>
    %c0_285 = arith.constant 0 : index
    %c0_286 = arith.constant 0 : index
    %197 = vector.load %arg14[%c0_285, %c0_286] : memref<289x286xf32, #tpu.memory_space<vmem>>, vector<73x78xf32>
    %cst_287 = arith.constant dense<0.000000e+00> : vector<16x78xf32>
    %198 = tpu.matmul %196, %197, %cst_287 {dimension_numbers = #tpu.dot_dimension_numbers<[1], [0], [0], [1], [0, 0, 1, 1], [], []>} : vector<16x73xf32>, vector<73x78xf32>, vector<16x78xf32> -> vector<16x78xf32>
    %c0_288 = arith.constant 0 : index
    %c0_289 = arith.constant 0 : index
    %c0_290 = arith.constant 0 : index
    %199 = vector.load %arg6[%c0_288, %c0_289, %c0_290] : memref<1x16x78xf32, #tpu.memory_space<vmem>>, vector<1x16x78xf32>
    %200 = vector.shape_cast %199 : vector<1x16x78xf32> to vector<16x78xf32>
    %201 = vector.shape_cast %198 : vector<16x78xf32> to vector<1x16x78xf32>
    tpu.vector_store %arg6[%c0_288, %c0_289, %c0_290], %201 {strides = array<i32>} : memref<1x16x78xf32, #tpu.memory_space<vmem>>, vector<1x16x78xf32>,
    %cst_291 = arith.constant 0.000000e+00 : f32
    %202 = vector.broadcast %cst_291 : f32 to vector<16x7xf32>
    %c0_292 = arith.constant 0 : index
    %c0_293 = arith.constant 0 : index
    %203 = vector.load %arg12[%c0_292, %c0_293] : memref<16x36xf32, #tpu.memory_space<vmem>>, vector<16x7xf32>
    tpu.vector_store %arg12[%c0_292, %c0_293], %202 {strides = array<i32>} : memref<16x36xf32, #tpu.memory_space<vmem>>, vector<16x7xf32>,
    %cst_294 = arith.constant 0.000000e+00 : f32
    %204 = vector.broadcast %cst_294 : f32 to vector<16x7xf32>
    %c0_295 = arith.constant 0 : index
    %c29 = arith.constant 29 : index
    %205 = vector.load %arg12[%c0_295, %c29] : memref<16x36xf32, #tpu.memory_space<vmem>>, vector<16x7xf32>
    tpu.vector_store %arg12[%c0_295, %c29], %204 {strides = array<i32>} : memref<16x36xf32, #tpu.memory_space<vmem>>, vector<16x7xf32>,
    %c288 = arith.constant 288 : index
    %c0_296 = arith.constant 0 : index
    %206 = vector.load %arg3[%c288, %c0_296] : memref<392x78xf32, #tpu.memory_space<vmem>>, vector<78x22xf32>
    %cst_297 = arith.constant 0.000000e+00 : f32
    %207 = vector.broadcast %cst_297 : f32 to vector<16x78xf32>
    %208 = arith.cmpf oge, %198, %207 : vector<16x78xf32>
    %cst_298 = arith.constant 0.00999999977 : f32
    %209 = vector.broadcast %cst_298 : f32 to vector<16x78xf32>
    %210 = arith.mulf %209, %198 : vector<16x78xf32>
    %211 = arith.select %208, %198, %210 : vector<16x78xi1>, vector<16x78xf32>
    %cst_299 = arith.constant dense<0.000000e+00> : vector<16x22xf32>
    %212 = tpu.matmul %211, %206, %cst_299 {dimension_numbers = #tpu.dot_dimension_numbers<[1], [0], [0], [1], [0, 0, 1, 1], [], []>} : vector<16x78xf32>, vector<78x22xf32>, vector<16x22xf32> -> vector<16x22xf32>
    %c0_300 = arith.constant 0 : index
    %c7 = arith.constant 7 : index
    %213 = vector.load %arg12[%c0_300, %c7] : memref<16x36xf32, #tpu.memory_space<vmem>>, vector<16x22xf32>
    tpu.vector_store %arg12[%c0_300, %c7], %212 {strides = array<i32>} : memref<16x36xf32, #tpu.memory_space<vmem>>, vector<16x22xf32>,
    %c0_301 = arith.constant 0 : index
    %c0_302 = arith.constant 0 : index
    %214 = vector.load %arg12[%c0_301, %c0_302] : memref<16x36xf32, #tpu.memory_space<vmem>>, vector<16x22xf32>
    %c0_303 = arith.constant 0 : index
    %c0_304 = arith.constant 0 : index
    %215 = vector.load %arg14[%c0_303, %c0_304] : memref<289x286xf32, #tpu.memory_space<vmem>>, vector<16x22xf32>
    tpu.vector_store %arg14[%c0_303, %c0_304], %214 {strides = array<i32>} : memref<289x286xf32, #tpu.memory_space<vmem>>, vector<16x22xf32>,
    %c0_305 = arith.constant 0 : index
    %c1_306 = arith.constant 1 : index
    %216 = vector.load %arg12[%c0_305, %c1_306] : memref<16x36xf32, #tpu.memory_space<vmem>>, vector<16x22xf32>
    %c16_307 = arith.constant 16 : index
    %c0_308 = arith.constant 0 : index
    %217 = vector.load %arg14[%c16_307, %c0_308] : memref<289x286xf32, #tpu.memory_space<vmem>>, vector<16x22xf32>
    tpu.vector_store %arg14[%c16_307, %c0_308], %216 {strides = array<i32>} : memref<289x286xf32, #tpu.memory_space<vmem>>, vector<16x22xf32>,
    %c0_309 = arith.constant 0 : index
    %c2_310 = arith.constant 2 : index
    %218 = vector.load %arg12[%c0_309, %c2_310] : memref<16x36xf32, #tpu.memory_space<vmem>>, vector<16x22xf32>
    %c32_311 = arith.constant 32 : index
    %c0_312 = arith.constant 0 : index
    %219 = vector.load %arg14[%c32_311, %c0_312] : memref<289x286xf32, #tpu.memory_space<vmem>>, vector<16x22xf32>
    tpu.vector_store %arg14[%c32_311, %c0_312], %218 {strides = array<i32>} : memref<289x286xf32, #tpu.memory_space<vmem>>, vector<16x22xf32>,
    %c0_313 = arith.constant 0 : index
    %c6 = arith.constant 6 : index
    %220 = vector.load %arg12[%c0_313, %c6] : memref<16x36xf32, #tpu.memory_space<vmem>>, vector<16x22xf32>
    %c48_314 = arith.constant 48 : index
    %c0_315 = arith.constant 0 : index
    %221 = vector.load %arg14[%c48_314, %c0_315] : memref<289x286xf32, #tpu.memory_space<vmem>>, vector<16x22xf32>
    tpu.vector_store %arg14[%c48_314, %c0_315], %220 {strides = array<i32>} : memref<289x286xf32, #tpu.memory_space<vmem>>, vector<16x22xf32>,
    %c0_316 = arith.constant 0 : index
    %c7_317 = arith.constant 7 : index
    %222 = vector.load %arg12[%c0_316, %c7_317] : memref<16x36xf32, #tpu.memory_space<vmem>>, vector<16x22xf32>
    %c64_318 = arith.constant 64 : index
    %c0_319 = arith.constant 0 : index
    %223 = vector.load %arg14[%c64_318, %c0_319] : memref<289x286xf32, #tpu.memory_space<vmem>>, vector<16x22xf32>
    tpu.vector_store %arg14[%c64_318, %c0_319], %222 {strides = array<i32>} : memref<289x286xf32, #tpu.memory_space<vmem>>, vector<16x22xf32>,
    %c0_320 = arith.constant 0 : index
    %c8_321 = arith.constant 8 : index
    %224 = vector.load %arg12[%c0_320, %c8_321] : memref<16x36xf32, #tpu.memory_space<vmem>>, vector<16x22xf32>
    %c80 = arith.constant 80 : index
    %c0_322 = arith.constant 0 : index
    %225 = vector.load %arg14[%c80, %c0_322] : memref<289x286xf32, #tpu.memory_space<vmem>>, vector<16x22xf32>
    tpu.vector_store %arg14[%c80, %c0_322], %224 {strides = array<i32>} : memref<289x286xf32, #tpu.memory_space<vmem>>, vector<16x22xf32>,
    %c0_323 = arith.constant 0 : index
    %c12_324 = arith.constant 12 : index
    %226 = vector.load %arg12[%c0_323, %c12_324] : memref<16x36xf32, #tpu.memory_space<vmem>>, vector<16x22xf32>
    %c96 = arith.constant 96 : index
    %c0_325 = arith.constant 0 : index
    %227 = vector.load %arg14[%c96, %c0_325] : memref<289x286xf32, #tpu.memory_space<vmem>>, vector<16x22xf32>
    tpu.vector_store %arg14[%c96, %c0_325], %226 {strides = array<i32>} : memref<289x286xf32, #tpu.memory_space<vmem>>, vector<16x22xf32>,
    %c0_326 = arith.constant 0 : index
    %c13 = arith.constant 13 : index
    %228 = vector.load %arg12[%c0_326, %c13] : memref<16x36xf32, #tpu.memory_space<vmem>>, vector<16x22xf32>
    %c112 = arith.constant 112 : index
    %c0_327 = arith.constant 0 : index
    %229 = vector.load %arg14[%c112, %c0_327] : memref<289x286xf32, #tpu.memory_space<vmem>>, vector<16x22xf32>
    tpu.vector_store %arg14[%c112, %c0_327], %228 {strides = array<i32>} : memref<289x286xf32, #tpu.memory_space<vmem>>, vector<16x22xf32>,
    %c0_328 = arith.constant 0 : index
    %c14 = arith.constant 14 : index
    %230 = vector.load %arg12[%c0_328, %c14] : memref<16x36xf32, #tpu.memory_space<vmem>>, vector<16x22xf32>
    %c128 = arith.constant 128 : index
    %c0_329 = arith.constant 0 : index
    %231 = vector.load %arg14[%c128, %c0_329] : memref<289x286xf32, #tpu.memory_space<vmem>>, vector<16x22xf32>
    tpu.vector_store %arg14[%c128, %c0_329], %230 {strides = array<i32>} : memref<289x286xf32, #tpu.memory_space<vmem>>, vector<16x22xf32>,
    %cst_330 = arith.constant 1.000000e+00 : f32
    %232 = vector.broadcast %cst_330 : f32 to vector<1x22xf32>
    %c144 = arith.constant 144 : index
    %c0_331 = arith.constant 0 : index
    %233 = vector.load %arg14[%c144, %c0_331] : memref<289x286xf32, #tpu.memory_space<vmem>>, vector<1x22xf32>
    tpu.vector_store %arg14[%c144, %c0_331], %232 {strides = array<i32>} : memref<289x286xf32, #tpu.memory_space<vmem>>, vector<1x22xf32>,
    %c56_332 = arith.constant 56 : index
    %c0_333 = arith.constant 0 : index
    %234 = vector.load %arg2[%c56_332, %c0_333] : memref<208x289xf32, #tpu.memory_space<vmem>>, vector<16x145xf32>
    %c0_334 = arith.constant 0 : index
    %c0_335 = arith.constant 0 : index
    %235 = vector.load %arg14[%c0_334, %c0_335] : memref<289x286xf32, #tpu.memory_space<vmem>>, vector<145x22xf32>
    %cst_336 = arith.constant dense<0.000000e+00> : vector<16x22xf32>
    %236 = tpu.matmul %234, %235, %cst_336 {dimension_numbers = #tpu.dot_dimension_numbers<[1], [0], [0], [1], [0, 0, 1, 1], [], []>} : vector<16x145xf32>, vector<145x22xf32>, vector<16x22xf32> -> vector<16x22xf32>
    %cst_337 = arith.constant 0.000000e+00 : f32
    %237 = vector.broadcast %cst_337 : f32 to vector<16x22xf32>
    %238 = arith.cmpf oge, %236, %237 : vector<16x22xf32>
    %cst_338 = arith.constant 0.00999999977 : f32
    %239 = vector.broadcast %cst_338 : f32 to vector<16x22xf32>
    %240 = arith.mulf %239, %236 : vector<16x22xf32>
    %241 = arith.select %238, %236, %240 : vector<16x22xi1>, vector<16x22xf32>
    %c202 = arith.constant 202 : index
    %c0_339 = arith.constant 0 : index
    %242 = vector.load %arg2[%c202, %c0_339] : memref<208x289xf32, #tpu.memory_space<vmem>>, vector<1x22xf32>
    %243 = vector.broadcast %242 : vector<1x22xf32> to vector<16x22xf32>
    %244 = arith.mulf %241, %243 : vector<16x22xf32>
    %c0_340 = arith.constant 0 : index
    %c7_341 = arith.constant 7 : index
    %245 = vector.load %arg12[%c0_340, %c7_341] : memref<16x36xf32, #tpu.memory_space<vmem>>, vector<16x22xf32>
    tpu.vector_store %arg12[%c0_340, %c7_341], %244 {strides = array<i32>} : memref<16x36xf32, #tpu.memory_space<vmem>>, vector<16x22xf32>,
    %c0_342 = arith.constant 0 : index
    %c0_343 = arith.constant 0 : index
    %246 = vector.load %arg12[%c0_342, %c0_343] : memref<16x36xf32, #tpu.memory_space<vmem>>, vector<16x22xf32>
    %c0_344 = arith.constant 0 : index
    %c0_345 = arith.constant 0 : index
    %247 = vector.load %arg14[%c0_344, %c0_345] : memref<289x286xf32, #tpu.memory_space<vmem>>, vector<16x22xf32>
    tpu.vector_store %arg14[%c0_344, %c0_345], %246 {strides = array<i32>} : memref<289x286xf32, #tpu.memory_space<vmem>>, vector<16x22xf32>,
    %c0_346 = arith.constant 0 : index
    %c1_347 = arith.constant 1 : index
    %248 = vector.load %arg12[%c0_346, %c1_347] : memref<16x36xf32, #tpu.memory_space<vmem>>, vector<16x22xf32>
    %c16_348 = arith.constant 16 : index
    %c0_349 = arith.constant 0 : index
    %249 = vector.load %arg14[%c16_348, %c0_349] : memref<289x286xf32, #tpu.memory_space<vmem>>, vector<16x22xf32>
    tpu.vector_store %arg14[%c16_348, %c0_349], %248 {strides = array<i32>} : memref<289x286xf32, #tpu.memory_space<vmem>>, vector<16x22xf32>,
    %c0_350 = arith.constant 0 : index
    %c2_351 = arith.constant 2 : index
    %250 = vector.load %arg12[%c0_350, %c2_351] : memref<16x36xf32, #tpu.memory_space<vmem>>, vector<16x22xf32>
    %c32_352 = arith.constant 32 : index
    %c0_353 = arith.constant 0 : index
    %251 = vector.load %arg14[%c32_352, %c0_353] : memref<289x286xf32, #tpu.memory_space<vmem>>, vector<16x22xf32>
    tpu.vector_store %arg14[%c32_352, %c0_353], %250 {strides = array<i32>} : memref<289x286xf32, #tpu.memory_space<vmem>>, vector<16x22xf32>,
    %c0_354 = arith.constant 0 : index
    %c6_355 = arith.constant 6 : index
    %252 = vector.load %arg12[%c0_354, %c6_355] : memref<16x36xf32, #tpu.memory_space<vmem>>, vector<16x22xf32>
    %c48_356 = arith.constant 48 : index
    %c0_357 = arith.constant 0 : index
    %253 = vector.load %arg14[%c48_356, %c0_357] : memref<289x286xf32, #tpu.memory_space<vmem>>, vector<16x22xf32>
    tpu.vector_store %arg14[%c48_356, %c0_357], %252 {strides = array<i32>} : memref<289x286xf32, #tpu.memory_space<vmem>>, vector<16x22xf32>,
    %c0_358 = arith.constant 0 : index
    %c7_359 = arith.constant 7 : index
    %254 = vector.load %arg12[%c0_358, %c7_359] : memref<16x36xf32, #tpu.memory_space<vmem>>, vector<16x22xf32>
    %c64_360 = arith.constant 64 : index
    %c0_361 = arith.constant 0 : index
    %255 = vector.load %arg14[%c64_360, %c0_361] : memref<289x286xf32, #tpu.memory_space<vmem>>, vector<16x22xf32>
    tpu.vector_store %arg14[%c64_360, %c0_361], %254 {strides = array<i32>} : memref<289x286xf32, #tpu.memory_space<vmem>>, vector<16x22xf32>,
    %c0_362 = arith.constant 0 : index
    %c8_363 = arith.constant 8 : index
    %256 = vector.load %arg12[%c0_362, %c8_363] : memref<16x36xf32, #tpu.memory_space<vmem>>, vector<16x22xf32>
    %c80_364 = arith.constant 80 : index
    %c0_365 = arith.constant 0 : index
    %257 = vector.load %arg14[%c80_364, %c0_365] : memref<289x286xf32, #tpu.memory_space<vmem>>, vector<16x22xf32>
    tpu.vector_store %arg14[%c80_364, %c0_365], %256 {strides = array<i32>} : memref<289x286xf32, #tpu.memory_space<vmem>>, vector<16x22xf32>,
    %c0_366 = arith.constant 0 : index
    %c12_367 = arith.constant 12 : index
    %258 = vector.load %arg12[%c0_366, %c12_367] : memref<16x36xf32, #tpu.memory_space<vmem>>, vector<16x22xf32>
    %c96_368 = arith.constant 96 : index
    %c0_369 = arith.constant 0 : index
    %259 = vector.load %arg14[%c96_368, %c0_369] : memref<289x286xf32, #tpu.memory_space<vmem>>, vector<16x22xf32>
    tpu.vector_store %arg14[%c96_368, %c0_369], %258 {strides = array<i32>} : memref<289x286xf32, #tpu.memory_space<vmem>>, vector<16x22xf32>,
    %c0_370 = arith.constant 0 : index
    %c13_371 = arith.constant 13 : index
    %260 = vector.load %arg12[%c0_370, %c13_371] : memref<16x36xf32, #tpu.memory_space<vmem>>, vector<16x22xf32>
    %c112_372 = arith.constant 112 : index
    %c0_373 = arith.constant 0 : index
    %261 = vector.load %arg14[%c112_372, %c0_373] : memref<289x286xf32, #tpu.memory_space<vmem>>, vector<16x22xf32>
    tpu.vector_store %arg14[%c112_372, %c0_373], %260 {strides = array<i32>} : memref<289x286xf32, #tpu.memory_space<vmem>>, vector<16x22xf32>,
    %c0_374 = arith.constant 0 : index
    %c14_375 = arith.constant 14 : index
    %262 = vector.load %arg12[%c0_374, %c14_375] : memref<16x36xf32, #tpu.memory_space<vmem>>, vector<16x22xf32>
    %c128_376 = arith.constant 128 : index
    %c0_377 = arith.constant 0 : index
    %263 = vector.load %arg14[%c128_376, %c0_377] : memref<289x286xf32, #tpu.memory_space<vmem>>, vector<16x22xf32>
    tpu.vector_store %arg14[%c128_376, %c0_377], %262 {strides = array<i32>} : memref<289x286xf32, #tpu.memory_space<vmem>>, vector<16x22xf32>,
    %cst_378 = arith.constant 1.000000e+00 : f32
    %264 = vector.broadcast %cst_378 : f32 to vector<1x22xf32>
    %c144_379 = arith.constant 144 : index
    %c0_380 = arith.constant 0 : index
    %265 = vector.load %arg14[%c144_379, %c0_380] : memref<289x286xf32, #tpu.memory_space<vmem>>, vector<1x22xf32>
    tpu.vector_store %arg14[%c144_379, %c0_380], %264 {strides = array<i32>} : memref<289x286xf32, #tpu.memory_space<vmem>>, vector<1x22xf32>,
    %c72_381 = arith.constant 72 : index
    %c0_382 = arith.constant 0 : index
    %266 = vector.load %arg2[%c72_381, %c0_382] : memref<208x289xf32, #tpu.memory_space<vmem>>, vector<32x145xf32>
    %c0_383 = arith.constant 0 : index
    %c0_384 = arith.constant 0 : index
    %267 = vector.load %arg14[%c0_383, %c0_384] : memref<289x286xf32, #tpu.memory_space<vmem>>, vector<145x22xf32>
    %cst_385 = arith.constant dense<0.000000e+00> : vector<32x22xf32>
    %268 = tpu.matmul %266, %267, %cst_385 {dimension_numbers = #tpu.dot_dimension_numbers<[1], [0], [0], [1], [0, 0, 1, 1], [], []>} : vector<32x145xf32>, vector<145x22xf32>, vector<32x22xf32> -> vector<32x22xf32>
    %c0_386 = arith.constant 0 : index
    %c0_387 = arith.constant 0 : index
    %c0_388 = arith.constant 0 : index
    %269 = vector.load %arg7[%c0_386, %c0_387, %c0_388] : memref<1x32x22xf32, #tpu.memory_space<vmem>>, vector<1x32x22xf32>
    %270 = vector.shape_cast %269 : vector<1x32x22xf32> to vector<32x22xf32>
    %271 = vector.shape_cast %268 : vector<32x22xf32> to vector<1x32x22xf32>
    tpu.vector_store %arg7[%c0_386, %c0_387, %c0_388], %271 {strides = array<i32>} : memref<1x32x22xf32, #tpu.memory_space<vmem>>, vector<1x32x22xf32>,
    %cst_389 = arith.constant 0.000000e+00 : f32
    %272 = vector.broadcast %cst_389 : f32 to vector<32x5xf32>
    %c0_390 = arith.constant 0 : index
    %c0_391 = arith.constant 0 : index
    %273 = vector.load %arg13[%c0_390, %c0_391] : memref<32x16xf32, #tpu.memory_space<vmem>>, vector<32x5xf32>
    tpu.vector_store %arg13[%c0_390, %c0_391], %272 {strides = array<i32>} : memref<32x16xf32, #tpu.memory_space<vmem>>, vector<32x5xf32>,
    %cst_392 = arith.constant 0.000000e+00 : f32
    %274 = vector.broadcast %cst_392 : f32 to vector<32x5xf32>
    %c0_393 = arith.constant 0 : index
    %c11_394 = arith.constant 11 : index
    %275 = vector.load %arg13[%c0_393, %c11_394] : memref<32x16xf32, #tpu.memory_space<vmem>>, vector<32x5xf32>
    tpu.vector_store %arg13[%c0_393, %c11_394], %274 {strides = array<i32>} : memref<32x16xf32, #tpu.memory_space<vmem>>, vector<32x5xf32>,
    %c368 = arith.constant 368 : index
    %c0_395 = arith.constant 0 : index
    %276 = vector.load %arg3[%c368, %c0_395] : memref<392x78xf32, #tpu.memory_space<vmem>>, vector<22x6xf32>
    %cst_396 = arith.constant 0.000000e+00 : f32
    %277 = vector.broadcast %cst_396 : f32 to vector<32x22xf32>
    %278 = arith.cmpf oge, %268, %277 : vector<32x22xf32>
    %cst_397 = arith.constant 0.00999999977 : f32
    %279 = vector.broadcast %cst_397 : f32 to vector<32x22xf32>
    %280 = arith.mulf %279, %268 : vector<32x22xf32>
    %281 = arith.select %278, %268, %280 : vector<32x22xi1>, vector<32x22xf32>
    %cst_398 = arith.constant dense<0.000000e+00> : vector<32x6xf32>
    %282 = tpu.matmul %281, %276, %cst_398 {dimension_numbers = #tpu.dot_dimension_numbers<[1], [0], [0], [1], [0, 0, 1, 1], [], []>} : vector<32x22xf32>, vector<22x6xf32>, vector<32x6xf32> -> vector<32x6xf32>
    %c0_399 = arith.constant 0 : index
    %c5 = arith.constant 5 : index
    %283 = vector.load %arg13[%c0_399, %c5] : memref<32x16xf32, #tpu.memory_space<vmem>>, vector<32x6xf32>
    tpu.vector_store %arg13[%c0_399, %c5], %282 {strides = array<i32>} : memref<32x16xf32, #tpu.memory_space<vmem>>, vector<32x6xf32>,
    %c0_400 = arith.constant 0 : index
    %c0_401 = arith.constant 0 : index
    %284 = vector.load %arg13[%c0_400, %c0_401] : memref<32x16xf32, #tpu.memory_space<vmem>>, vector<32x6xf32>
    %c0_402 = arith.constant 0 : index
    %c0_403 = arith.constant 0 : index
    %285 = vector.load %arg14[%c0_402, %c0_403] : memref<289x286xf32, #tpu.memory_space<vmem>>, vector<32x6xf32>
    tpu.vector_store %arg14[%c0_402, %c0_403], %284 {strides = array<i32>} : memref<289x286xf32, #tpu.memory_space<vmem>>, vector<32x6xf32>,
    %c0_404 = arith.constant 0 : index
    %c1_405 = arith.constant 1 : index
    %286 = vector.load %arg13[%c0_404, %c1_405] : memref<32x16xf32, #tpu.memory_space<vmem>>, vector<32x6xf32>
    %c32_406 = arith.constant 32 : index
    %c0_407 = arith.constant 0 : index
    %287 = vector.load %arg14[%c32_406, %c0_407] : memref<289x286xf32, #tpu.memory_space<vmem>>, vector<32x6xf32>
    tpu.vector_store %arg14[%c32_406, %c0_407], %286 {strides = array<i32>} : memref<289x286xf32, #tpu.memory_space<vmem>>, vector<32x6xf32>,
    %c0_408 = arith.constant 0 : index
    %c2_409 = arith.constant 2 : index
    %288 = vector.load %arg13[%c0_408, %c2_409] : memref<32x16xf32, #tpu.memory_space<vmem>>, vector<32x6xf32>
    %c64_410 = arith.constant 64 : index
    %c0_411 = arith.constant 0 : index
    %289 = vector.load %arg14[%c64_410, %c0_411] : memref<289x286xf32, #tpu.memory_space<vmem>>, vector<32x6xf32>
    tpu.vector_store %arg14[%c64_410, %c0_411], %288 {strides = array<i32>} : memref<289x286xf32, #tpu.memory_space<vmem>>, vector<32x6xf32>,
    %c0_412 = arith.constant 0 : index
    %c4_413 = arith.constant 4 : index
    %290 = vector.load %arg13[%c0_412, %c4_413] : memref<32x16xf32, #tpu.memory_space<vmem>>, vector<32x6xf32>
    %c96_414 = arith.constant 96 : index
    %c0_415 = arith.constant 0 : index
    %291 = vector.load %arg14[%c96_414, %c0_415] : memref<289x286xf32, #tpu.memory_space<vmem>>, vector<32x6xf32>
    tpu.vector_store %arg14[%c96_414, %c0_415], %290 {strides = array<i32>} : memref<289x286xf32, #tpu.memory_space<vmem>>, vector<32x6xf32>,
    %c0_416 = arith.constant 0 : index
    %c5_417 = arith.constant 5 : index
    %292 = vector.load %arg13[%c0_416, %c5_417] : memref<32x16xf32, #tpu.memory_space<vmem>>, vector<32x6xf32>
    %c128_418 = arith.constant 128 : index
    %c0_419 = arith.constant 0 : index
    %293 = vector.load %arg14[%c128_418, %c0_419] : memref<289x286xf32, #tpu.memory_space<vmem>>, vector<32x6xf32>
    tpu.vector_store %arg14[%c128_418, %c0_419], %292 {strides = array<i32>} : memref<289x286xf32, #tpu.memory_space<vmem>>, vector<32x6xf32>,
    %c0_420 = arith.constant 0 : index
    %c6_421 = arith.constant 6 : index
    %294 = vector.load %arg13[%c0_420, %c6_421] : memref<32x16xf32, #tpu.memory_space<vmem>>, vector<32x6xf32>
    %c160 = arith.constant 160 : index
    %c0_422 = arith.constant 0 : index
    %295 = vector.load %arg14[%c160, %c0_422] : memref<289x286xf32, #tpu.memory_space<vmem>>, vector<32x6xf32>
    tpu.vector_store %arg14[%c160, %c0_422], %294 {strides = array<i32>} : memref<289x286xf32, #tpu.memory_space<vmem>>, vector<32x6xf32>,
    %c0_423 = arith.constant 0 : index
    %c8_424 = arith.constant 8 : index
    %296 = vector.load %arg13[%c0_423, %c8_424] : memref<32x16xf32, #tpu.memory_space<vmem>>, vector<32x6xf32>
    %c192 = arith.constant 192 : index
    %c0_425 = arith.constant 0 : index
    %297 = vector.load %arg14[%c192, %c0_425] : memref<289x286xf32, #tpu.memory_space<vmem>>, vector<32x6xf32>
    tpu.vector_store %arg14[%c192, %c0_425], %296 {strides = array<i32>} : memref<289x286xf32, #tpu.memory_space<vmem>>, vector<32x6xf32>,
    %c0_426 = arith.constant 0 : index
    %c9 = arith.constant 9 : index
    %298 = vector.load %arg13[%c0_426, %c9] : memref<32x16xf32, #tpu.memory_space<vmem>>, vector<32x6xf32>
    %c224 = arith.constant 224 : index
    %c0_427 = arith.constant 0 : index
    %299 = vector.load %arg14[%c224, %c0_427] : memref<289x286xf32, #tpu.memory_space<vmem>>, vector<32x6xf32>
    tpu.vector_store %arg14[%c224, %c0_427], %298 {strides = array<i32>} : memref<289x286xf32, #tpu.memory_space<vmem>>, vector<32x6xf32>,
    %c0_428 = arith.constant 0 : index
    %c10_429 = arith.constant 10 : index
    %300 = vector.load %arg13[%c0_428, %c10_429] : memref<32x16xf32, #tpu.memory_space<vmem>>, vector<32x6xf32>
    %c256 = arith.constant 256 : index
    %c0_430 = arith.constant 0 : index
    %301 = vector.load %arg14[%c256, %c0_430] : memref<289x286xf32, #tpu.memory_space<vmem>>, vector<32x6xf32>
    tpu.vector_store %arg14[%c256, %c0_430], %300 {strides = array<i32>} : memref<289x286xf32, #tpu.memory_space<vmem>>, vector<32x6xf32>,
    %cst_431 = arith.constant 1.000000e+00 : f32
    %302 = vector.broadcast %cst_431 : f32 to vector<1x6xf32>
    %c288_432 = arith.constant 288 : index
    %c0_433 = arith.constant 0 : index
    %303 = vector.load %arg14[%c288_432, %c0_433] : memref<289x286xf32, #tpu.memory_space<vmem>>, vector<1x6xf32>
    tpu.vector_store %arg14[%c288_432, %c0_433], %302 {strides = array<i32>} : memref<289x286xf32, #tpu.memory_space<vmem>>, vector<1x6xf32>,
    %c104 = arith.constant 104 : index
    %c0_434 = arith.constant 0 : index
    %304 = vector.load %arg2[%c104, %c0_434] : memref<208x289xf32, #tpu.memory_space<vmem>>, vector<32x289xf32>
    %c0_435 = arith.constant 0 : index
    %c0_436 = arith.constant 0 : index
    %305 = vector.load %arg14[%c0_435, %c0_436] : memref<289x286xf32, #tpu.memory_space<vmem>>, vector<289x6xf32>
    %cst_437 = arith.constant dense<0.000000e+00> : vector<32x6xf32>
    %306 = tpu.matmul %304, %305, %cst_437 {dimension_numbers = #tpu.dot_dimension_numbers<[1], [0], [0], [1], [0, 0, 1, 1], [], []>} : vector<32x289xf32>, vector<289x6xf32>, vector<32x6xf32> -> vector<32x6xf32>
    %cst_438 = arith.constant 0.000000e+00 : f32
    %307 = vector.broadcast %cst_438 : f32 to vector<32x6xf32>
    %308 = arith.cmpf oge, %306, %307 : vector<32x6xf32>
    %cst_439 = arith.constant 0.00999999977 : f32
    %309 = vector.broadcast %cst_439 : f32 to vector<32x6xf32>
    %310 = arith.mulf %309, %306 : vector<32x6xf32>
    %311 = arith.select %308, %306, %310 : vector<32x6xi1>, vector<32x6xf32>
    %c203 = arith.constant 203 : index
    %c0_440 = arith.constant 0 : index
    %312 = vector.load %arg2[%c203, %c0_440] : memref<208x289xf32, #tpu.memory_space<vmem>>, vector<1x6xf32>
    %313 = vector.broadcast %312 : vector<1x6xf32> to vector<32x6xf32>
    %314 = arith.mulf %311, %313 : vector<32x6xf32>
    %c0_441 = arith.constant 0 : index
    %c5_442 = arith.constant 5 : index
    %315 = vector.load %arg13[%c0_441, %c5_442] : memref<32x16xf32, #tpu.memory_space<vmem>>, vector<32x6xf32>
    tpu.vector_store %arg13[%c0_441, %c5_442], %314 {strides = array<i32>} : memref<32x16xf32, #tpu.memory_space<vmem>>, vector<32x6xf32>,
    %c0_443 = arith.constant 0 : index
    %c0_444 = arith.constant 0 : index
    %316 = vector.load %arg13[%c0_443, %c0_444] : memref<32x16xf32, #tpu.memory_space<vmem>>, vector<32x6xf32>
    %c0_445 = arith.constant 0 : index
    %c0_446 = arith.constant 0 : index
    %317 = vector.load %arg14[%c0_445, %c0_446] : memref<289x286xf32, #tpu.memory_space<vmem>>, vector<32x6xf32>
    tpu.vector_store %arg14[%c0_445, %c0_446], %316 {strides = array<i32>} : memref<289x286xf32, #tpu.memory_space<vmem>>, vector<32x6xf32>,
    %c0_447 = arith.constant 0 : index
    %c1_448 = arith.constant 1 : index
    %318 = vector.load %arg13[%c0_447, %c1_448] : memref<32x16xf32, #tpu.memory_space<vmem>>, vector<32x6xf32>
    %c32_449 = arith.constant 32 : index
    %c0_450 = arith.constant 0 : index
    %319 = vector.load %arg14[%c32_449, %c0_450] : memref<289x286xf32, #tpu.memory_space<vmem>>, vector<32x6xf32>
    tpu.vector_store %arg14[%c32_449, %c0_450], %318 {strides = array<i32>} : memref<289x286xf32, #tpu.memory_space<vmem>>, vector<32x6xf32>,
    %c0_451 = arith.constant 0 : index
    %c2_452 = arith.constant 2 : index
    %320 = vector.load %arg13[%c0_451, %c2_452] : memref<32x16xf32, #tpu.memory_space<vmem>>, vector<32x6xf32>
    %c64_453 = arith.constant 64 : index
    %c0_454 = arith.constant 0 : index
    %321 = vector.load %arg14[%c64_453, %c0_454] : memref<289x286xf32, #tpu.memory_space<vmem>>, vector<32x6xf32>
    tpu.vector_store %arg14[%c64_453, %c0_454], %320 {strides = array<i32>} : memref<289x286xf32, #tpu.memory_space<vmem>>, vector<32x6xf32>,
    %c0_455 = arith.constant 0 : index
    %c4_456 = arith.constant 4 : index
    %322 = vector.load %arg13[%c0_455, %c4_456] : memref<32x16xf32, #tpu.memory_space<vmem>>, vector<32x6xf32>
    %c96_457 = arith.constant 96 : index
    %c0_458 = arith.constant 0 : index
    %323 = vector.load %arg14[%c96_457, %c0_458] : memref<289x286xf32, #tpu.memory_space<vmem>>, vector<32x6xf32>
    tpu.vector_store %arg14[%c96_457, %c0_458], %322 {strides = array<i32>} : memref<289x286xf32, #tpu.memory_space<vmem>>, vector<32x6xf32>,
    %c0_459 = arith.constant 0 : index
    %c5_460 = arith.constant 5 : index
    %324 = vector.load %arg13[%c0_459, %c5_460] : memref<32x16xf32, #tpu.memory_space<vmem>>, vector<32x6xf32>
    %c128_461 = arith.constant 128 : index
    %c0_462 = arith.constant 0 : index
    %325 = vector.load %arg14[%c128_461, %c0_462] : memref<289x286xf32, #tpu.memory_space<vmem>>, vector<32x6xf32>
    tpu.vector_store %arg14[%c128_461, %c0_462], %324 {strides = array<i32>} : memref<289x286xf32, #tpu.memory_space<vmem>>, vector<32x6xf32>,
    %c0_463 = arith.constant 0 : index
    %c6_464 = arith.constant 6 : index
    %326 = vector.load %arg13[%c0_463, %c6_464] : memref<32x16xf32, #tpu.memory_space<vmem>>, vector<32x6xf32>
    %c160_465 = arith.constant 160 : index
    %c0_466 = arith.constant 0 : index
    %327 = vector.load %arg14[%c160_465, %c0_466] : memref<289x286xf32, #tpu.memory_space<vmem>>, vector<32x6xf32>
    tpu.vector_store %arg14[%c160_465, %c0_466], %326 {strides = array<i32>} : memref<289x286xf32, #tpu.memory_space<vmem>>, vector<32x6xf32>,
    %c0_467 = arith.constant 0 : index
    %c8_468 = arith.constant 8 : index
    %328 = vector.load %arg13[%c0_467, %c8_468] : memref<32x16xf32, #tpu.memory_space<vmem>>, vector<32x6xf32>
    %c192_469 = arith.constant 192 : index
    %c0_470 = arith.constant 0 : index
    %329 = vector.load %arg14[%c192_469, %c0_470] : memref<289x286xf32, #tpu.memory_space<vmem>>, vector<32x6xf32>
    tpu.vector_store %arg14[%c192_469, %c0_470], %328 {strides = array<i32>} : memref<289x286xf32, #tpu.memory_space<vmem>>, vector<32x6xf32>,
    %c0_471 = arith.constant 0 : index
    %c9_472 = arith.constant 9 : index
    %330 = vector.load %arg13[%c0_471, %c9_472] : memref<32x16xf32, #tpu.memory_space<vmem>>, vector<32x6xf32>
    %c224_473 = arith.constant 224 : index
    %c0_474 = arith.constant 0 : index
    %331 = vector.load %arg14[%c224_473, %c0_474] : memref<289x286xf32, #tpu.memory_space<vmem>>, vector<32x6xf32>
    tpu.vector_store %arg14[%c224_473, %c0_474], %330 {strides = array<i32>} : memref<289x286xf32, #tpu.memory_space<vmem>>, vector<32x6xf32>,
    %c0_475 = arith.constant 0 : index
    %c10_476 = arith.constant 10 : index
    %332 = vector.load %arg13[%c0_475, %c10_476] : memref<32x16xf32, #tpu.memory_space<vmem>>, vector<32x6xf32>
    %c256_477 = arith.constant 256 : index
    %c0_478 = arith.constant 0 : index
    %333 = vector.load %arg14[%c256_477, %c0_478] : memref<289x286xf32, #tpu.memory_space<vmem>>, vector<32x6xf32>
    tpu.vector_store %arg14[%c256_477, %c0_478], %332 {strides = array<i32>} : memref<289x286xf32, #tpu.memory_space<vmem>>, vector<32x6xf32>,
    %cst_479 = arith.constant 1.000000e+00 : f32
    %334 = vector.broadcast %cst_479 : f32 to vector<1x6xf32>
    %c288_480 = arith.constant 288 : index
    %c0_481 = arith.constant 0 : index
    %335 = vector.load %arg14[%c288_480, %c0_481] : memref<289x286xf32, #tpu.memory_space<vmem>>, vector<1x6xf32>
    tpu.vector_store %arg14[%c288_480, %c0_481], %334 {strides = array<i32>} : memref<289x286xf32, #tpu.memory_space<vmem>>, vector<1x6xf32>,
    %c136 = arith.constant 136 : index
    %c0_482 = arith.constant 0 : index
    %336 = vector.load %arg2[%c136, %c0_482] : memref<208x289xf32, #tpu.memory_space<vmem>>, vector<64x289xf32>
    %c0_483 = arith.constant 0 : index
    %c0_484 = arith.constant 0 : index
    %337 = vector.load %arg14[%c0_483, %c0_484] : memref<289x286xf32, #tpu.memory_space<vmem>>, vector<289x6xf32>
    %cst_485 = arith.constant dense<0.000000e+00> : vector<64x6xf32>
    %338 = tpu.matmul %336, %337, %cst_485 {dimension_numbers = #tpu.dot_dimension_numbers<[1], [0], [0], [1], [0, 0, 1, 1], [], []>} : vector<64x289xf32>, vector<289x6xf32>, vector<64x6xf32> -> vector<64x6xf32>
    %c0_486 = arith.constant 0 : index
    %c0_487 = arith.constant 0 : index
    %c0_488 = arith.constant 0 : index
    %339 = vector.load %arg8[%c0_486, %c0_487, %c0_488] : memref<1x64x6xf32, #tpu.memory_space<vmem>>, vector<1x64x6xf32>
    %340 = vector.shape_cast %339 : vector<1x64x6xf32> to vector<64x6xf32>
    %341 = vector.shape_cast %338 : vector<64x6xf32> to vector<1x64x6xf32>
    tpu.vector_store %arg8[%c0_486, %c0_487, %c0_488], %341 {strides = array<i32>} : memref<1x64x6xf32, #tpu.memory_space<vmem>>, vector<1x64x6xf32>,
    return
  }
  func.func @transform_0(%arg0: i32) -> (i32, i32, i32) {
    %c0_i32 = arith.constant 0 : i32
    %c0_i32_0 = arith.constant 0 : i32
    %c0_i32_1 = arith.constant 0 : i32
    return %arg0, %c0_i32, %c0_i32_0 : i32, i32, i32
  }
  func.func @transform_1(%arg0: i32) -> (i32, i32) {
    %c0_i32 = arith.constant 0 : i32
    %c0_i32_0 = arith.constant 0 : i32
    %c0_i32_1 = arith.constant 0 : i32
    return %c0_i32, %c0_i32_0 : i32, i32
  }
  func.func @transform_2(%arg0: i32) -> (i32, i32) {
    %c0_i32 = arith.constant 0 : i32
    %c0_i32_0 = arith.constant 0 : i32
    %c0_i32_1 = arith.constant 0 : i32
    return %c0_i32, %c0_i32_0 : i32, i32
  }
  func.func @transform_3(%arg0: i32) -> (i32, i32, i32) {
    %c0_i32 = arith.constant 0 : i32
    %c0_i32_0 = arith.constant 0 : i32
    %c0_i32_1 = arith.constant 0 : i32
    return %arg0, %c0_i32, %c0_i32_0 : i32, i32, i32
  }
  func.func @transform_4(%arg0: i32) -> (i32, i32, i32) {
    %c0_i32 = arith.constant 0 : i32
    %c0_i32_0 = arith.constant 0 : i32
    %c0_i32_1 = arith.constant 0 : i32
    return %arg0, %c0_i32, %c0_i32_0 : i32, i32, i32
  }
  func.func @transform_5(%arg0: i32) -> (i32, i32, i32) {
    %c0_i32 = arith.constant 0 : i32
    %c0_i32_0 = arith.constant 0 : i32
    %c0_i32_1 = arith.constant 0 : i32
    return %arg0, %c0_i32, %c0_i32_0 : i32, i32, i32
  }
  func.func @transform_6(%arg0: i32) -> (i32, i32, i32) {
    %c0_i32 = arith.constant 0 : i32
    %c0_i32_0 = arith.constant 0 : i32
    %c0_i32_1 = arith.constant 0 : i32
    return %arg0, %c0_i32, %c0_i32_0 : i32, i32, i32
  }
  func.func @transform_7(%arg0: i32) -> (i32, i32, i32) {
    %c0_i32 = arith.constant 0 : i32
    %c0_i32_0 = arith.constant 0 : i32
    %c0_i32_1 = arith.constant 0 : i32
    return %arg0, %c0_i32, %c0_i32_0 : i32, i32, i32
  }
}

</mosaic_0001>

<llo_original>
// kernel: condnet3_forward.1
$region0: #{condnet3_forward.1}
  #allocation0 [shape = 'u32[]', space=smem, size = 0x4, offset = 0x4, fixed_abs, tag = 'smem constant byte address 0x4 - core index']
  #allocation1 [shape = 'u32[144,128]{1,0:T(1,128)}', space=vmem, size = 0x12000, scoped, tag = 'internal scratch']
  #allocation2 [shape = 'f32[4,324]{1,0:T(4,128)}', space=vmem, size = 0x1800, scoped, tag = 'scratch operand']
  #allocation3 [shape = 'f32[4,324]{1,0:T(4,128)}', space=vmem, size = 0x1800, scoped, tag = 'scratch operand']
  #allocation4 [shape = 'f32[8,100]{1,0:T(8,128)}', space=vmem, size = 0x1000, scoped, tag = 'scratch operand']
  #allocation5 [shape = 'f32[16,36]{1,0:T(8,128)}', space=vmem, size = 0x2000, scoped, tag = 'scratch operand']
  #allocation6 [shape = 'f32[32,16]{1,0:T(8,128)}', space=vmem, size = 0x4000, scoped, tag = 'scratch operand']
  #allocation7 [shape = 'f32[289,286]{1,0:T(8,128)}', space=vmem, size = 0x6f000, scoped, tag = 'scratch operand']
  %s0 = inlined_call_operand.vmem [shape: f32[2,4,324], index: 0, kind: input, shape index: {}]
  %s1 = inlined_call_operand.vmem [shape: f32[208,289], index: 1, kind: input, shape index: {}]
  %s2 = inlined_call_operand.vmem [shape: f32[392,78], index: 2, kind: input, shape index: {}]
  %s3 = inlined_call_operand.vmem [shape: f32[2,4,286], index: 3, kind: output, shape index: {0}]
  %s4 = inlined_call_operand.vmem [shape: f32[2,8,286], index: 4, kind: output, shape index: {1}]
  %s5 = inlined_call_operand.vmem [shape: f32[2,16,78], index: 5, kind: output, shape index: {2}]
  %s6 = inlined_call_operand.vmem [shape: f32[2,32,22], index: 6, kind: output, shape index: {3}]
  %s7 = inlined_call_operand.vmem [shape: f32[2,64,6], index: 7, kind: output, shape index: {4}]
  %8 = xla_tuple %s3, %s4, %s5, %s6, %s7
  %s9 = sld [smem:[#allocation0]]
  $region77: #{condnet3_forward.1} parent=0
    _
  %s11 = ssub.s32 1, %s9
  %s12 = scalar_select 0, %s11, %s9
  loop: start=0, step=1, limit=4
  $region2: #{condnet3_forward.1} parent=0 // loop_pre_header
    _
  $region3: #{condnet3_forward.1} parent=0 // loop_header
    %s14 = sphi 0, %s18
    %p15 = scmp.ge.s32.totalorder %s14, 4
    %s24 = sphi 0, %s26
    %s27 = sphi 0, %s24
    %s28 = sphi 0, %s27
    %s44 = sphi 0, %s28
    %s48 = sphi 0, %s48
    %s50 = sphi 0, %s48
    %s51 = sphi 0, %s50
    %s65 = sphi 0, %s51
    %s69 = sphi 0, %s69
    %s71 = sphi 0, %s69
    %s72 = sphi 0, %s71
    %s86 = sphi 0, %s72
    %s92 = sphi 0, %s94
    %s95 = sphi 0, %s92
    %s96 = sphi 0, %s95
    %s112 = sphi 0, %s96
    %s118 = sphi 0, %s120
    %s121 = sphi 0, %s118
    %s122 = sphi 0, %s121
    %s138 = sphi 0, %s122
    %s144 = sphi 0, %s146
    %s147 = sphi 0, %s144
    %s148 = sphi 0, %s147
    %s164 = sphi 0, %s148
    %s170 = sphi 0, %s172
    %s173 = sphi 0, %s170
    %s174 = sphi 0, %s173
    %s190 = sphi 0, %s174
    %s196 = sphi 0, %s198
    %s199 = sphi 0, %s196
    %s200 = sphi 0, %s199
    %s216 = sphi 0, %s200
  $region4: #{condnet3_forward.1} parent=0 // loop_header_branch
    %17 = sbr.rel (%p15) target = $region8
  $region5: #{condnet3_forward.1} parent=0 // loop_body
    %s19 = ssub.s32 %s14, 1
    %s20 = ssub.s32 %s14, 2
    %s21 = sadd.s32 %s14, 1
    %s22 = ssub.s32 %s14, %s21
    %p23 = scmp.eq.s32.totalorder %s22, 0
    %s25 = sadd.s32 %s24, 1
    %s26 = scalar_select %p23, %s24, %s25
    %p29 = pneg %p23
    %p30 = scmp.eq.s32.totalorder %s14, 1
    %p31 = por %p29, %p30
    %p32 = scmp.ne.s32.totalorder %s24, %s27
    %p33 = scmp.eq.s32.totalorder %s14, 0
    %p34 = por %p32, %p33
    %p35 = scmp.ne.s32.totalorder %s24, %s27
    %p36 = scmp.eq.s32.totalorder %s19, 1
    %p37 = por %p35, %p36
    %p38 = scmp.ne.s32.totalorder %s27, %s28
    %p39 = scmp.eq.s32.totalorder %s19, 0
    %p40 = por %p38, %p39
    %p41 = scmp.ne.s32.totalorder %s27, %s28
    %p42 = scmp.eq.s32.totalorder %s20, 1
    %p43 = por %p41, %p42
    %p45 = scmp.ne.s32.totalorder %s28, %s44
    %p46 = scmp.eq.s32.totalorder %s20, 0
    %p47 = por %p45, %p46
    %s49 = sadd.s32 %s48, 1
    %p52 = scmp.eq.s32.totalorder %s14, 1
    %p53 = scmp.ne.s32.totalorder %s48, %s50
    %p54 = scmp.eq.s32.totalorder %s14, 0
    %p55 = por %p53, %p54
    %p56 = scmp.ne.s32.totalorder %s48, %s50
    %p57 = scmp.eq.s32.totalorder %s19, 1
    %p58 = por %p56, %p57
    %p59 = scmp.ne.s32.totalorder %s50, %s51
    %p60 = scmp.eq.s32.totalorder %s19, 0
    %p61 = por %p59, %p60
    %p62 = scmp.ne.s32.totalorder %s50, %s51
    %p63 = scmp.eq.s32.totalorder %s20, 1
    %p64 = por %p62, %p63
    %p66 = scmp.ne.s32.totalorder %s51, %s65
    %p67 = scmp.eq.s32.totalorder %s20, 0
    %p68 = por %p66, %p67
    %s70 = sadd.s32 %s69, 1
    %p73 = scmp.eq.s32.totalorder %s14, 1
    %p74 = scmp.ne.s32.totalorder %s69, %s71
    %p75 = scmp.eq.s32.totalorder %s14, 0
    %p76 = por %p74, %p75
    %p77 = scmp.ne.s32.totalorder %s69, %s71
    %p78 = scmp.eq.s32.totalorder %s19, 1
    %p79 = por %p77, %p78
    %p80 = scmp.ne.s32.totalorder %s71, %s72
    %p81 = scmp.eq.s32.totalorder %s19, 0
    %p82 = por %p80, %p81
    %p83 = scmp.ne.s32.totalorder %s71, %s72
    %p84 = scmp.eq.s32.totalorder %s20, 1
    %p85 = por %p83, %p84
    %p87 = scmp.ne.s32.totalorder %s72, %s86
    %p88 = scmp.eq.s32.totalorder %s20, 0
    %p89 = por %p87, %p88
    %s90 = ssub.s32 %s14, %s21
    %p91 = scmp.eq.s32.totalorder %s90, 0
    %s93 = sadd.s32 %s92, 1
    %s94 = scalar_select %p91, %s92, %s93
    %p97 = pneg %p91
    %p98 = scmp.eq.s32.totalorder %s14, 1
    %p99 = por %p97, %p98
    %p100 = scmp.ne.s32.totalorder %s92, %s95
    %p101 = scmp.eq.s32.totalorder %s14, 0
    %p102 = por %p100, %p101
    %p103 = scmp.ne.s32.totalorder %s92, %s95
    %p104 = scmp.eq.s32.totalorder %s19, 1
    %p105 = por %p103, %p104
    %p106 = scmp.ne.s32.totalorder %s95, %s96
    %p107 = scmp.eq.s32.totalorder %s19, 0
    %p108 = por %p106, %p107
    %p109 = scmp.ne.s32.totalorder %s95, %s96
    %p110 = scmp.eq.s32.totalorder %s20, 1
    %p111 = por %p109, %p110
    %p113 = scmp.ne.s32.totalorder %s96, %s112
    %p114 = scmp.eq.s32.totalorder %s20, 0
    %p115 = por %p113, %p114
    %s116 = ssub.s32 %s14, %s21
    %p117 = scmp.eq.s32.totalorder %s116, 0
    %s119 = sadd.s32 %s118, 1
    %s120 = scalar_select %p117, %s118, %s119
    %p123 = pneg %p117
    %p124 = scmp.eq.s32.totalorder %s14, 1
    %p125 = por %p123, %p124
    %p126 = scmp.ne.s32.totalorder %s118, %s121
    %p127 = scmp.eq.s32.totalorder %s14, 0
    %p128 = por %p126, %p127
    %p129 = scmp.ne.s32.totalorder %s118, %s121
    %p130 = scmp.eq.s32.totalorder %s19, 1
    %p131 = por %p129, %p130
    %p132 = scmp.ne.s32.totalorder %s121, %s122
    %p133 = scmp.eq.s32.totalorder %s19, 0
    %p134 = por %p132, %p133
    %p135 = scmp.ne.s32.totalorder %s121, %s122
    %p136 = scmp.eq.s32.totalorder %s20, 1
    %p137 = por %p135, %p136
    %p139 = scmp.ne.s32.totalorder %s122, %s138
    %p140 = scmp.eq.s32.totalorder %s20, 0
    %p141 = por %p139, %p140
    %s142 = ssub.s32 %s14, %s21
    %p143 = scmp.eq.s32.totalorder %s142, 0
    %s145 = sadd.s32 %s144, 1
    %s146 = scalar_select %p143, %s144, %s145
    %p149 = pneg %p143
    %p150 = scmp.eq.s32.totalorder %s14, 1
    %p151 = por %p149, %p150
    %p152 = scmp.ne.s32.totalorder %s144, %s147
    %p153 = scmp.eq.s32.totalorder %s14, 0
    %p154 = por %p152, %p153
    %p155 = scmp.ne.s32.totalorder %s144, %s147
    %p156 = scmp.eq.s32.totalorder %s19, 1
    %p157 = por %p155, %p156
    %p158 = scmp.ne.s32.totalorder %s147, %s148
    %p159 = scmp.eq.s32.totalorder %s19, 0
    %p160 = por %p158, %p159
    %p161 = scmp.ne.s32.totalorder %s147, %s148
    %p162 = scmp.eq.s32.totalorder %s20, 1
    %p163 = por %p161, %p162
    %p165 = scmp.ne.s32.totalorder %s148, %s164
    %p166 = scmp.eq.s32.totalorder %s20, 0
    %p167 = por %p165, %p166
    %s168 = ssub.s32 %s14, %s21
    %p169 = scmp.eq.s32.totalorder %s168, 0
    %s171 = sadd.s32 %s170, 1
    %s172 = scalar_select %p169, %s170, %s171
    %p175 = pneg %p169
    %p176 = scmp.eq.s32.totalorder %s14, 1
    %p177 = por %p175, %p176
    %p178 = scmp.ne.s32.totalorder %s170, %s173
    %p179 = scmp.eq.s32.totalorder %s14, 0
    %p180 = por %p178, %p179
    %p181 = scmp.ne.s32.totalorder %s170, %s173
    %p182 = scmp.eq.s32.totalorder %s19, 1
    %p183 = por %p181, %p182
    %p184 = scmp.ne.s32.totalorder %s173, %s174
    %p185 = scmp.eq.s32.totalorder %s19, 0
    %p186 = por %p184, %p185
    %p187 = scmp.ne.s32.totalorder %s173, %s174
    %p188 = scmp.eq.s32.totalorder %s20, 1
    %p189 = por %p187, %p188
    %p191 = scmp.ne.s32.totalorder %s174, %s190
    %p192 = scmp.eq.s32.totalorder %s20, 0
    %p193 = por %p191, %p192
    %s194 = ssub.s32 %s14, %s21
    %p195 = scmp.eq.s32.totalorder %s194, 0
    %s197 = sadd.s32 %s196, 1
    %s198 = scalar_select %p195, %s196, %s197
    %p201 = pneg %p195
    %p202 = scmp.eq.s32.totalorder %s14, 1
    %p203 = por %p201, %p202
    %p204 = scmp.ne.s32.totalorder %s196, %s199
    %p205 = scmp.eq.s32.totalorder %s14, 0
    %p206 = por %p204, %p205
    %p207 = scmp.ne.s32.totalorder %s196, %s199
    %p208 = scmp.eq.s32.totalorder %s19, 1
    %p209 = por %p207, %p208
    %p210 = scmp.ne.s32.totalorder %s199, %s200
    %p211 = scmp.eq.s32.totalorder %s19, 0
    %p212 = por %p210, %p211
    %p213 = scmp.ne.s32.totalorder %s199, %s200
    %p214 = scmp.eq.s32.totalorder %s20, 1
    %p215 = por %p213, %p214
    %p217 = scmp.ne.s32.totalorder %s200, %s216
    %p218 = scmp.eq.s32.totalorder %s20, 0
    %p219 = por %p217, %p218
    %p220 = scmp.le.s32.totalorder 1, %s14
    %p221 = scmp.lt.s32.totalorder %s14, 3
    %p222 = pnand %p220, %p221
    %p223 = pneg %p222
    // Predicated region
    $region9: #{condnet3_forward.1} parent=5 // pred_check
      _
    $region10: #{condnet3_forward.1} parent=5 // pred_check_branch
      %225 = sbr.rel (%p222) target = $region12
    $region11: #{condnet3_forward.1} parent=5 // pred_region
      %s226 = ssub.s32 %s14, 1
      // Predicated region
      $region13: #{condnet3_forward.1} parent=11 // pred_check
        %p227 = pneg %p61
      $region14: #{condnet3_forward.1} parent=11 // pred_check_branch
        %229 = sbr.rel (%p227) target = $region16
      $region15: #{condnet3_forward.1} parent=11 // pred_region
        _
      $region16: #{condnet3_forward.1} parent=11 // pred_fallthru
        _
      // Predicated region
      $region17: #{condnet3_forward.1} parent=11 // pred_check
        %p230 = pneg %p82
      $region18: #{condnet3_forward.1} parent=11 // pred_check_branch
        %232 = sbr.rel (%p230) target = $region20
      $region19: #{condnet3_forward.1} parent=11 // pred_region
        _
      $region20: #{condnet3_forward.1} parent=11 // pred_fallthru
        _
    $region12: #{condnet3_forward.1} parent=5 // pred_fallthru
      _
    %p233 = scmp.lt.s32.totalorder %s14, 2
    // Predicated region
    $region21: #{condnet3_forward.1} parent=5 // pred_check
      %p234 = pneg %p233
    $region22: #{condnet3_forward.1} parent=5 // pred_check_branch
      %236 = sbr.rel (%p234) target = $region24
    $region23: #{condnet3_forward.1} parent=5 // pred_region
      // Predicated region
      $region25: #{condnet3_forward.1} parent=23 // pred_check
        %p237 = pneg %p34
      $region26: #{condnet3_forward.1} parent=23 // pred_check_branch
        %239 = sbr.rel (%p237) target = $region28
      $region27: #{condnet3_forward.1} parent=23 // pred_region
        %p240 = scmp.lt.s32.totalorder %s14, 1
        %s241 = scalar_select %p240, %s14, 1
        %s242 = smul.addr %s241, 3
        %s243 = smul.addr %s242, 4
        %s244 = scalar_lea.vmem %s0, %s243
      $region28: #{condnet3_forward.1} parent=23 // pred_fallthru
        _
    $region24: #{condnet3_forward.1} parent=5 // pred_fallthru
      _
    %p245 = scmp.le.s32.totalorder 1, %s14
    %p246 = scmp.lt.s32.totalorder %s14, 3
    %p247 = pnand %p245, %p246
    %p248 = pneg %p247
    // Predicated region
    $region29: #{condnet3_forward.1} parent=5 // pred_check
      _
    $region30: #{condnet3_forward.1} parent=5 // pred_check_branch
      %250 = sbr.rel (%p247) target = $region32
    $region31: #{condnet3_forward.1} parent=5 // pred_region
      %s251 = ssub.s32 %s14, 1
      %p252 = scmp.lt.s32.totalorder %s19, 1
      %s253 = scalar_select %p252, %s19, 1
      %s254 = smul.addr %s253, 3
      %s255 = smul.addr %s254, 4
      %s256 = scalar_lea.vmem %s0, %s255
      %p257 = pneg %p40
      %p258 = pneg %p37
      %p259 = pneg %p61
      %p260 = pneg %p58
      %p261 = pneg %p82
      %p262 = pneg %p79
      %p263 = pneg %p108
      %p264 = pneg %p105
      %p265 = scmp.lt.s32.totalorder %s19, 1
      %s266 = scalar_select %p265, %s19, 1
      %s267 = smul.addr %s266, 3
      %s268 = smul.addr %s267, 4
      %s269 = scalar_lea.vmem %s3, %s268
      %p270 = pneg %p134
      %p271 = pneg %p131
      %p272 = scmp.lt.s32.totalorder %s19, 1
      %s273 = scalar_select %p272, %s19, 1
      %s274 = smul.addr %s273, 3
      %s275 = smul.addr %s274, 8
      %s276 = scalar_lea.vmem %s4, %s275
      %p277 = pneg %p160
      %p278 = pneg %p157
      %p279 = scmp.lt.s32.totalorder %s19, 1
      %s280 = scalar_select %p279, %s19, 1
      %s281 = smul.addr %s280, 2
      %s282 = smul.addr %s281, 8
      %s283 = scalar_lea.vmem %s5, %s282
      %p284 = pneg %p186
      %p285 = pneg %p183
      %p286 = scmp.lt.s32.totalorder %s19, 1
      %s287 = scalar_select %p286, %s19, 1
      %s288 = smul.addr %s287, 4
      %s289 = smul.addr %s288, 8
      %s290 = scalar_lea.vmem %s6, %s289
      %p291 = pneg %p212
      %p292 = pneg %p209
      %p293 = scmp.lt.s32.totalorder %s19, 1
      %s294 = scalar_select %p293, %s19, 1
      %s295 = smul.addr %s294, 8
      %s296 = smul.addr %s295, 8
      %s297 = scalar_lea.vmem %s7, %s296
      %p298 = scmp.lt.s32.totalorder %s19, 1
      %s299 = scalar_select %p298, %s19, 1
      %s300 = smul.addr %s299, 3
      %s301 = smul.addr %s300, 4
      %s302 = scalar_lea.vmem %s0, %s301
      %p303 = scmp.lt.s32.totalorder %s19, 1
      %s304 = scalar_select %p303, %s19, 1
      %s305 = smul.addr %s304, 3
      %s306 = smul.addr %s305, 4
      %s307 = scalar_lea.vmem %s3, %s306
      %p308 = scmp.lt.s32.totalorder %s19, 1
      %s309 = scalar_select %p308, %s19, 1
      %s310 = smul.addr %s309, 3
      %s311 = smul.addr %s310, 8
      %s312 = scalar_lea.vmem %s4, %s311
      %p313 = scmp.lt.s32.totalorder %s19, 1
      %s314 = scalar_select %p313, %s19, 1
      %s315 = smul.addr %s314, 2
      %s316 = smul.addr %s315, 8
      %s317 = scalar_lea.vmem %s5, %s316
      %p318 = scmp.lt.s32.totalorder %s19, 1
      %s319 = scalar_select %p318, %s19, 1
      %s320 = smul.addr %s319, 4
      %s321 = smul.addr %s320, 8
      %s322 = scalar_lea.vmem %s6, %s321
      %p323 = scmp.lt.s32.totalorder %s19, 1
      %s324 = scalar_select %p323, %s19, 1
      %s325 = smul.addr %s324, 8
      %s326 = smul.addr %s325, 8
      %s327 = scalar_lea.vmem %s7, %s326
      %v328 = vld [vmem:[%s302] sm:$0xff]
      %v329 = vld [vmem:[%s302 + $0x8] sm:$0xf]
      %330 = vst [vmem:[#allocation2] sm:$0xff] %v328
      %vm331 = vcmask 551936
      %332 = vst.msk [vmem:[#allocation2 + $0x8] sm:$0xf] %vm331, %v329
      %v333 = vld [vmem:[#allocation2] sm:$0xff]
      %v334 = vld [vmem:[#allocation2 + $0x8] sm:$0xf]
      %v336 = vcombine.high %v333, %v333
      %338 = vst [vmem:[#allocation7] sm:$0xf] %v333
      %339 = vst [vmem:[#allocation7 + $0x8] sm:$0xf] %v336
      %vm340 = vcmask 240640
      %341 = vst.msk [vmem:[#allocation7 + $0x10] sm:$0xf] %vm340, %v334
      %v342 = vld [vmem:[#allocation2] sm:$0xff]
      %v343 = vld [vmem:[#allocation2 + $0x8] sm:$0xf]
      %v346 = vcombine.low %v342, %v342
      %v347 = vcombine.low %v343, %v343
      %348 = vrot.lane.b32.xlu0 %v346, 127
      %v349 = vpop.permute.xlu0 %348
      %350 = vrot.lane.b32.xlu0 %v342, 127
      %v351 = vpop.permute.xlu0 %350
      %352 = vrot.lane.b32.xlu0 %v347, 127
      %v353 = vpop.permute.xlu0 %352
      %vm354 = vcmask 1039360
      %v355 = vsel %vm354, %v349, %v351
      %v356 = vsel %vm354, %v351, %v353
      %360 = vst [vmem:[#allocation7] sm:$0xf0] %v355
      %361 = vst [vmem:[#allocation7 + $0x8] sm:$0xf0] %v356
      %vm362 = vcmask 244740
      %363 = vst.msk [vmem:[#allocation7 + $0x10] sm:$0xf0] %vm362, %v353
      %v364 = vld [vmem:[#allocation2] sm:$0xff]
      %v365 = vld [vmem:[#allocation2 + $0x8] sm:$0xf]
      %v368 = vcombine.high %v364, %v364
      %369 = vrot.lane.b32.xlu0 %v364, 126
      %v370 = vpop.permute.xlu0 %369
      %371 = vrot.lane.b32.xlu0 %v368, 126
      %v372 = vpop.permute.xlu0 %371
      %373 = vrot.lane.b32.xlu0 %v365, 126
      %v374 = vpop.permute.xlu0 %373
      %vm375 = vcmask 1031168
      %v376 = vsel %vm375, %v370, %v372
      %v377 = vsel %vm375, %v372, %v374
      %381 = vst [vmem:[#allocation7 + $0x18] sm:$0xf] %v376
      %382 = vst [vmem:[#allocation7 + $0x20] sm:$0xf] %v377
      %383 = vst.msk [vmem:[#allocation7 + $0x28] sm:$0xf] %vm340, %v374
      %v384 = vld [vmem:[#allocation2] sm:$0xff]
      %v385 = vld [vmem:[#allocation2 + $0x8] sm:$0xf]
      %v388 = vcombine.low %v384, %v384
      %v389 = vcombine.low %v385, %v385
      %390 = vrot.lane.b32.xlu0 %v388, 110
      %v391 = vpop.permute.xlu0 %390
      %392 = vrot.lane.b32.xlu0 %v384, 110
      %v393 = vpop.permute.xlu0 %392
      %394 = vrot.lane.b32.xlu0 %v389, 110
      %v395 = vpop.permute.xlu0 %394
      %vm396 = vcmask 900096
      %v397 = vsel %vm396, %v391, %v393
      %v398 = vsel %vm396, %v393, %v395
      %402 = vst [vmem:[#allocation7 + $0x18] sm:$0xf0] %v397
      %403 = vst [vmem:[#allocation7 + $0x20] sm:$0xf0] %v398
      %404 = vst.msk [vmem:[#allocation7 + $0x28] sm:$0xf0] %vm362, %v395
      %v405 = vld [vmem:[#allocation2] sm:$0xff]
      %v406 = vld [vmem:[#allocation2 + $0x8] sm:$0xf]
      %v409 = vcombine.high %v405, %v405
      %410 = vrot.lane.b32.xlu0 %v405, 109
      %v411 = vpop.permute.xlu0 %410
      %412 = vrot.lane.b32.xlu0 %v409, 109
      %v413 = vpop.permute.xlu0 %412
      %414 = vrot.lane.b32.xlu0 %v406, 109
      %v415 = vpop.permute.xlu0 %414
      %vm416 = vcmask 891904
      %v417 = vsel %vm416, %v411, %v413
      %v418 = vsel %vm416, %v413, %v415
      %422 = vst [vmem:[#allocation7 + $0x30] sm:$0xf] %v417
      %423 = vst [vmem:[#allocation7 + $0x38] sm:$0xf] %v418
      %424 = vst.msk [vmem:[#allocation7 + $0x40] sm:$0xf] %vm340, %v415
      %v425 = vld [vmem:[#allocation2] sm:$0xff]
      %v426 = vld [vmem:[#allocation2 + $0x8] sm:$0xf]
      %v429 = vcombine.low %v425, %v425
      %v430 = vcombine.low %v426, %v426
      %431 = vrot.lane.b32.xlu0 %v429, 108
      %v432 = vpop.permute.xlu0 %431
      %433 = vrot.lane.b32.xlu0 %v425, 108
      %v434 = vpop.permute.xlu0 %433
      %435 = vrot.lane.b32.xlu0 %v430, 108
      %v436 = vpop.permute.xlu0 %435
      %vm437 = vcmask 883712
      %v438 = vsel %vm437, %v432, %v434
      %v439 = vsel %vm437, %v434, %v436
      %443 = vst [vmem:[#allocation7 + $0x30] sm:$0xf0] %v438
      %444 = vst [vmem:[#allocation7 + $0x38] sm:$0xf0] %v439
      %445 = vst.msk [vmem:[#allocation7 + $0x40] sm:$0xf0] %vm362, %v436
      %v446 = vld [vmem:[#allocation2] sm:$0xff]
      %v447 = vld [vmem:[#allocation2 + $0x8] sm:$0xf]
      %v450 = vcombine.high %v446, %v446
      %451 = vrot.lane.b32.xlu0 %v446, 92
      %v452 = vpop.permute.xlu0 %451
      %453 = vrot.lane.b32.xlu0 %v450, 92
      %v454 = vpop.permute.xlu0 %453
      %455 = vrot.lane.b32.xlu0 %v447, 92
      %v456 = vpop.permute.xlu0 %455
      %vm457 = vcmask 752640
      %v458 = vsel %vm457, %v452, %v454
      %v459 = vsel %vm457, %v454, %v456
      %463 = vst [vmem:[#allocation7 + $0x48] sm:$0xf] %v458
      %464 = vst [vmem:[#allocation7 + $0x50] sm:$0xf] %v459
      %465 = vst.msk [vmem:[#allocation7 + $0x58] sm:$0xf] %vm340, %v456
      %v466 = vld [vmem:[#allocation2] sm:$0xff]
      %v467 = vld [vmem:[#allocation2 + $0x8] sm:$0xf]
      %v470 = vcombine.low %v466, %v466
      %v471 = vcombine.low %v467, %v467
      %472 = vrot.lane.b32.xlu0 %v470, 91
      %v473 = vpop.permute.xlu0 %472
      %474 = vrot.lane.b32.xlu0 %v466, 91
      %v475 = vpop.permute.xlu0 %474
      %476 = vrot.lane.b32.xlu0 %v471, 91
      %v477 = vpop.permute.xlu0 %476
      %vm478 = vcmask 744448
      %v479 = vsel %vm478, %v473, %v475
      %v480 = vsel %vm478, %v475, %v477
      %484 = vst [vmem:[#allocation7 + $0x48] sm:$0xf0] %v479
      %485 = vst [vmem:[#allocation7 + $0x50] sm:$0xf0] %v480
      %486 = vst.msk [vmem:[#allocation7 + $0x58] sm:$0xf0] %vm362, %v477
      %v487 = vld [vmem:[#allocation2] sm:$0xff]
      %v488 = vld [vmem:[#allocation2 + $0x8] sm:$0xf]
      %v491 = vcombine.high %v487, %v487
      %492 = vrot.lane.b32.xlu0 %v487, 90
      %v493 = vpop.permute.xlu0 %492
      %494 = vrot.lane.b32.xlu0 %v491, 90
      %v495 = vpop.permute.xlu0 %494
      %496 = vrot.lane.b32.xlu0 %v488, 90
      %v497 = vpop.permute.xlu0 %496
      %vm498 = vcmask 736256
      %v499 = vsel %vm498, %v493, %v495
      %v500 = vsel %vm498, %v495, %v497
      %504 = vst [vmem:[#allocation7 + $0x60] sm:$0xf] %v499
      %505 = vst [vmem:[#allocation7 + $0x68] sm:$0xf] %v500
      %506 = vst.msk [vmem:[#allocation7 + $0x70] sm:$0xf] %vm340, %v497
      %v507 = vlaneseq
      %vm508 = vcmp.ge.s32.totalorder %v507, 0
      %vm509 = vcmp.lt.s32.totalorder %v507, 286
      %vm510 = vmand %vm508, %vm509
      %s511 = scalar_lea.vmem [#allocation7], 100
      %512 = vst.msk [vmem:[%s511] ss:$8 sm:$0x7] %vm510, 1.0
      %513 = vst.msk [vmem:[%s511] ss:$8 sm:$0x0] %vm510, 1.0
      %v514 = vld [vmem:[%s1] sm:$0xf]
      %v515 = vld [vmem:[#allocation7] sm:$0xff]
      %v516 = vld [vmem:[#allocation7 + $0x8] sm:$0xff]
      %v517 = vld [vmem:[#allocation7 + $0x10] sm:$0xff]
      %v518 = vld [vmem:[#allocation7 + $0x18] sm:$0xff]
      %v519 = vld [vmem:[#allocation7 + $0x20] sm:$0xff]
      %v520 = vld [vmem:[#allocation7 + $0x28] sm:$0xff]
      %v521 = vld [vmem:[#allocation7 + $0x30] sm:$0xff]
      %v522 = vld [vmem:[#allocation7 + $0x38] sm:$0xff]
      %v523 = vld [vmem:[#allocation7 + $0x40] sm:$0xff]
      %v524 = vld [vmem:[#allocation7 + $0x48] sm:$0xff]
      %v525 = vld [vmem:[#allocation7 + $0x50] sm:$0xff]
      %v526 = vld [vmem:[#allocation7 + $0x58] sm:$0xff]
      %v527 = vld [vmem:[#allocation7 + $0x60] sm:$0x1f]
      %v528 = vld [vmem:[#allocation7 + $0x68] sm:$0x1f]
      %v529 = vld [vmem:[#allocation7 + $0x70] sm:$0x1f]
      %vm530 = vcmask 302080
      %v532 = vsel %vm530, %v514, 0
      %vm534 = vcmask 1044480
      %v536 = vsel %vm534, %v527, 0
      %v539 = vsel %vm534, %v528, 0
      %v542 = vsel %vm534, %v529, 0
      %544 = vmatprep.subr.mxu0 %v516
      %545 = vmatpush1.msra.mxu0 %v515
      %546 = vmatprep.subr.mxu0 %v519
      %547 = vmatpush1.msra.mxu0 %v518
      %548 = vmatprep.subr.mxu0 %v522
      %549 = vmatpush1.msra.mxu0 %v521
      %550 = vmatprep.subr.mxu0 %v525
      %551 = vmatpush1.msra.mxu0 %v524
      %552 = vmatprep.subr.mxu0 %v539
      %553 = vmatpush1.msra.mxu0 %v536
      %554 = vmatprep.subr.mxu0 0.0
      %555 = vmatpush1.msra.mxu0 0.0
      %556 = vmatprep.subr.mxu0 0.0
      %557 = vmatpush1.msra.mxu0 0.0
      %558 = vmatprep.subr.mxu0 0.0
      %559 = vmatpush1.msra.mxu0 0.0
      %560 = vmatprep.subr.mxu0 0.0
      %561 = vmatpush1.msra.mxu0 0.0
      %562 = vmatprep.subr.mxu0 0.0
      %563 = vmatpush1.msra.mxu0 0.0
      %564 = vmatprep.subr.mxu0 0.0
      %565 = vmatpush1.msra.mxu0 0.0
      %566 = vmatprep.subr.mxu0 0.0
      %567 = vmatpush1.msra.mxu0 0.0
      %568 = vmatprep.subr.mxu0 0.0
      %569 = vmatpush1.msra.mxu0 0.0
      %570 = vmatprep.subr.mxu0 0.0
      %571 = vmatpush1.msra.mxu0 0.0
      %572 = vmatprep.subr.mxu0 0.0
      %573 = vmatpush1.msra.mxu0 0.0
      %574 = vmatprep.subr.mxu0 0.0
      %575 = vmatpush1.msra.mxu0 0.0
      %576 = vmatprep.subr.mxu0 0.0
      %577 = vmatpush1.msra.mxu0 0.0
      %578 = vmatprep.subr.mxu0 0.0
      %579 = vmatpush1.msra.mxu0 0.0
      %580 = vmatprep.subr.mxu0 0.0
      %581 = vmatpush1.msra.mxu0 0.0
      %582 = vmatprep.subr.mxu0 0.0
      %583 = vmatpush1.msra.mxu0 0.0
      %584 = vmatprep.subr.mxu0 0.0
      %585 = vmatpush1.msra.mxu0 0.0
      %586 = vmatprep.subr.mxu0 0.0
      %587 = vmatpush1.msra.mxu0 0.0
      %588 = vmatprep.subr.mxu0 0.0
      %589 = vmatpush1.msra.mxu0 0.0
      %590 = vmatprep.subr.mxu0 0.0
      %591 = vmatpush1.msra.mxu0 0.0
      %592 = vmatprep.subr.mxu0 0.0
      %593 = vmatpush1.msra.mxu0 0.0
      %594 = vmatprep.subr.mxu0 0.0
      %595 = vmatpush1.msra.mxu0 0.0
      %596 = vmatprep.subr.mxu0 0.0
      %597 = vmatpush1.msra.mxu0 0.0
      %598 = vmatprep.subr.mxu0 0.0
      %599 = vmatpush1.msra.mxu0 0.0
      %600 = vmatprep.subr.mxu0 0.0
      %601 = vmatpush1.msra.mxu0 0.0
      %602 = vmatprep.subr.mxu0 0.0
      %603 = vmatpush1.msra.mxu0 0.0
      %604 = vmatprep.subr.mxu0 0.0
      %605 = vmatpush1.msra.mxu0 0.0
      %606 = vmatprep.subr.mxu0 0.0
      %607 = vmatpush1.msra.mxu0 0.0
      %608 = vmatprep.mubr.f32.mxu0 0.0
      %609 = vmatmul.mubr.f32.gmra.mrb[0].mxu0 %v532
      %v610 = vpop.f32.mrb[0].mxu0
      %v611 = vadd.f32 0.0, %v610
      %v612 = vpop.f32.mrb[0].mxu0
      %v613 = vadd.f32 0.0, %v612
      %614 = vdwg.mxu0
      %615 = vmatprep.subr.mxu0 0.0
      %616 = vmatpush1.msra.mxu0 %v517
      %617 = vmatprep.subr.mxu0 0.0
      %618 = vmatpush1.msra.mxu0 %v520
      %619 = vmatprep.subr.mxu0 0.0
      %620 = vmatpush1.msra.mxu0 %v523
      %621 = vmatprep.subr.mxu0 0.0
      %622 = vmatpush1.msra.mxu0 %v526
      %623 = vmatprep.subr.mxu0 0.0
      %624 = vmatpush1.msra.mxu0 %v542
      %625 = vmatprep.subr.mxu0 0.0
      %626 = vmatpush1.msra.mxu0 0.0
      %627 = vmatprep.subr.mxu0 0.0
      %628 = vmatpush1.msra.mxu0 0.0
      %629 = vmatprep.subr.mxu0 0.0
      %630 = vmatpush1.msra.mxu0 0.0
      %631 = vmatprep.subr.mxu0 0.0
      %632 = vmatpush1.msra.mxu0 0.0
      %633 = vmatprep.subr.mxu0 0.0
      %634 = vmatpush1.msra.mxu0 0.0
      %635 = vmatprep.subr.mxu0 0.0
      %636 = vmatpush1.msra.mxu0 0.0
      %637 = vmatprep.subr.mxu0 0.0
      %638 = vmatpush1.msra.mxu0 0.0
      %639 = vmatprep.subr.mxu0 0.0
      %640 = vmatpush1.msra.mxu0 0.0
      %641 = vmatprep.subr.mxu0 0.0
      %642 = vmatpush1.msra.mxu0 0.0
      %643 = vmatprep.subr.mxu0 0.0
      %644 = vmatpush1.msra.mxu0 0.0
      %645 = vmatprep.subr.mxu0 0.0
      %646 = vmatpush1.msra.mxu0 0.0
      %647 = vmatprep.subr.mxu0 0.0
      %648 = vmatpush1.msra.mxu0 0.0
      %649 = vmatprep.subr.mxu0 0.0
      %650 = vmatpush1.msra.mxu0 0.0
      %651 = vmatprep.subr.mxu0 0.0
      %652 = vmatpush1.msra.mxu0 0.0
      %653 = vmatprep.subr.mxu0 0.0
      %654 = vmatpush1.msra.mxu0 0.0
      %655 = vmatprep.subr.mxu0 0.0
      %656 = vmatpush1.msra.mxu0 0.0
      %657 = vmatprep.subr.mxu0 0.0
      %658 = vmatpush1.msra.mxu0 0.0
      %659 = vmatprep.subr.mxu0 0.0
      %660 = vmatpush1.msra.mxu0 0.0
      %661 = vmatprep.subr.mxu0 0.0
      %662 = vmatpush1.msra.mxu0 0.0
      %663 = vmatprep.subr.mxu0 0.0
      %664 = vmatpush1.msra.mxu0 0.0
      %665 = vmatprep.subr.mxu0 0.0
      %666 = vmatpush1.msra.mxu0 0.0
      %667 = vmatprep.subr.mxu0 0.0
      %668 = vmatpush1.msra.mxu0 0.0
      %669 = vmatprep.subr.mxu0 0.0
      %670 = vmatpush1.msra.mxu0 0.0
      %671 = vmatprep.subr.mxu0 0.0
      %672 = vmatpush1.msra.mxu0 0.0
      %673 = vmatprep.subr.mxu0 0.0
      %674 = vmatpush1.msra.mxu0 0.0
      %675 = vmatprep.subr.mxu0 0.0
      %676 = vmatpush1.msra.mxu0 0.0
      %677 = vmatprep.subr.mxu0 0.0
      %678 = vmatpush1.msra.mxu0 0.0
      %679 = vmatprep.mubr.f32.mxu0 0.0
      %680 = vmatmul.mubr.f32.gmra.mrb[0].mxu0 %v532
      %v681 = vpop.f32.mrb[0].mxu0
      %v682 = vadd.f32 0.0, %v681
      %v683 = vpop.f32.mrb[0].mxu0
      %684 = vdwg.mxu0
      %vm685 = vcmp.ge.f32.partialorder %v611, 0.0
      %vm686 = vcmp.ge.f32.partialorder %v613, 0.0
      %vm687 = vcmp.ge.f32.partialorder %v682, 0.0
      %v688 = vmul.f32 %v611, 0.01
      %v689 = vmul.f32 %v613, 0.01
      %v690 = vmul.f32 %v682, 0.01
      %v691 = vsel %vm685, %v611, %v688
      %v692 = vsel %vm686, %v613, %v689
      %v693 = vsel %vm687, %v682, %v690
      %s694 = scalar_lea.vmem %s1, 600
      %v695 = vld [vmem:[%s694] ss:$8 sm:$0x7]
      %v697 = vlaneseq
      %v698 = vshrl.u32 %v697, 7
      %v699 = vsub.s32 0, %v698
      %v700 = vrot.slane %v695, %v699
      %v701 = vlaneseq
      %v702 = vshrl.u32 %v701, 7
      %v703 = vsub.s32 1, %v702
      %v704 = vrot.slane %v695, %v703
      %v705 = vlaneseq
      %v706 = vshrl.u32 %v705, 7
      %v707 = vsub.s32 2, %v706
      %v708 = vrot.slane %v695, %v707
      %v712 = vmul.f32 %v691, %v700
      %v713 = vmul.f32 %v692, %v704
      %v714 = vmul.f32 %v693, %v708
      %v718 = vcombine.low %v712, %v713
      %719 = vrot.lane.b32.xlu0 %v718, 19
      %v720 = vpop.permute.xlu0 %719
      %721 = vrot.lane.b32.xlu0 %v714, 19
      %v722 = vpop.permute.xlu0 %721
      %v723 = vrot.slane %v720, 4
      %vm724 = vcmask 154624
      %v725 = vsel %vm724, %v723, %v720
      %v726 = vsel %vm724, %v723, %v722
      %vm729 = vcmask 1043608
      %vm730 = vcmask 1047556
      %vm731 = vmor %vm730, %vm729
      %732 = vst.msk [vmem:[#allocation2] sm:$0xff] %vm731, %v725
      %vm733 = vcmask 396288
      %734 = vst.msk [vmem:[#allocation2 + $0x8] sm:$0xf] %vm733, %v726
      %v735 = vld [vmem:[#allocation2] sm:$0xff]
      %v736 = vld [vmem:[#allocation2 + $0x8] sm:$0xf]
      %v738 = vcombine.high %v735, %v735
      %740 = vst [vmem:[#allocation7] sm:$0xf] %v735
      %741 = vst [vmem:[#allocation7 + $0x8] sm:$0xf] %v738
      %742 = vst.msk [vmem:[#allocation7 + $0x10] sm:$0xf] %vm340, %v736
      %v743 = vld [vmem:[#allocation2] sm:$0xff]
      %v744 = vld [vmem:[#allocation2 + $0x8] sm:$0xf]
      %v747 = vcombine.low %v743, %v743
      %v748 = vcombine.low %v744, %v744
      %749 = vrot.lane.b32.xlu0 %v747, 127
      %v750 = vpop.permute.xlu0 %749
      %751 = vrot.lane.b32.xlu0 %v743, 127
      %v752 = vpop.permute.xlu0 %751
      %753 = vrot.lane.b32.xlu0 %v748, 127
      %v754 = vpop.permute.xlu0 %753
      %v755 = vsel %vm354, %v750, %v752
      %v756 = vsel %vm354, %v752, %v754
      %760 = vst [vmem:[#allocation7] sm:$0xf0] %v755
      %761 = vst [vmem:[#allocation7 + $0x8] sm:$0xf0] %v756
      %762 = vst.msk [vmem:[#allocation7 + $0x10] sm:$0xf0] %vm362, %v754
      %v763 = vld [vmem:[#allocation2] sm:$0xff]
      %v764 = vld [vmem:[#allocation2 + $0x8] sm:$0xf]
      %v767 = vcombine.high %v763, %v763
      %768 = vrot.lane.b32.xlu0 %v763, 126
      %v769 = vpop.permute.xlu0 %768
      %770 = vrot.lane.b32.xlu0 %v767, 126
      %v771 = vpop.permute.xlu0 %770
      %772 = vrot.lane.b32.xlu0 %v764, 126
      %v773 = vpop.permute.xlu0 %772
      %v774 = vsel %vm375, %v769, %v771
      %v775 = vsel %vm375, %v771, %v773
      %779 = vst [vmem:[#allocation7 + $0x18] sm:$0xf] %v774
      %780 = vst [vmem:[#allocation7 + $0x20] sm:$0xf] %v775
      %781 = vst.msk [vmem:[#allocation7 + $0x28] sm:$0xf] %vm340, %v773
      %v782 = vld [vmem:[#allocation2] sm:$0xff]
      %v783 = vld [vmem:[#allocation2 + $0x8] sm:$0xf]
      %v786 = vcombine.low %v782, %v782
      %v787 = vcombine.low %v783, %v783
      %788 = vrot.lane.b32.xlu0 %v786, 110
      %v789 = vpop.permute.xlu0 %788
      %790 = vrot.lane.b32.xlu0 %v782, 110
      %v791 = vpop.permute.xlu0 %790
      %792 = vrot.lane.b32.xlu0 %v787, 110
      %v793 = vpop.permute.xlu0 %792
      %v794 = vsel %vm396, %v789, %v791
      %v795 = vsel %vm396, %v791, %v793
      %799 = vst [vmem:[#allocation7 + $0x18] sm:$0xf0] %v794
      %800 = vst [vmem:[#allocation7 + $0x20] sm:$0xf0] %v795
      %801 = vst.msk [vmem:[#allocation7 + $0x28] sm:$0xf0] %vm362, %v793
      %v802 = vld [vmem:[#allocation2] sm:$0xff]
      %v803 = vld [vmem:[#allocation2 + $0x8] sm:$0xf]
      %v806 = vcombine.high %v802, %v802
      %807 = vrot.lane.b32.xlu0 %v802, 109
      %v808 = vpop.permute.xlu0 %807
      %809 = vrot.lane.b32.xlu0 %v806, 109
      %v810 = vpop.permute.xlu0 %809
      %811 = vrot.lane.b32.xlu0 %v803, 109
      %v812 = vpop.permute.xlu0 %811
      %v813 = vsel %vm416, %v808, %v810
      %v814 = vsel %vm416, %v810, %v812
      %818 = vst [vmem:[#allocation7 + $0x30] sm:$0xf] %v813
      %819 = vst [vmem:[#allocation7 + $0x38] sm:$0xf] %v814
      %820 = vst.msk [vmem:[#allocation7 + $0x40] sm:$0xf] %vm340, %v812
      %v821 = vld [vmem:[#allocation2] sm:$0xff]
      %v822 = vld [vmem:[#allocation2 + $0x8] sm:$0xf]
      %v825 = vcombine.low %v821, %v821
      %v826 = vcombine.low %v822, %v822
      %827 = vrot.lane.b32.xlu0 %v825, 108
      %v828 = vpop.permute.xlu0 %827
      %829 = vrot.lane.b32.xlu0 %v821, 108
      %v830 = vpop.permute.xlu0 %829
      %831 = vrot.lane.b32.xlu0 %v826, 108
      %v832 = vpop.permute.xlu0 %831
      %v833 = vsel %vm437, %v828, %v830
      %v834 = vsel %vm437, %v830, %v832
      %838 = vst [vmem:[#allocation7 + $0x30] sm:$0xf0] %v833
      %839 = vst [vmem:[#allocation7 + $0x38] sm:$0xf0] %v834
      %840 = vst.msk [vmem:[#allocation7 + $0x40] sm:$0xf0] %vm362, %v832
      %v841 = vld [vmem:[#allocation2] sm:$0xff]
      %v842 = vld [vmem:[#allocation2 + $0x8] sm:$0xf]
      %v845 = vcombine.high %v841, %v841
      %846 = vrot.lane.b32.xlu0 %v841, 92
      %v847 = vpop.permute.xlu0 %846
      %848 = vrot.lane.b32.xlu0 %v845, 92
      %v849 = vpop.permute.xlu0 %848
      %850 = vrot.lane.b32.xlu0 %v842, 92
      %v851 = vpop.permute.xlu0 %850
      %v852 = vsel %vm457, %v847, %v849
      %v853 = vsel %vm457, %v849, %v851
      %857 = vst [vmem:[#allocation7 + $0x48] sm:$0xf] %v852
      %858 = vst [vmem:[#allocation7 + $0x50] sm:$0xf] %v853
      %859 = vst.msk [vmem:[#allocation7 + $0x58] sm:$0xf] %vm340, %v851
      %v860 = vld [vmem:[#allocation2] sm:$0xff]
      %v861 = vld [vmem:[#allocation2 + $0x8] sm:$0xf]
      %v864 = vcombine.low %v860, %v860
      %v865 = vcombine.low %v861, %v861
      %866 = vrot.lane.b32.xlu0 %v864, 91
      %v867 = vpop.permute.xlu0 %866
      %868 = vrot.lane.b32.xlu0 %v860, 91
      %v869 = vpop.permute.xlu0 %868
      %870 = vrot.lane.b32.xlu0 %v865, 91
      %v871 = vpop.permute.xlu0 %870
      %v872 = vsel %vm478, %v867, %v869
      %v873 = vsel %vm478, %v869, %v871
      %877 = vst [vmem:[#allocation7 + $0x48] sm:$0xf0] %v872
      %878 = vst [vmem:[#allocation7 + $0x50] sm:$0xf0] %v873
      %879 = vst.msk [vmem:[#allocation7 + $0x58] sm:$0xf0] %vm362, %v871
      %v880 = vld [vmem:[#allocation2] sm:$0xff]
      %v881 = vld [vmem:[#allocation2 + $0x8] sm:$0xf]
      %v884 = vcombine.high %v880, %v880
      %885 = vrot.lane.b32.xlu0 %v880, 90
      %v886 = vpop.permute.xlu0 %885
      %887 = vrot.lane.b32.xlu0 %v884, 90
      %v888 = vpop.permute.xlu0 %887
      %889 = vrot.lane.b32.xlu0 %v881, 90
      %v890 = vpop.permute.xlu0 %889
      %v891 = vsel %vm498, %v886, %v888
      %v892 = vsel %vm498, %v888, %v890
      %896 = vst [vmem:[#allocation7 + $0x60] sm:$0xf] %v891
      %897 = vst [vmem:[#allocation7 + $0x68] sm:$0xf] %v892
      %898 = vst.msk [vmem:[#allocation7 + $0x70] sm:$0xf] %vm340, %v890
      %899 = vst.msk [vmem:[%s511] ss:$8 sm:$0x7] %vm510, 1.0
      %900 = vst.msk [vmem:[%s511] ss:$8 sm:$0x0] %vm510, 1.0
      %v901 = vld [vmem:[%s1 + $0x18] sm:$0xf]
      %v902 = vld [vmem:[#allocation7] sm:$0xff]
      %v903 = vld [vmem:[#allocation7 + $0x8] sm:$0xff]
      %v904 = vld [vmem:[#allocation7 + $0x10] sm:$0xff]
      %v905 = vld [vmem:[#allocation7 + $0x18] sm:$0xff]
      %v906 = vld [vmem:[#allocation7 + $0x20] sm:$0xff]
      %v907 = vld [vmem:[#allocation7 + $0x28] sm:$0xff]
      %v908 = vld [vmem:[#allocation7 + $0x30] sm:$0xff]
      %v909 = vld [vmem:[#allocation7 + $0x38] sm:$0xff]
      %v910 = vld [vmem:[#allocation7 + $0x40] sm:$0xff]
      %v911 = vld [vmem:[#allocation7 + $0x48] sm:$0xff]
      %v912 = vld [vmem:[#allocation7 + $0x50] sm:$0xff]
      %v913 = vld [vmem:[#allocation7 + $0x58] sm:$0xff]
      %v914 = vld [vmem:[#allocation7 + $0x60] sm:$0x1f]
      %v915 = vld [vmem:[#allocation7 + $0x68] sm:$0x1f]
      %v916 = vld [vmem:[#allocation7 + $0x70] sm:$0x1f]
      %v918 = vsel %vm530, %v901, 0
      %v921 = vsel %vm534, %v914, 0
      %v924 = vsel %vm534, %v915, 0
      %v927 = vsel %vm534, %v916, 0
      %929 = vmatprep.subr.mxu0 %v903
      %930 = vmatpush1.msra.mxu0 %v902
      %931 = vmatprep.subr.mxu0 %v906
      %932 = vmatpush1.msra.mxu0 %v905
      %933 = vmatprep.subr.mxu0 %v909
      %934 = vmatpush1.msra.mxu0 %v908
      %935 = vmatprep.subr.mxu0 %v912
      %936 = vmatpush1.msra.mxu0 %v911
      %937 = vmatprep.subr.mxu0 %v924
      %938 = vmatpush1.msra.mxu0 %v921
      %939 = vmatprep.subr.mxu0 0.0
      %940 = vmatpush1.msra.mxu0 0.0
      %941 = vmatprep.subr.mxu0 0.0
      %942 = vmatpush1.msra.mxu0 0.0
      %943 = vmatprep.subr.mxu0 0.0
      %944 = vmatpush1.msra.mxu0 0.0
      %945 = vmatprep.subr.mxu0 0.0
      %946 = vmatpush1.msra.mxu0 0.0
      %947 = vmatprep.subr.mxu0 0.0
      %948 = vmatpush1.msra.mxu0 0.0
      %949 = vmatprep.subr.mxu0 0.0
      %950 = vmatpush1.msra.mxu0 0.0
      %951 = vmatprep.subr.mxu0 0.0
      %952 = vmatpush1.msra.mxu0 0.0
      %953 = vmatprep.subr.mxu0 0.0
      %954 = vmatpush1.msra.mxu0 0.0
      %955 = vmatprep.subr.mxu0 0.0
      %956 = vmatpush1.msra.mxu0 0.0
      %957 = vmatprep.subr.mxu0 0.0
      %958 = vmatpush1.msra.mxu0 0.0
      %959 = vmatprep.subr.mxu0 0.0
      %960 = vmatpush1.msra.mxu0 0.0
      %961 = vmatprep.subr.mxu0 0.0
      %962 = vmatpush1.msra.mxu0 0.0
      %963 = vmatprep.subr.mxu0 0.0
      %964 = vmatpush1.msra.mxu0 0.0
      %965 = vmatprep.subr.mxu0 0.0
      %966 = vmatpush1.msra.mxu0 0.0
      %967 = vmatprep.subr.mxu0 0.0
      %968 = vmatpush1.msra.mxu0 0.0
      %969 = vmatprep.subr.mxu0 0.0
      %970 = vmatpush1.msra.mxu0 0.0
      %971 = vmatprep.subr.mxu0 0.0
      %972 = vmatpush1.msra.mxu0 0.0
      %973 = vmatprep.subr.mxu0 0.0
      %974 = vmatpush1.msra.mxu0 0.0
      %975 = vmatprep.subr.mxu0 0.0
      %976 = vmatpush1.msra.mxu0 0.0
      %977 = vmatprep.subr.mxu0 0.0
      %978 = vmatpush1.msra.mxu0 0.0
      %979 = vmatprep.subr.mxu0 0.0
      %980 = vmatpush1.msra.mxu0 0.0
      %981 = vmatprep.subr.mxu0 0.0
      %982 = vmatpush1.msra.mxu0 0.0
      %983 = vmatprep.subr.mxu0 0.0
      %984 = vmatpush1.msra.mxu0 0.0
      %985 = vmatprep.subr.mxu0 0.0
      %986 = vmatpush1.msra.mxu0 0.0
      %987 = vmatprep.subr.mxu0 0.0
      %988 = vmatpush1.msra.mxu0 0.0
      %989 = vmatprep.subr.mxu0 0.0
      %990 = vmatpush1.msra.mxu0 0.0
      %991 = vmatprep.subr.mxu0 0.0
      %992 = vmatpush1.msra.mxu0 0.0
      %993 = vmatprep.mubr.f32.mxu0 0.0
      %994 = vmatmul.mubr.f32.gmra.mrb[0].mxu0 %v918
      %v995 = vpop.f32.mrb[0].mxu0
      %v996 = vadd.f32 0.0, %v995
      %v997 = vpop.f32.mrb[0].mxu0
      %v998 = vadd.f32 0.0, %v997
      %999 = vdwg.mxu0
      %1000 = vmatprep.subr.mxu0 0.0
      %1001 = vmatpush1.msra.mxu0 %v904
      %1002 = vmatprep.subr.mxu0 0.0
      %1003 = vmatpush1.msra.mxu0 %v907
      %1004 = vmatprep.subr.mxu0 0.0
      %1005 = vmatpush1.msra.mxu0 %v910
      %1006 = vmatprep.subr.mxu0 0.0
      %1007 = vmatpush1.msra.mxu0 %v913
      %1008 = vmatprep.subr.mxu0 0.0
      %1009 = vmatpush1.msra.mxu0 %v927
      %1010 = vmatprep.subr.mxu0 0.0
      %1011 = vmatpush1.msra.mxu0 0.0
      %1012 = vmatprep.subr.mxu0 0.0
      %1013 = vmatpush1.msra.mxu0 0.0
      %1014 = vmatprep.subr.mxu0 0.0
      %1015 = vmatpush1.msra.mxu0 0.0
      %1016 = vmatprep.subr.mxu0 0.0
      %1017 = vmatpush1.msra.mxu0 0.0
      %1018 = vmatprep.subr.mxu0 0.0
      %1019 = vmatpush1.msra.mxu0 0.0
      %1020 = vmatprep.subr.mxu0 0.0
      %1021 = vmatpush1.msra.mxu0 0.0
      %1022 = vmatprep.subr.mxu0 0.0
      %1023 = vmatpush1.msra.mxu0 0.0
      %1024 = vmatprep.subr.mxu0 0.0
      %1025 = vmatpush1.msra.mxu0 0.0
      %1026 = vmatprep.subr.mxu0 0.0
      %1027 = vmatpush1.msra.mxu0 0.0
      %1028 = vmatprep.subr.mxu0 0.0
      %1029 = vmatpush1.msra.mxu0 0.0
      %1030 = vmatprep.subr.mxu0 0.0
      %1031 = vmatpush1.msra.mxu0 0.0
      %1032 = vmatprep.subr.mxu0 0.0
      %1033 = vmatpush1.msra.mxu0 0.0
      %1034 = vmatprep.subr.mxu0 0.0
      %1035 = vmatpush1.msra.mxu0 0.0
      %1036 = vmatprep.subr.mxu0 0.0
      %1037 = vmatpush1.msra.mxu0 0.0
      %1038 = vmatprep.subr.mxu0 0.0
      %1039 = vmatpush1.msra.mxu0 0.0
      %1040 = vmatprep.subr.mxu0 0.0
      %1041 = vmatpush1.msra.mxu0 0.0
      %1042 = vmatprep.subr.mxu0 0.0
      %1043 = vmatpush1.msra.mxu0 0.0
      %1044 = vmatprep.subr.mxu0 0.0
      %1045 = vmatpush1.msra.mxu0 0.0
      %1046 = vmatprep.subr.mxu0 0.0
      %1047 = vmatpush1.msra.mxu0 0.0
      %1048 = vmatprep.subr.mxu0 0.0
      %1049 = vmatpush1.msra.mxu0 0.0
      %1050 = vmatprep.subr.mxu0 0.0
      %1051 = vmatpush1.msra.mxu0 0.0
      %1052 = vmatprep.subr.mxu0 0.0
      %1053 = vmatpush1.msra.mxu0 0.0
      %1054 = vmatprep.subr.mxu0 0.0
      %1055 = vmatpush1.msra.mxu0 0.0
      %1056 = vmatprep.subr.mxu0 0.0
      %1057 = vmatpush1.msra.mxu0 0.0
      %1058 = vmatprep.subr.mxu0 0.0
      %1059 = vmatpush1.msra.mxu0 0.0
      %1060 = vmatprep.subr.mxu0 0.0
      %1061 = vmatpush1.msra.mxu0 0.0
      %1062 = vmatprep.subr.mxu0 0.0
      %1063 = vmatpush1.msra.mxu0 0.0
      %1064 = vmatprep.mubr.f32.mxu0 0.0
      %1065 = vmatmul.mubr.f32.gmra.mrb[0].mxu0 %v918
      %v1066 = vpop.f32.mrb[0].mxu0
      %v1067 = vadd.f32 0.0, %v1066
      %v1068 = vpop.f32.mrb[0].mxu0
      %1069 = vdwg.mxu0
      %v1072 = vcombine.low %v996, %v998
      %1074 = vst [vmem:[%s307] sm:$0xff] %v1072
      %1075 = vst.msk [vmem:[%s307 + $0x8] sm:$0xf] %vm340, %v1067
      %vm1076 = vcmask 150528
      %1077 = vst.msk [vmem:[#allocation3] sm:$0xf] %vm1076, 0.0
      %vm1078 = vcmask 552328
      %1079 = vst.msk [vmem:[#allocation3 + $0x8] sm:$0xf] %vm1078, 0.0
      %vm1080 = vcmp.ge.f32.partialorder %v996, 0.0
      %vm1081 = vcmp.ge.f32.partialorder %v998, 0.0
      %vm1082 = vcmp.ge.f32.partialorder %v1067, 0.0
      %v1083 = vmul.f32 %v996, 0.01
      %v1084 = vmul.f32 %v998, 0.01
      %v1085 = vmul.f32 %v1067, 0.01
      %v1086 = vsel %vm1080, %v996, %v1083
      %v1087 = vsel %vm1081, %v998, %v1084
      %v1088 = vsel %vm1082, %v1067, %v1085
      %v1089 = vld [vmem:[%s694] ss:$8 sm:$0x7]
      %v1091 = vlaneseq
      %v1092 = vshrl.u32 %v1091, 7
      %v1093 = vsub.s32 0, %v1092
      %v1094 = vrot.slane %v1089, %v1093
      %v1095 = vlaneseq
      %v1096 = vshrl.u32 %v1095, 7
      %v1097 = vsub.s32 1, %v1096
      %v1098 = vrot.slane %v1089, %v1097
      %v1099 = vlaneseq
      %v1100 = vshrl.u32 %v1099, 7
      %v1101 = vsub.s32 2, %v1100
      %v1102 = vrot.slane %v1089, %v1101
      %v1106 = vmul.f32 %v1086, %v1094
      %v1107 = vmul.f32 %v1087, %v1098
      %v1108 = vmul.f32 %v1088, %v1102
      %v1112 = vcombine.low %v1106, %v1107
      %1113 = vrot.lane.b32.xlu0 %v1112, 19
      %v1114 = vpop.permute.xlu0 %1113
      %1115 = vrot.lane.b32.xlu0 %v1108, 19
      %v1116 = vpop.permute.xlu0 %1115
      %v1117 = vrot.slane %v1114, 4
      %v1118 = vsel %vm724, %v1117, %v1114
      %v1119 = vsel %vm724, %v1117, %v1116
      %1122 = vst.msk [vmem:[#allocation3] sm:$0xff] %vm731, %v1118
      %1123 = vst.msk [vmem:[#allocation3 + $0x8] sm:$0xf] %vm733, %v1119
      %v1124 = vld [vmem:[#allocation3] sm:$0xff]
      %v1125 = vld [vmem:[#allocation3 + $0x8] sm:$0xf]
      %v1127 = vcombine.high %v1124, %v1124
      %1129 = vst [vmem:[#allocation7] sm:$0xf] %v1124
      %1130 = vst [vmem:[#allocation7 + $0x8] sm:$0xf] %v1127
      %1131 = vst.msk [vmem:[#allocation7 + $0x10] sm:$0xf] %vm340, %v1125
      %v1132 = vld [vmem:[#allocation3] sm:$0xff]
      %v1133 = vld [vmem:[#allocation3 + $0x8] sm:$0xf]
      %v1136 = vcombine.low %v1132, %v1132
      %v1137 = vcombine.low %v1133, %v1133
      %1138 = vrot.lane.b32.xlu0 %v1136, 127
      %v1139 = vpop.permute.xlu0 %1138
      %1140 = vrot.lane.b32.xlu0 %v1132, 127
      %v1141 = vpop.permute.xlu0 %1140
      %1142 = vrot.lane.b32.xlu0 %v1137, 127
      %v1143 = vpop.permute.xlu0 %1142
      %v1144 = vsel %vm354, %v1139, %v1141
      %v1145 = vsel %vm354, %v1141, %v1143
      %1149 = vst [vmem:[#allocation7] sm:$0xf0] %v1144
      %1150 = vst [vmem:[#allocation7 + $0x8] sm:$0xf0] %v1145
      %1151 = vst.msk [vmem:[#allocation7 + $0x10] sm:$0xf0] %vm362, %v1143
      %v1152 = vld [vmem:[#allocation3] sm:$0xff]
      %v1153 = vld [vmem:[#allocation3 + $0x8] sm:$0xf]
      %v1156 = vcombine.high %v1152, %v1152
      %1157 = vrot.lane.b32.xlu0 %v1152, 126
      %v1158 = vpop.permute.xlu0 %1157
      %1159 = vrot.lane.b32.xlu0 %v1156, 126
      %v1160 = vpop.permute.xlu0 %1159
      %1161 = vrot.lane.b32.xlu0 %v1153, 126
      %v1162 = vpop.permute.xlu0 %1161
      %v1163 = vsel %vm375, %v1158, %v1160
      %v1164 = vsel %vm375, %v1160, %v1162
      %1168 = vst [vmem:[#allocation7 + $0x18] sm:$0xf] %v1163
      %1169 = vst [vmem:[#allocation7 + $0x20] sm:$0xf] %v1164
      %1170 = vst.msk [vmem:[#allocation7 + $0x28] sm:$0xf] %vm340, %v1162
      %v1171 = vld [vmem:[#allocation3] sm:$0xff]
      %v1172 = vld [vmem:[#allocation3 + $0x8] sm:$0xf]
      %v1175 = vcombine.low %v1171, %v1171
      %v1176 = vcombine.low %v1172, %v1172
      %1177 = vrot.lane.b32.xlu0 %v1175, 110
      %v1178 = vpop.permute.xlu0 %1177
      %1179 = vrot.lane.b32.xlu0 %v1171, 110
      %v1180 = vpop.permute.xlu0 %1179
      %1181 = vrot.lane.b32.xlu0 %v1176, 110
      %v1182 = vpop.permute.xlu0 %1181
      %v1183 = vsel %vm396, %v1178, %v1180
      %v1184 = vsel %vm396, %v1180, %v1182
      %1188 = vst [vmem:[#allocation7 + $0x18] sm:$0xf0] %v1183
      %1189 = vst [vmem:[#allocation7 + $0x20] sm:$0xf0] %v1184
      %1190 = vst.msk [vmem:[#allocation7 + $0x28] sm:$0xf0] %vm362, %v1182
      %v1191 = vld [vmem:[#allocation3] sm:$0xff]
      %v1192 = vld [vmem:[#allocation3 + $0x8] sm:$0xf]
      %v1195 = vcombine.high %v1191, %v1191
      %1196 = vrot.lane.b32.xlu0 %v1191, 109
      %v1197 = vpop.permute.xlu0 %1196
      %1198 = vrot.lane.b32.xlu0 %v1195, 109
      %v1199 = vpop.permute.xlu0 %1198
      %1200 = vrot.lane.b32.xlu0 %v1192, 109
      %v1201 = vpop.permute.xlu0 %1200
      %v1202 = vsel %vm416, %v1197, %v1199
      %v1203 = vsel %vm416, %v1199, %v1201
      %1207 = vst [vmem:[#allocation7 + $0x30] sm:$0xf] %v1202
      %1208 = vst [vmem:[#allocation7 + $0x38] sm:$0xf] %v1203
      %1209 = vst.msk [vmem:[#allocation7 + $0x40] sm:$0xf] %vm340, %v1201
      %v1210 = vld [vmem:[#allocation3] sm:$0xff]
      %v1211 = vld [vmem:[#allocation3 + $0x8] sm:$0xf]
      %v1214 = vcombine.low %v1210, %v1210
      %v1215 = vcombine.low %v1211, %v1211
      %1216 = vrot.lane.b32.xlu0 %v1214, 108
      %v1217 = vpop.permute.xlu0 %1216
      %1218 = vrot.lane.b32.xlu0 %v1210, 108
      %v1219 = vpop.permute.xlu0 %1218
      %1220 = vrot.lane.b32.xlu0 %v1215, 108
      %v1221 = vpop.permute.xlu0 %1220
      %v1222 = vsel %vm437, %v1217, %v1219
      %v1223 = vsel %vm437, %v1219, %v1221
      %1227 = vst [vmem:[#allocation7 + $0x30] sm:$0xf0] %v1222
      %1228 = vst [vmem:[#allocation7 + $0x38] sm:$0xf0] %v1223
      %1229 = vst.msk [vmem:[#allocation7 + $0x40] sm:$0xf0] %vm362, %v1221
      %v1230 = vld [vmem:[#allocation3] sm:$0xff]
      %v1231 = vld [vmem:[#allocation3 + $0x8] sm:$0xf]
      %v1234 = vcombine.high %v1230, %v1230
      %1235 = vrot.lane.b32.xlu0 %v1230, 92
      %v1236 = vpop.permute.xlu0 %1235
      %1237 = vrot.lane.b32.xlu0 %v1234, 92
      %v1238 = vpop.permute.xlu0 %1237
      %1239 = vrot.lane.b32.xlu0 %v1231, 92
      %v1240 = vpop.permute.xlu0 %1239
      %v1241 = vsel %vm457, %v1236, %v1238
      %v1242 = vsel %vm457, %v1238, %v1240
      %1246 = vst [vmem:[#allocation7 + $0x48] sm:$0xf] %v1241
      %1247 = vst [vmem:[#allocation7 + $0x50] sm:$0xf] %v1242
      %1248 = vst.msk [vmem:[#allocation7 + $0x58] sm:$0xf] %vm340, %v1240
      %v1249 = vld [vmem:[#allocation3] sm:$0xff]
      %v1250 = vld [vmem:[#allocation3 + $0x8] sm:$0xf]
      %v1253 = vcombine.low %v1249, %v1249
      %v1254 = vcombine.low %v1250, %v1250
      %1255 = vrot.lane.b32.xlu0 %v1253, 91
      %v1256 = vpop.permute.xlu0 %1255
      %1257 = vrot.lane.b32.xlu0 %v1249, 91
      %v1258 = vpop.permute.xlu0 %1257
      %1259 = vrot.lane.b32.xlu0 %v1254, 91
      %v1260 = vpop.permute.xlu0 %1259
      %v1261 = vsel %vm478, %v1256, %v1258
      %v1262 = vsel %vm478, %v1258, %v1260
      %1266 = vst [vmem:[#allocation7 + $0x48] sm:$0xf0] %v1261
      %1267 = vst [vmem:[#allocation7 + $0x50] sm:$0xf0] %v1262
      %1268 = vst.msk [vmem:[#allocation7 + $0x58] sm:$0xf0] %vm362, %v1260
      %v1269 = vld [vmem:[#allocation3] sm:$0xff]
      %v1270 = vld [vmem:[#allocation3 + $0x8] sm:$0xf]
      %v1273 = vcombine.high %v1269, %v1269
      %1274 = vrot.lane.b32.xlu0 %v1269, 90
      %v1275 = vpop.permute.xlu0 %1274
      %1276 = vrot.lane.b32.xlu0 %v1273, 90
      %v1277 = vpop.permute.xlu0 %1276
      %1278 = vrot.lane.b32.xlu0 %v1270, 90
      %v1279 = vpop.permute.xlu0 %1278
      %v1280 = vsel %vm498, %v1275, %v1277
      %v1281 = vsel %vm498, %v1277, %v1279
      %1285 = vst [vmem:[#allocation7 + $0x60] sm:$0xf] %v1280
      %1286 = vst [vmem:[#allocation7 + $0x68] sm:$0xf] %v1281
      %1287 = vst.msk [vmem:[#allocation7 + $0x70] sm:$0xf] %vm340, %v1279
      %1288 = vst.msk [vmem:[%s511] ss:$8 sm:$0x7] %vm510, 1.0
      %1289 = vst.msk [vmem:[%s511] ss:$8 sm:$0x0] %vm510, 1.0
      %v1290 = vld [vmem:[%s1 + $0x30] sm:$0xf]
      %v1291 = vld [vmem:[#allocation7] sm:$0xff]
      %v1292 = vld [vmem:[#allocation7 + $0x8] sm:$0xff]
      %v1293 = vld [vmem:[#allocation7 + $0x10] sm:$0xff]
      %v1294 = vld [vmem:[#allocation7 + $0x18] sm:$0xff]
      %v1295 = vld [vmem:[#allocation7 + $0x20] sm:$0xff]
      %v1296 = vld [vmem:[#allocation7 + $0x28] sm:$0xff]
      %v1297 = vld [vmem:[#allocation7 + $0x30] sm:$0xff]
      %v1298 = vld [vmem:[#allocation7 + $0x38] sm:$0xff]
      %v1299 = vld [vmem:[#allocation7 + $0x40] sm:$0xff]
      %v1300 = vld [vmem:[#allocation7 + $0x48] sm:$0xff]
      %v1301 = vld [vmem:[#allocation7 + $0x50] sm:$0xff]
      %v1302 = vld [vmem:[#allocation7 + $0x58] sm:$0xff]
      %v1303 = vld [vmem:[#allocation7 + $0x60] sm:$0x1f]
      %v1304 = vld [vmem:[#allocation7 + $0x68] sm:$0x1f]
      %v1305 = vld [vmem:[#allocation7 + $0x70] sm:$0x1f]
      %v1307 = vsel %vm530, %v1290, 0
      %v1310 = vsel %vm534, %v1303, 0
      %v1313 = vsel %vm534, %v1304, 0
      %v1316 = vsel %vm534, %v1305, 0
      %1318 = vmatprep.subr.mxu0 %v1292
      %1319 = vmatpush1.msra.mxu0 %v1291
      %1320 = vmatprep.subr.mxu0 %v1295
      %1321 = vmatpush1.msra.mxu0 %v1294
      %1322 = vmatprep.subr.mxu0 %v1298
      %1323 = vmatpush1.msra.mxu0 %v1297
      %1324 = vmatprep.subr.mxu0 %v1301
      %1325 = vmatpush1.msra.mxu0 %v1300
      %1326 = vmatprep.subr.mxu0 %v1313
      %1327 = vmatpush1.msra.mxu0 %v1310
      %1328 = vmatprep.subr.mxu0 0.0
      %1329 = vmatpush1.msra.mxu0 0.0
      %1330 = vmatprep.subr.mxu0 0.0
      %1331 = vmatpush1.msra.mxu0 0.0
      %1332 = vmatprep.subr.mxu0 0.0
      %1333 = vmatpush1.msra.mxu0 0.0
      %1334 = vmatprep.subr.mxu0 0.0
      %1335 = vmatpush1.msra.mxu0 0.0
      %1336 = vmatprep.subr.mxu0 0.0
      %1337 = vmatpush1.msra.mxu0 0.0
      %1338 = vmatprep.subr.mxu0 0.0
      %1339 = vmatpush1.msra.mxu0 0.0
      %1340 = vmatprep.subr.mxu0 0.0
      %1341 = vmatpush1.msra.mxu0 0.0
      %1342 = vmatprep.subr.mxu0 0.0
      %1343 = vmatpush1.msra.mxu0 0.0
      %1344 = vmatprep.subr.mxu0 0.0
      %1345 = vmatpush1.msra.mxu0 0.0
      %1346 = vmatprep.subr.mxu0 0.0
      %1347 = vmatpush1.msra.mxu0 0.0
      %1348 = vmatprep.subr.mxu0 0.0
      %1349 = vmatpush1.msra.mxu0 0.0
      %1350 = vmatprep.subr.mxu0 0.0
      %1351 = vmatpush1.msra.mxu0 0.0
      %1352 = vmatprep.subr.mxu0 0.0
      %1353 = vmatpush1.msra.mxu0 0.0
      %1354 = vmatprep.subr.mxu0 0.0
      %1355 = vmatpush1.msra.mxu0 0.0
      %1356 = vmatprep.subr.mxu0 0.0
      %1357 = vmatpush1.msra.mxu0 0.0
      %1358 = vmatprep.subr.mxu0 0.0
      %1359 = vmatpush1.msra.mxu0 0.0
      %1360 = vmatprep.subr.mxu0 0.0
      %1361 = vmatpush1.msra.mxu0 0.0
      %1362 = vmatprep.subr.mxu0 0.0
      %1363 = vmatpush1.msra.mxu0 0.0
      %1364 = vmatprep.subr.mxu0 0.0
      %1365 = vmatpush1.msra.mxu0 0.0
      %1366 = vmatprep.subr.mxu0 0.0
      %1367 = vmatpush1.msra.mxu0 0.0
      %1368 = vmatprep.subr.mxu0 0.0
      %1369 = vmatpush1.msra.mxu0 0.0
      %1370 = vmatprep.subr.mxu0 0.0
      %1371 = vmatpush1.msra.mxu0 0.0
      %1372 = vmatprep.subr.mxu0 0.0
      %1373 = vmatpush1.msra.mxu0 0.0
      %1374 = vmatprep.subr.mxu0 0.0
      %1375 = vmatpush1.msra.mxu0 0.0
      %1376 = vmatprep.subr.mxu0 0.0
      %1377 = vmatpush1.msra.mxu0 0.0
      %1378 = vmatprep.subr.mxu0 0.0
      %1379 = vmatpush1.msra.mxu0 0.0
      %1380 = vmatprep.subr.mxu0 0.0
      %1381 = vmatpush1.msra.mxu0 0.0
      %1382 = vmatprep.mubr.f32.mxu0 0.0
      %1383 = vmatmul.mubr.f32.gmra.mrb[0].mxu0 %v1307
      %v1384 = vpop.f32.mrb[0].mxu0
      %v1385 = vadd.f32 0.0, %v1384
      %v1386 = vpop.f32.mrb[0].mxu0
      %v1387 = vadd.f32 0.0, %v1386
      %1388 = vdwg.mxu0
      %1389 = vmatprep.subr.mxu0 0.0
      %1390 = vmatpush1.msra.mxu0 %v1293
      %1391 = vmatprep.subr.mxu0 0.0
      %1392 = vmatpush1.msra.mxu0 %v1296
      %1393 = vmatprep.subr.mxu0 0.0
      %1394 = vmatpush1.msra.mxu0 %v1299
      %1395 = vmatprep.subr.mxu0 0.0
      %1396 = vmatpush1.msra.mxu0 %v1302
      %1397 = vmatprep.subr.mxu0 0.0
      %1398 = vmatpush1.msra.mxu0 %v1316
      %1399 = vmatprep.subr.mxu0 0.0
      %1400 = vmatpush1.msra.mxu0 0.0
      %1401 = vmatprep.subr.mxu0 0.0
      %1402 = vmatpush1.msra.mxu0 0.0
      %1403 = vmatprep.subr.mxu0 0.0
      %1404 = vmatpush1.msra.mxu0 0.0
      %1405 = vmatprep.subr.mxu0 0.0
      %1406 = vmatpush1.msra.mxu0 0.0
      %1407 = vmatprep.subr.mxu0 0.0
      %1408 = vmatpush1.msra.mxu0 0.0
      %1409 = vmatprep.subr.mxu0 0.0
      %1410 = vmatpush1.msra.mxu0 0.0
      %1411 = vmatprep.subr.mxu0 0.0
      %1412 = vmatpush1.msra.mxu0 0.0
      %1413 = vmatprep.subr.mxu0 0.0
      %1414 = vmatpush1.msra.mxu0 0.0
      %1415 = vmatprep.subr.mxu0 0.0
      %1416 = vmatpush1.msra.mxu0 0.0
      %1417 = vmatprep.subr.mxu0 0.0
      %1418 = vmatpush1.msra.mxu0 0.0
      %1419 = vmatprep.subr.mxu0 0.0
      %1420 = vmatpush1.msra.mxu0 0.0
      %1421 = vmatprep.subr.mxu0 0.0
      %1422 = vmatpush1.msra.mxu0 0.0
      %1423 = vmatprep.subr.mxu0 0.0
      %1424 = vmatpush1.msra.mxu0 0.0
      %1425 = vmatprep.subr.mxu0 0.0
      %1426 = vmatpush1.msra.mxu0 0.0
      %1427 = vmatprep.subr.mxu0 0.0
      %1428 = vmatpush1.msra.mxu0 0.0
      %1429 = vmatprep.subr.mxu0 0.0
      %1430 = vmatpush1.msra.mxu0 0.0
      %1431 = vmatprep.subr.mxu0 0.0
      %1432 = vmatpush1.msra.mxu0 0.0
      %1433 = vmatprep.subr.mxu0 0.0
      %1434 = vmatpush1.msra.mxu0 0.0
      %1435 = vmatprep.subr.mxu0 0.0
      %1436 = vmatpush1.msra.mxu0 0.0
      %1437 = vmatprep.subr.mxu0 0.0
      %1438 = vmatpush1.msra.mxu0 0.0
      %1439 = vmatprep.subr.mxu0 0.0
      %1440 = vmatpush1.msra.mxu0 0.0
      %1441 = vmatprep.subr.mxu0 0.0
      %1442 = vmatpush1.msra.mxu0 0.0
      %1443 = vmatprep.subr.mxu0 0.0
      %1444 = vmatpush1.msra.mxu0 0.0
      %1445 = vmatprep.subr.mxu0 0.0
      %1446 = vmatpush1.msra.mxu0 0.0
      %1447 = vmatprep.subr.mxu0 0.0
      %1448 = vmatpush1.msra.mxu0 0.0
      %1449 = vmatprep.subr.mxu0 0.0
      %1450 = vmatpush1.msra.mxu0 0.0
      %1451 = vmatprep.subr.mxu0 0.0
      %1452 = vmatpush1.msra.mxu0 0.0
      %1453 = vmatprep.mubr.f32.mxu0 0.0
      %1454 = vmatmul.mubr.f32.gmra.mrb[0].mxu0 %v1307
      %v1455 = vpop.f32.mrb[0].mxu0
      %v1456 = vadd.f32 0.0, %v1455
      %v1457 = vpop.f32.mrb[0].mxu0
      %1458 = vdwg.mxu0
      %vm1459 = vcmp.ge.f32.partialorder %v1385, 0.0
      %vm1460 = vcmp.ge.f32.partialorder %v1387, 0.0
      %vm1461 = vcmp.ge.f32.partialorder %v1456, 0.0
      %v1462 = vmul.f32 %v1385, 0.01
      %v1463 = vmul.f32 %v1387, 0.01
      %v1464 = vmul.f32 %v1456, 0.01
      %v1465 = vsel %vm1459, %v1385, %v1462
      %v1466 = vsel %vm1460, %v1387, %v1463
      %v1467 = vsel %vm1461, %v1456, %v1464
      %v1468 = vld [vmem:[%s694] ss:$8 sm:$0x7]
      %v1470 = vlaneseq
      %v1471 = vshrl.u32 %v1470, 7
      %v1472 = vsub.s32 0, %v1471
      %v1473 = vrot.slane %v1468, %v1472
      %v1474 = vlaneseq
      %v1475 = vshrl.u32 %v1474, 7
      %v1476 = vsub.s32 1, %v1475
      %v1477 = vrot.slane %v1468, %v1476
      %v1478 = vlaneseq
      %v1479 = vshrl.u32 %v1478, 7
      %v1480 = vsub.s32 2, %v1479
      %v1481 = vrot.slane %v1468, %v1480
      %v1485 = vmul.f32 %v1465, %v1473
      %v1486 = vmul.f32 %v1466, %v1477
      %v1487 = vmul.f32 %v1467, %v1481
      %v1491 = vcombine.low %v1485, %v1486
      %1492 = vrot.lane.b32.xlu0 %v1491, 19
      %v1493 = vpop.permute.xlu0 %1492
      %1494 = vrot.lane.b32.xlu0 %v1487, 19
      %v1495 = vpop.permute.xlu0 %1494
      %v1496 = vrot.slane %v1493, 4
      %v1497 = vsel %vm724, %v1496, %v1493
      %v1498 = vsel %vm724, %v1496, %v1495
      %1501 = vst.msk [vmem:[#allocation3] sm:$0xff] %vm731, %v1497
      %1502 = vst.msk [vmem:[#allocation3 + $0x8] sm:$0xf] %vm733, %v1498
      %v1503 = vld [vmem:[#allocation3] sm:$0xff]
      %v1504 = vld [vmem:[#allocation3 + $0x8] sm:$0xf]
      %v1506 = vcombine.high %v1503, %v1503
      %1508 = vst [vmem:[#allocation7] sm:$0xf] %v1503
      %1509 = vst [vmem:[#allocation7 + $0x8] sm:$0xf] %v1506
      %1510 = vst.msk [vmem:[#allocation7 + $0x10] sm:$0xf] %vm340, %v1504
      %v1511 = vld [vmem:[#allocation3] sm:$0xff]
      %v1512 = vld [vmem:[#allocation3 + $0x8] sm:$0xf]
      %v1515 = vcombine.low %v1511, %v1511
      %v1516 = vcombine.low %v1512, %v1512
      %1517 = vrot.lane.b32.xlu0 %v1515, 127
      %v1518 = vpop.permute.xlu0 %1517
      %1519 = vrot.lane.b32.xlu0 %v1511, 127
      %v1520 = vpop.permute.xlu0 %1519
      %1521 = vrot.lane.b32.xlu0 %v1516, 127
      %v1522 = vpop.permute.xlu0 %1521
      %v1523 = vsel %vm354, %v1518, %v1520
      %v1524 = vsel %vm354, %v1520, %v1522
      %1528 = vst [vmem:[#allocation7] sm:$0xf0] %v1523
      %1529 = vst [vmem:[#allocation7 + $0x8] sm:$0xf0] %v1524
      %1530 = vst.msk [vmem:[#allocation7 + $0x10] sm:$0xf0] %vm362, %v1522
      %v1531 = vld [vmem:[#allocation3] sm:$0xff]
      %v1532 = vld [vmem:[#allocation3 + $0x8] sm:$0xf]
      %v1535 = vcombine.high %v1531, %v1531
      %1536 = vrot.lane.b32.xlu0 %v1531, 126
      %v1537 = vpop.permute.xlu0 %1536
      %1538 = vrot.lane.b32.xlu0 %v1535, 126
      %v1539 = vpop.permute.xlu0 %1538
      %1540 = vrot.lane.b32.xlu0 %v1532, 126
      %v1541 = vpop.permute.xlu0 %1540
      %v1542 = vsel %vm375, %v1537, %v1539
      %v1543 = vsel %vm375, %v1539, %v1541
      %1547 = vst [vmem:[#allocation7 + $0x18] sm:$0xf] %v1542
      %1548 = vst [vmem:[#allocation7 + $0x20] sm:$0xf] %v1543
      %1549 = vst.msk [vmem:[#allocation7 + $0x28] sm:$0xf] %vm340, %v1541
      %v1550 = vld [vmem:[#allocation3] sm:$0xff]
      %v1551 = vld [vmem:[#allocation3 + $0x8] sm:$0xf]
      %v1554 = vcombine.low %v1550, %v1550
      %v1555 = vcombine.low %v1551, %v1551
      %1556 = vrot.lane.b32.xlu0 %v1554, 110
      %v1557 = vpop.permute.xlu0 %1556
      %1558 = vrot.lane.b32.xlu0 %v1550, 110
      %v1559 = vpop.permute.xlu0 %1558
      %1560 = vrot.lane.b32.xlu0 %v1555, 110
      %v1561 = vpop.permute.xlu0 %1560
      %v1562 = vsel %vm396, %v1557, %v1559
      %v1563 = vsel %vm396, %v1559, %v1561
      %1567 = vst [vmem:[#allocation7 + $0x18] sm:$0xf0] %v1562
      %1568 = vst [vmem:[#allocation7 + $0x20] sm:$0xf0] %v1563
      %1569 = vst.msk [vmem:[#allocation7 + $0x28] sm:$0xf0] %vm362, %v1561
      %v1570 = vld [vmem:[#allocation3] sm:$0xff]
      %v1571 = vld [vmem:[#allocation3 + $0x8] sm:$0xf]
      %v1574 = vcombine.high %v1570, %v1570
      %1575 = vrot.lane.b32.xlu0 %v1570, 109
      %v1576 = vpop.permute.xlu0 %1575
      %1577 = vrot.lane.b32.xlu0 %v1574, 109
      %v1578 = vpop.permute.xlu0 %1577
      %1579 = vrot.lane.b32.xlu0 %v1571, 109
      %v1580 = vpop.permute.xlu0 %1579
      %v1581 = vsel %vm416, %v1576, %v1578
      %v1582 = vsel %vm416, %v1578, %v1580
      %1586 = vst [vmem:[#allocation7 + $0x30] sm:$0xf] %v1581
      %1587 = vst [vmem:[#allocation7 + $0x38] sm:$0xf] %v1582
      %1588 = vst.msk [vmem:[#allocation7 + $0x40] sm:$0xf] %vm340, %v1580
      %v1589 = vld [vmem:[#allocation3] sm:$0xff]
      %v1590 = vld [vmem:[#allocation3 + $0x8] sm:$0xf]
      %v1593 = vcombine.low %v1589, %v1589
      %v1594 = vcombine.low %v1590, %v1590
      %1595 = vrot.lane.b32.xlu0 %v1593, 108
      %v1596 = vpop.permute.xlu0 %1595
      %1597 = vrot.lane.b32.xlu0 %v1589, 108
      %v1598 = vpop.permute.xlu0 %1597
      %1599 = vrot.lane.b32.xlu0 %v1594, 108
      %v1600 = vpop.permute.xlu0 %1599
      %v1601 = vsel %vm437, %v1596, %v1598
      %v1602 = vsel %vm437, %v1598, %v1600
      %1606 = vst [vmem:[#allocation7 + $0x30] sm:$0xf0] %v1601
      %1607 = vst [vmem:[#allocation7 + $0x38] sm:$0xf0] %v1602
      %1608 = vst.msk [vmem:[#allocation7 + $0x40] sm:$0xf0] %vm362, %v1600
      %v1609 = vld [vmem:[#allocation3] sm:$0xff]
      %v1610 = vld [vmem:[#allocation3 + $0x8] sm:$0xf]
      %v1613 = vcombine.high %v1609, %v1609
      %1614 = vrot.lane.b32.xlu0 %v1609, 92
      %v1615 = vpop.permute.xlu0 %1614
      %1616 = vrot.lane.b32.xlu0 %v1613, 92
      %v1617 = vpop.permute.xlu0 %1616
      %1618 = vrot.lane.b32.xlu0 %v1610, 92
      %v1619 = vpop.permute.xlu0 %1618
      %v1620 = vsel %vm457, %v1615, %v1617
      %v1621 = vsel %vm457, %v1617, %v1619
      %1625 = vst [vmem:[#allocation7 + $0x48] sm:$0xf] %v1620
      %1626 = vst [vmem:[#allocation7 + $0x50] sm:$0xf] %v1621
      %1627 = vst.msk [vmem:[#allocation7 + $0x58] sm:$0xf] %vm340, %v1619
      %v1628 = vld [vmem:[#allocation3] sm:$0xff]
      %v1629 = vld [vmem:[#allocation3 + $0x8] sm:$0xf]
      %v1632 = vcombine.low %v1628, %v1628
      %v1633 = vcombine.low %v1629, %v1629
      %1634 = vrot.lane.b32.xlu0 %v1632, 91
      %v1635 = vpop.permute.xlu0 %1634
      %1636 = vrot.lane.b32.xlu0 %v1628, 91
      %v1637 = vpop.permute.xlu0 %1636
      %1638 = vrot.lane.b32.xlu0 %v1633, 91
      %v1639 = vpop.permute.xlu0 %1638
      %v1640 = vsel %vm478, %v1635, %v1637
      %v1641 = vsel %vm478, %v1637, %v1639
      %1645 = vst [vmem:[#allocation7 + $0x48] sm:$0xf0] %v1640
      %1646 = vst [vmem:[#allocation7 + $0x50] sm:$0xf0] %v1641
      %1647 = vst.msk [vmem:[#allocation7 + $0x58] sm:$0xf0] %vm362, %v1639
      %v1648 = vld [vmem:[#allocation3] sm:$0xff]
      %v1649 = vld [vmem:[#allocation3 + $0x8] sm:$0xf]
      %v1652 = vcombine.high %v1648, %v1648
      %1653 = vrot.lane.b32.xlu0 %v1648, 90
      %v1654 = vpop.permute.xlu0 %1653
      %1655 = vrot.lane.b32.xlu0 %v1652, 90
      %v1656 = vpop.permute.xlu0 %1655
      %1657 = vrot.lane.b32.xlu0 %v1649, 90
      %v1658 = vpop.permute.xlu0 %1657
      %v1659 = vsel %vm498, %v1654, %v1656
      %v1660 = vsel %vm498, %v1656, %v1658
      %1664 = vst [vmem:[#allocation7 + $0x60] sm:$0xf] %v1659
      %1665 = vst [vmem:[#allocation7 + $0x68] sm:$0xf] %v1660
      %1666 = vst.msk [vmem:[#allocation7 + $0x70] sm:$0xf] %vm340, %v1658
      %1667 = vst.msk [vmem:[%s511] ss:$8 sm:$0x7] %vm510, 1.0
      %1668 = vst.msk [vmem:[%s511] ss:$8 sm:$0x0] %vm510, 1.0
      %v1669 = vld [vmem:[%s1 + $0x48] sm:$0xff]
      %v1670 = vld [vmem:[#allocation7] sm:$0xff]
      %v1671 = vld [vmem:[#allocation7 + $0x8] sm:$0xff]
      %v1672 = vld [vmem:[#allocation7 + $0x10] sm:$0xff]
      %v1673 = vld [vmem:[#allocation7 + $0x18] sm:$0xff]
      %v1674 = vld [vmem:[#allocation7 + $0x20] sm:$0xff]
      %v1675 = vld [vmem:[#allocation7 + $0x28] sm:$0xff]
      %v1676 = vld [vmem:[#allocation7 + $0x30] sm:$0xff]
      %v1677 = vld [vmem:[#allocation7 + $0x38] sm:$0xff]
      %v1678 = vld [vmem:[#allocation7 + $0x40] sm:$0xff]
      %v1679 = vld [vmem:[#allocation7 + $0x48] sm:$0xff]
      %v1680 = vld [vmem:[#allocation7 + $0x50] sm:$0xff]
      %v1681 = vld [vmem:[#allocation7 + $0x58] sm:$0xff]
      %v1682 = vld [vmem:[#allocation7 + $0x60] sm:$0x1f]
      %v1683 = vld [vmem:[#allocation7 + $0x68] sm:$0x1f]
      %v1684 = vld [vmem:[#allocation7 + $0x70] sm:$0x1f]
      %v1686 = vsel %vm530, %v1669, 0
      %v1689 = vsel %vm534, %v1682, 0
      %v1692 = vsel %vm534, %v1683, 0
      %v1695 = vsel %vm534, %v1684, 0
      %1697 = vmatprep.subr.mxu0 %v1671
      %1698 = vmatpush1.msra.mxu0 %v1670
      %1699 = vmatprep.subr.mxu0 %v1674
      %1700 = vmatpush1.msra.mxu0 %v1673
      %1701 = vmatprep.subr.mxu0 %v1677
      %1702 = vmatpush1.msra.mxu0 %v1676
      %1703 = vmatprep.subr.mxu0 %v1680
      %1704 = vmatpush1.msra.mxu0 %v1679
      %1705 = vmatprep.subr.mxu0 %v1692
      %1706 = vmatpush1.msra.mxu0 %v1689
      %1707 = vmatprep.subr.mxu0 0.0
      %1708 = vmatpush1.msra.mxu0 0.0
      %1709 = vmatprep.subr.mxu0 0.0
      %1710 = vmatpush1.msra.mxu0 0.0
      %1711 = vmatprep.subr.mxu0 0.0
      %1712 = vmatpush1.msra.mxu0 0.0
      %1713 = vmatprep.subr.mxu0 0.0
      %1714 = vmatpush1.msra.mxu0 0.0
      %1715 = vmatprep.subr.mxu0 0.0
      %1716 = vmatpush1.msra.mxu0 0.0
      %1717 = vmatprep.subr.mxu0 0.0
      %1718 = vmatpush1.msra.mxu0 0.0
      %1719 = vmatprep.subr.mxu0 0.0
      %1720 = vmatpush1.msra.mxu0 0.0
      %1721 = vmatprep.subr.mxu0 0.0
      %1722 = vmatpush1.msra.mxu0 0.0
      %1723 = vmatprep.subr.mxu0 0.0
      %1724 = vmatpush1.msra.mxu0 0.0
      %1725 = vmatprep.subr.mxu0 0.0
      %1726 = vmatpush1.msra.mxu0 0.0
      %1727 = vmatprep.subr.mxu0 0.0
      %1728 = vmatpush1.msra.mxu0 0.0
      %1729 = vmatprep.subr.mxu0 0.0
      %1730 = vmatpush1.msra.mxu0 0.0
      %1731 = vmatprep.subr.mxu0 0.0
      %1732 = vmatpush1.msra.mxu0 0.0
      %1733 = vmatprep.subr.mxu0 0.0
      %1734 = vmatpush1.msra.mxu0 0.0
      %1735 = vmatprep.subr.mxu0 0.0
      %1736 = vmatpush1.msra.mxu0 0.0
      %1737 = vmatprep.subr.mxu0 0.0
      %1738 = vmatpush1.msra.mxu0 0.0
      %1739 = vmatprep.subr.mxu0 0.0
      %1740 = vmatpush1.msra.mxu0 0.0
      %1741 = vmatprep.subr.mxu0 0.0
      %1742 = vmatpush1.msra.mxu0 0.0
      %1743 = vmatprep.subr.mxu0 0.0
      %1744 = vmatpush1.msra.mxu0 0.0
      %1745 = vmatprep.subr.mxu0 0.0
      %1746 = vmatpush1.msra.mxu0 0.0
      %1747 = vmatprep.subr.mxu0 0.0
      %1748 = vmatpush1.msra.mxu0 0.0
      %1749 = vmatprep.subr.mxu0 0.0
      %1750 = vmatpush1.msra.mxu0 0.0
      %1751 = vmatprep.subr.mxu0 0.0
      %1752 = vmatpush1.msra.mxu0 0.0
      %1753 = vmatprep.subr.mxu0 0.0
      %1754 = vmatpush1.msra.mxu0 0.0
      %1755 = vmatprep.subr.mxu0 0.0
      %1756 = vmatpush1.msra.mxu0 0.0
      %1757 = vmatprep.subr.mxu0 0.0
      %1758 = vmatpush1.msra.mxu0 0.0
      %1759 = vmatprep.subr.mxu0 0.0
      %1760 = vmatpush1.msra.mxu0 0.0
      %1761 = vmatprep.mubr.f32.mxu0 0.0
      %1762 = vmatmul.mubr.f32.gmra.mrb[0].mxu0 %v1686
      %v1763 = vpop.f32.mrb[0].mxu0
      %v1764 = vadd.f32 0.0, %v1763
      %v1765 = vpop.f32.mrb[0].mxu0
      %v1766 = vadd.f32 0.0, %v1765
      %1767 = vdwg.mxu0
      %1768 = vmatprep.subr.mxu0 0.0
      %1769 = vmatpush1.msra.mxu0 %v1672
      %1770 = vmatprep.subr.mxu0 0.0
      %1771 = vmatpush1.msra.mxu0 %v1675
      %1772 = vmatprep.subr.mxu0 0.0
      %1773 = vmatpush1.msra.mxu0 %v1678
      %1774 = vmatprep.subr.mxu0 0.0
      %1775 = vmatpush1.msra.mxu0 %v1681
      %1776 = vmatprep.subr.mxu0 0.0
      %1777 = vmatpush1.msra.mxu0 %v1695
      %1778 = vmatprep.subr.mxu0 0.0
      %1779 = vmatpush1.msra.mxu0 0.0
      %1780 = vmatprep.subr.mxu0 0.0
      %1781 = vmatpush1.msra.mxu0 0.0
      %1782 = vmatprep.subr.mxu0 0.0
      %1783 = vmatpush1.msra.mxu0 0.0
      %1784 = vmatprep.subr.mxu0 0.0
      %1785 = vmatpush1.msra.mxu0 0.0
      %1786 = vmatprep.subr.mxu0 0.0
      %1787 = vmatpush1.msra.mxu0 0.0
      %1788 = vmatprep.subr.mxu0 0.0
      %1789 = vmatpush1.msra.mxu0 0.0
      %1790 = vmatprep.subr.mxu0 0.0
      %1791 = vmatpush1.msra.mxu0 0.0
      %1792 = vmatprep.subr.mxu0 0.0
      %1793 = vmatpush1.msra.mxu0 0.0
      %1794 = vmatprep.subr.mxu0 0.0
      %1795 = vmatpush1.msra.mxu0 0.0
      %1796 = vmatprep.subr.mxu0 0.0
      %1797 = vmatpush1.msra.mxu0 0.0
      %1798 = vmatprep.subr.mxu0 0.0
      %1799 = vmatpush1.msra.mxu0 0.0
      %1800 = vmatprep.subr.mxu0 0.0
      %1801 = vmatpush1.msra.mxu0 0.0
      %1802 = vmatprep.subr.mxu0 0.0
      %1803 = vmatpush1.msra.mxu0 0.0
      %1804 = vmatprep.subr.mxu0 0.0
      %1805 = vmatpush1.msra.mxu0 0.0
      %1806 = vmatprep.subr.mxu0 0.0
      %1807 = vmatpush1.msra.mxu0 0.0
      %1808 = vmatprep.subr.mxu0 0.0
      %1809 = vmatpush1.msra.mxu0 0.0
      %1810 = vmatprep.subr.mxu0 0.0
      %1811 = vmatpush1.msra.mxu0 0.0
      %1812 = vmatprep.subr.mxu0 0.0
      %1813 = vmatpush1.msra.mxu0 0.0
      %1814 = vmatprep.subr.mxu0 0.0
      %1815 = vmatpush1.msra.mxu0 0.0
      %1816 = vmatprep.subr.mxu0 0.0
      %1817 = vmatpush1.msra.mxu0 0.0
      %1818 = vmatprep.subr.mxu0 0.0
      %1819 = vmatpush1.msra.mxu0 0.0
      %1820 = vmatprep.subr.mxu0 0.0
      %1821 = vmatpush1.msra.mxu0 0.0
      %1822 = vmatprep.subr.mxu0 0.0
      %1823 = vmatpush1.msra.mxu0 0.0
      %1824 = vmatprep.subr.mxu0 0.0
      %1825 = vmatpush1.msra.mxu0 0.0
      %1826 = vmatprep.subr.mxu0 0.0
      %1827 = vmatpush1.msra.mxu0 0.0
      %1828 = vmatprep.subr.mxu0 0.0
      %1829 = vmatpush1.msra.mxu0 0.0
      %1830 = vmatprep.subr.mxu0 0.0
      %1831 = vmatpush1.msra.mxu0 0.0
      %1832 = vmatprep.mubr.f32.mxu0 0.0
      %1833 = vmatmul.mubr.f32.gmra.mrb[0].mxu0 %v1686
      %v1834 = vpop.f32.mrb[0].mxu0
      %v1835 = vadd.f32 0.0, %v1834
      %v1836 = vpop.f32.mrb[0].mxu0
      %1837 = vdwg.mxu0
      %1838 = vst [vmem:[%s312] sm:$0xff] %v1764
      %1839 = vst [vmem:[%s312 + $0x8] sm:$0xff] %v1766
      %vm1840 = vcmask 244736
      %1841 = vst.msk [vmem:[%s312 + $0x10] sm:$0xff] %vm1840, %v1835
      %vm1842 = vcmask 89088
      %1843 = vst.msk [vmem:[#allocation4] sm:$0xff] %vm1842, 0.0
      %vm1844 = vcmask 818888
      %1845 = vst.msk [vmem:[#allocation4] sm:$0xff] %vm1844, 0.0
      %v1846 = vld [vmem:[%s2] sm:$0xff]
      %v1847 = vld [vmem:[%s2 + $0x8] sm:$0xff]
      %v1848 = vld [vmem:[%s2 + $0x10] sm:$0xff]
      %v1849 = vld [vmem:[%s2 + $0x18] sm:$0xff]
      %v1850 = vld [vmem:[%s2 + $0x20] sm:$0xff]
      %v1851 = vld [vmem:[%s2 + $0x28] sm:$0xff]
      %v1852 = vld [vmem:[%s2 + $0x30] sm:$0xff]
      %v1853 = vld [vmem:[%s2 + $0x38] sm:$0xff]
      %v1854 = vld [vmem:[%s2 + $0x40] sm:$0xff]
      %v1855 = vld [vmem:[%s2 + $0x48] sm:$0xff]
      %v1856 = vld [vmem:[%s2 + $0x50] sm:$0xff]
      %v1857 = vld [vmem:[%s2 + $0x58] sm:$0xff]
      %v1858 = vld [vmem:[%s2 + $0x60] sm:$0xff]
      %v1859 = vld [vmem:[%s2 + $0x68] sm:$0xff]
      %v1860 = vld [vmem:[%s2 + $0x70] sm:$0xff]
      %v1861 = vld [vmem:[%s2 + $0x78] sm:$0xff]
      %v1862 = vld [vmem:[%s2 + $0x80] sm:$0xff]
      %v1863 = vld [vmem:[%s2 + $0x88] sm:$0xff]
      %v1864 = vld [vmem:[%s2 + $0x90] sm:$0xff]
      %v1865 = vld [vmem:[%s2 + $0x98] sm:$0xff]
      %v1866 = vld [vmem:[%s2 + $0xa0] sm:$0xff]
      %v1867 = vld [vmem:[%s2 + $0xa8] sm:$0xff]
      %v1868 = vld [vmem:[%s2 + $0xb0] sm:$0xff]
      %v1869 = vld [vmem:[%s2 + $0xb8] sm:$0xff]
      %v1870 = vld [vmem:[%s2 + $0xc0] sm:$0xff]
      %v1871 = vld [vmem:[%s2 + $0xc8] sm:$0xff]
      %v1872 = vld [vmem:[%s2 + $0xd0] sm:$0xff]
      %v1873 = vld [vmem:[%s2 + $0xd8] sm:$0xff]
      %v1874 = vld [vmem:[%s2 + $0xe0] sm:$0xff]
      %v1875 = vld [vmem:[%s2 + $0xe8] sm:$0xff]
      %v1876 = vld [vmem:[%s2 + $0xf0] sm:$0xff]
      %v1877 = vld [vmem:[%s2 + $0xf8] sm:$0xff]
      %v1878 = vld [vmem:[%s2 + $0x100] sm:$0xff]
      %v1879 = vld [vmem:[%s2 + $0x108] sm:$0xff]
      %v1880 = vld [vmem:[%s2 + $0x110] sm:$0xff]
      %v1881 = vld [vmem:[%s2 + $0x118] sm:$0x3f]
      %vm1882 = vcmp.ge.f32.partialorder %v1764, 0.0
      %vm1883 = vcmp.ge.f32.partialorder %v1766, 0.0
      %vm1884 = vcmp.ge.f32.partialorder %v1835, 0.0
      %v1885 = vmul.f32 %v1764, 0.01
      %v1886 = vmul.f32 %v1766, 0.01
      %v1887 = vmul.f32 %v1835, 0.01
      %v1888 = vsel %vm1882, %v1764, %v1885
      %v1889 = vsel %vm1883, %v1766, %v1886
      %v1890 = vsel %vm1884, %v1835, %v1887
      %v1892 = vsel %vm1840, %v1890, 0
      %vm1894 = vcmask 1045504
      %v1896 = vsel %vm1894, %v1881, 0
      %1898 = vmatprep.subr.mxu0 0.0
      %1899 = vmatpush1.msra.mxu0 %v1846
      %1900 = vmatprep.subr.mxu0 0.0
      %1901 = vmatpush1.msra.mxu0 %v1847
      %1902 = vmatprep.subr.mxu0 0.0
      %1903 = vmatpush1.msra.mxu0 %v1848
      %1904 = vmatprep.subr.mxu0 0.0
      %1905 = vmatpush1.msra.mxu0 %v1849
      %1906 = vmatprep.subr.mxu0 0.0
      %1907 = vmatpush1.msra.mxu0 %v1850
      %1908 = vmatprep.subr.mxu0 0.0
      %1909 = vmatpush1.msra.mxu0 %v1851
      %1910 = vmatprep.subr.mxu0 0.0
      %1911 = vmatpush1.msra.mxu0 %v1852
      %1912 = vmatprep.subr.mxu0 0.0
      %1913 = vmatpush1.msra.mxu0 %v1853
      %1914 = vmatprep.subr.mxu0 0.0
      %1915 = vmatpush1.msra.mxu0 %v1854
      %1916 = vmatprep.subr.mxu0 0.0
      %1917 = vmatpush1.msra.mxu0 %v1855
      %1918 = vmatprep.subr.mxu0 0.0
      %1919 = vmatpush1.msra.mxu0 %v1856
      %1920 = vmatprep.subr.mxu0 0.0
      %1921 = vmatpush1.msra.mxu0 %v1857
      %1922 = vmatprep.subr.mxu0 0.0
      %1923 = vmatpush1.msra.mxu0 %v1858
      %1924 = vmatprep.subr.mxu0 0.0
      %1925 = vmatpush1.msra.mxu0 %v1859
      %1926 = vmatprep.subr.mxu0 0.0
      %1927 = vmatpush1.msra.mxu0 %v1860
      %1928 = vmatprep.subr.mxu0 0.0
      %1929 = vmatpush1.msra.mxu0 %v1861
      %1930 = vmatprep.subr.mxu0 0.0
      %1931 = vmatpush1.msra.mxu0 %v1862
      %1932 = vmatprep.subr.mxu0 0.0
      %1933 = vmatpush1.msra.mxu0 %v1863
      %1934 = vmatprep.subr.mxu0 0.0
      %1935 = vmatpush1.msra.mxu0 %v1864
      %1936 = vmatprep.subr.mxu0 0.0
      %1937 = vmatpush1.msra.mxu0 %v1865
      %1938 = vmatprep.subr.mxu0 0.0
      %1939 = vmatpush1.msra.mxu0 %v1866
      %1940 = vmatprep.subr.mxu0 0.0
      %1941 = vmatpush1.msra.mxu0 %v1867
      %1942 = vmatprep.subr.mxu0 0.0
      %1943 = vmatpush1.msra.mxu0 %v1868
      %1944 = vmatprep.subr.mxu0 0.0
      %1945 = vmatpush1.msra.mxu0 %v1869
      %1946 = vmatprep.subr.mxu0 0.0
      %1947 = vmatpush1.msra.mxu0 %v1870
      %1948 = vmatprep.subr.mxu0 0.0
      %1949 = vmatpush1.msra.mxu0 %v1871
      %1950 = vmatprep.subr.mxu0 0.0
      %1951 = vmatpush1.msra.mxu0 %v1872
      %1952 = vmatprep.subr.mxu0 0.0
      %1953 = vmatpush1.msra.mxu0 %v1873
      %1954 = vmatprep.subr.mxu0 0.0
      %1955 = vmatpush1.msra.mxu0 %v1874
      %1956 = vmatprep.subr.mxu0 0.0
      %1957 = vmatpush1.msra.mxu0 %v1875
      %1958 = vmatprep.subr.mxu0 0.0
      %1959 = vmatpush1.msra.mxu0 %v1876
      %1960 = vmatprep.subr.mxu0 0.0
      %1961 = vmatpush1.msra.mxu0 %v1877
      %1962 = vmatprep.mubr.f32.mxu0 %v1889
      %1963 = vmatmul.mubr.f32.gmra.mrb[0].mxu0 %v1888
      %v1964 = vpop.f32.mrb[0].mxu0
      %v1965 = vadd.f32 0.0, %v1964
      %v1966 = vpop.f32.mrb[0].mxu0
      %1967 = vdwg.mxu0
      %1968 = vmatprep.subr.mxu0 0.0
      %1969 = vmatpush1.msra.mxu0 %v1878
      %1970 = vmatprep.subr.mxu0 0.0
      %1971 = vmatpush1.msra.mxu0 %v1879
      %1972 = vmatprep.subr.mxu0 0.0
      %1973 = vmatpush1.msra.mxu0 %v1880
      %1974 = vmatprep.subr.mxu0 0.0
      %1975 = vmatpush1.msra.mxu0 %v1896
      %1976 = vmatprep.subr.mxu0 0.0
      %1977 = vmatpush1.msra.mxu0 0.0
      %1978 = vmatprep.subr.mxu0 0.0
      %1979 = vmatpush1.msra.mxu0 0.0
      %1980 = vmatprep.subr.mxu0 0.0
      %1981 = vmatpush1.msra.mxu0 0.0
      %1982 = vmatprep.subr.mxu0 0.0
      %1983 = vmatpush1.msra.mxu0 0.0
      %1984 = vmatprep.subr.mxu0 0.0
      %1985 = vmatpush1.msra.mxu0 0.0
      %1986 = vmatprep.subr.mxu0 0.0
      %1987 = vmatpush1.msra.mxu0 0.0
      %1988 = vmatprep.subr.mxu0 0.0
      %1989 = vmatpush1.msra.mxu0 0.0
      %1990 = vmatprep.subr.mxu0 0.0
      %1991 = vmatpush1.msra.mxu0 0.0
      %1992 = vmatprep.subr.mxu0 0.0
      %1993 = vmatpush1.msra.mxu0 0.0
      %1994 = vmatprep.subr.mxu0 0.0
      %1995 = vmatpush1.msra.mxu0 0.0
      %1996 = vmatprep.subr.mxu0 0.0
      %1997 = vmatpush1.msra.mxu0 0.0
      %1998 = vmatprep.subr.mxu0 0.0
      %1999 = vmatpush1.msra.mxu0 0.0
      %2000 = vmatprep.subr.mxu0 0.0
      %2001 = vmatpush1.msra.mxu0 0.0
      %2002 = vmatprep.subr.mxu0 0.0
      %2003 = vmatpush1.msra.mxu0 0.0
      %2004 = vmatprep.subr.mxu0 0.0
      %2005 = vmatpush1.msra.mxu0 0.0
      %2006 = vmatprep.subr.mxu0 0.0
      %2007 = vmatpush1.msra.mxu0 0.0
      %2008 = vmatprep.subr.mxu0 0.0
      %2009 = vmatpush1.msra.mxu0 0.0
      %2010 = vmatprep.subr.mxu0 0.0
      %2011 = vmatpush1.msra.mxu0 0.0
      %2012 = vmatprep.subr.mxu0 0.0
      %2013 = vmatpush1.msra.mxu0 0.0
      %2014 = vmatprep.subr.mxu0 0.0
      %2015 = vmatpush1.msra.mxu0 0.0
      %2016 = vmatprep.subr.mxu0 0.0
      %2017 = vmatpush1.msra.mxu0 0.0
      %2018 = vmatprep.subr.mxu0 0.0
      %2019 = vmatpush1.msra.mxu0 0.0
      %2020 = vmatprep.subr.mxu0 0.0
      %2021 = vmatpush1.msra.mxu0 0.0
      %2022 = vmatprep.subr.mxu0 0.0
      %2023 = vmatpush1.msra.mxu0 0.0
      %2024 = vmatprep.subr.mxu0 0.0
      %2025 = vmatpush1.msra.mxu0 0.0
      %2026 = vmatprep.subr.mxu0 0.0
      %2027 = vmatpush1.msra.mxu0 0.0
      %2028 = vmatprep.subr.mxu0 0.0
      %2029 = vmatpush1.msra.mxu0 0.0
      %2030 = vmatprep.subr.mxu0 0.0
      %2031 = vmatpush1.msra.mxu0 0.0
      %2032 = vmatprep.mubr.f32.mxu0 0.0
      %2033 = vmatmul.mubr.f32.gmra.mrb[0].mxu0 %v1892
      %v2034 = vpop.f32.mrb[0].mxu0
      %v2035 = vadd.f32 %v1965, %v2034
      %v2036 = vpop.f32.mrb[0].mxu0
      %2037 = vdwg.mxu0
      %2039 = vrot.lane.b32.xlu0 %v2035, 11
      %v2040 = vpop.permute.xlu0 %2039
      %vm2042 = vcmask 728152
      %2043 = vst.msk [vmem:[#allocation4] sm:$0xff] %vm2042, %v2040
      %v2044 = vld [vmem:[#allocation4] sm:$0xff]
      %vm2045 = vcmask 637952
      %2046 = vst.msk [vmem:[#allocation7] sm:$0xff] %vm2045, %v2044
      %v2047 = vld [vmem:[#allocation4] sm:$0xff]
      %2049 = vrot.lane.b32.xlu0 %v2047, 127
      %v2050 = vpop.permute.xlu0 %2049
      %2052 = vst.msk [vmem:[#allocation7 + $0x18] sm:$0xff] %vm2045, %v2050
      %v2053 = vld [vmem:[#allocation4] sm:$0xff]
      %2055 = vrot.lane.b32.xlu0 %v2053, 126
      %v2056 = vpop.permute.xlu0 %2055
      %2058 = vst.msk [vmem:[#allocation7 + $0x30] sm:$0xff] %vm2045, %v2056
      %v2059 = vld [vmem:[#allocation4] sm:$0xff]
      %2061 = vrot.lane.b32.xlu0 %v2059, 118
      %v2062 = vpop.permute.xlu0 %2061
      %2064 = vst.msk [vmem:[#allocation7 + $0x48] sm:$0xff] %vm2045, %v2062
      %v2065 = vld [vmem:[#allocation4] sm:$0xff]
      %2067 = vrot.lane.b32.xlu0 %v2065, 117
      %v2068 = vpop.permute.xlu0 %2067
      %2070 = vst.msk [vmem:[#allocation7 + $0x60] sm:$0xff] %vm2045, %v2068
      %v2071 = vld [vmem:[#allocation4] sm:$0xff]
      %2073 = vrot.lane.b32.xlu0 %v2071, 116
      %v2074 = vpop.permute.xlu0 %2073
      %2076 = vst.msk [vmem:[#allocation7 + $0x78] sm:$0xff] %vm2045, %v2074
      %v2077 = vld [vmem:[#allocation4] sm:$0xff]
      %2079 = vrot.lane.b32.xlu0 %v2077, 108
      %v2080 = vpop.permute.xlu0 %2079
      %2082 = vst.msk [vmem:[#allocation7 + $0x90] sm:$0xff] %vm2045, %v2080
      %v2083 = vld [vmem:[#allocation4] sm:$0xff]
      %2085 = vrot.lane.b32.xlu0 %v2083, 107
      %v2086 = vpop.permute.xlu0 %2085
      %2088 = vst.msk [vmem:[#allocation7 + $0xa8] sm:$0xff] %vm2045, %v2086
      %v2089 = vld [vmem:[#allocation4] sm:$0xff]
      %2091 = vrot.lane.b32.xlu0 %v2089, 106
      %v2092 = vpop.permute.xlu0 %2091
      %2094 = vst.msk [vmem:[#allocation7 + $0xc0] sm:$0xff] %vm2045, %v2092
      %vm2095 = vcmask 630784
      %2096 = vst.msk [vmem:[#allocation7 + $0xd8] sm:$0x1] %vm2095, 1.0
      %v2097 = vld [vmem:[%s1 + $0x60] sm:$0xff]
      %v2098 = vld [vmem:[#allocation7] sm:$0xff]
      %v2099 = vld [vmem:[#allocation7 + $0x18] sm:$0xff]
      %v2100 = vld [vmem:[#allocation7 + $0x30] sm:$0xff]
      %v2101 = vld [vmem:[#allocation7 + $0x48] sm:$0xff]
      %v2102 = vld [vmem:[#allocation7 + $0x60] sm:$0xff]
      %v2103 = vld [vmem:[#allocation7 + $0x78] sm:$0xff]
      %v2104 = vld [vmem:[#allocation7 + $0x90] sm:$0xff]
      %v2105 = vld [vmem:[#allocation7 + $0xa8] sm:$0xff]
      %v2106 = vld [vmem:[#allocation7 + $0xc0] sm:$0xff]
      %v2107 = vld [vmem:[#allocation7 + $0xd8] sm:$0x1]
      %vm2108 = vcmask 596992
      %v2110 = vsel %vm2108, %v2097, 0
      %vm2112 = vcmask 1040384
      %v2114 = vsel %vm2112, %v2107, 0
      %2116 = vmatprep.subr.mxu0 0.0
      %2117 = vmatpush1.msra.mxu0 %v2098
      %2118 = vmatprep.subr.mxu0 0.0
      %2119 = vmatpush1.msra.mxu0 %v2099
      %2120 = vmatprep.subr.mxu0 0.0
      %2121 = vmatpush1.msra.mxu0 %v2100
      %2122 = vmatprep.subr.mxu0 0.0
      %2123 = vmatpush1.msra.mxu0 %v2101
      %2124 = vmatprep.subr.mxu0 0.0
      %2125 = vmatpush1.msra.mxu0 %v2102
      %2126 = vmatprep.subr.mxu0 0.0
      %2127 = vmatpush1.msra.mxu0 %v2103
      %2128 = vmatprep.subr.mxu0 0.0
      %2129 = vmatpush1.msra.mxu0 %v2104
      %2130 = vmatprep.subr.mxu0 0.0
      %2131 = vmatpush1.msra.mxu0 %v2105
      %2132 = vmatprep.subr.mxu0 0.0
      %2133 = vmatpush1.msra.mxu0 %v2106
      %2134 = vmatprep.subr.mxu0 0.0
      %2135 = vmatpush1.msra.mxu0 %v2114
      %2136 = vmatprep.subr.mxu0 0.0
      %2137 = vmatpush1.msra.mxu0 0.0
      %2138 = vmatprep.subr.mxu0 0.0
      %2139 = vmatpush1.msra.mxu0 0.0
      %2140 = vmatprep.subr.mxu0 0.0
      %2141 = vmatpush1.msra.mxu0 0.0
      %2142 = vmatprep.subr.mxu0 0.0
      %2143 = vmatpush1.msra.mxu0 0.0
      %2144 = vmatprep.subr.mxu0 0.0
      %2145 = vmatpush1.msra.mxu0 0.0
      %2146 = vmatprep.subr.mxu0 0.0
      %2147 = vmatpush1.msra.mxu0 0.0
      %2148 = vmatprep.subr.mxu0 0.0
      %2149 = vmatpush1.msra.mxu0 0.0
      %2150 = vmatprep.subr.mxu0 0.0
      %2151 = vmatpush1.msra.mxu0 0.0
      %2152 = vmatprep.subr.mxu0 0.0
      %2153 = vmatpush1.msra.mxu0 0.0
      %2154 = vmatprep.subr.mxu0 0.0
      %2155 = vmatpush1.msra.mxu0 0.0
      %2156 = vmatprep.subr.mxu0 0.0
      %2157 = vmatpush1.msra.mxu0 0.0
      %2158 = vmatprep.subr.mxu0 0.0
      %2159 = vmatpush1.msra.mxu0 0.0
      %2160 = vmatprep.subr.mxu0 0.0
      %2161 = vmatpush1.msra.mxu0 0.0
      %2162 = vmatprep.subr.mxu0 0.0
      %2163 = vmatpush1.msra.mxu0 0.0
      %2164 = vmatprep.subr.mxu0 0.0
      %2165 = vmatpush1.msra.mxu0 0.0
      %2166 = vmatprep.subr.mxu0 0.0
      %2167 = vmatpush1.msra.mxu0 0.0
      %2168 = vmatprep.subr.mxu0 0.0
      %2169 = vmatpush1.msra.mxu0 0.0
      %2170 = vmatprep.subr.mxu0 0.0
      %2171 = vmatpush1.msra.mxu0 0.0
      %2172 = vmatprep.subr.mxu0 0.0
      %2173 = vmatpush1.msra.mxu0 0.0
      %2174 = vmatprep.subr.mxu0 0.0
      %2175 = vmatpush1.msra.mxu0 0.0
      %2176 = vmatprep.subr.mxu0 0.0
      %2177 = vmatpush1.msra.mxu0 0.0
      %2178 = vmatprep.subr.mxu0 0.0
      %2179 = vmatpush1.msra.mxu0 0.0
      %2180 = vmatprep.mubr.f32.mxu0 0.0
      %2181 = vmatmul.mubr.f32.gmra.mrb[0].mxu0 %v2110
      %v2182 = vpop.f32.mrb[0].mxu0
      %v2183 = vadd.f32 0.0, %v2182
      %v2184 = vpop.f32.mrb[0].mxu0
      %2185 = vdwg.mxu0
      %vm2186 = vcmp.ge.f32.partialorder %v2183, 0.0
      %v2187 = vmul.f32 %v2183, 0.01
      %v2188 = vsel %vm2186, %v2183, %v2187
      %v2189 = vld [vmem:[%s1 + $0x259] ss:$0 sm:$0xff]
      %v2190 = vmul.f32 %v2188, %v2189
      %2192 = vrot.lane.b32.xlu0 %v2190, 11
      %v2193 = vpop.permute.xlu0 %2192
      %2195 = vst.msk [vmem:[#allocation4] sm:$0xff] %vm2042, %v2193
      %v2196 = vld [vmem:[#allocation4] sm:$0xff]
      %2197 = vst.msk [vmem:[#allocation7] sm:$0xff] %vm2045, %v2196
      %v2198 = vld [vmem:[#allocation4] sm:$0xff]
      %2200 = vrot.lane.b32.xlu0 %v2198, 127
      %v2201 = vpop.permute.xlu0 %2200
      %2203 = vst.msk [vmem:[#allocation7 + $0x18] sm:$0xff] %vm2045, %v2201
      %v2204 = vld [vmem:[#allocation4] sm:$0xff]
      %2206 = vrot.lane.b32.xlu0 %v2204, 126
      %v2207 = vpop.permute.xlu0 %2206
      %2209 = vst.msk [vmem:[#allocation7 + $0x30] sm:$0xff] %vm2045, %v2207
      %v2210 = vld [vmem:[#allocation4] sm:$0xff]
      %2212 = vrot.lane.b32.xlu0 %v2210, 118
      %v2213 = vpop.permute.xlu0 %2212
      %2215 = vst.msk [vmem:[#allocation7 + $0x48] sm:$0xff] %vm2045, %v2213
      %v2216 = vld [vmem:[#allocation4] sm:$0xff]
      %2218 = vrot.lane.b32.xlu0 %v2216, 117
      %v2219 = vpop.permute.xlu0 %2218
      %2221 = vst.msk [vmem:[#allocation7 + $0x60] sm:$0xff] %vm2045, %v2219
      %v2222 = vld [vmem:[#allocation4] sm:$0xff]
      %2224 = vrot.lane.b32.xlu0 %v2222, 116
      %v2225 = vpop.permute.xlu0 %2224
      %2227 = vst.msk [vmem:[#allocation7 + $0x78] sm:$0xff] %vm2045, %v2225
      %v2228 = vld [vmem:[#allocation4] sm:$0xff]
      %2230 = vrot.lane.b32.xlu0 %v2228, 108
      %v2231 = vpop.permute.xlu0 %2230
      %2233 = vst.msk [vmem:[#allocation7 + $0x90] sm:$0xff] %vm2045, %v2231
      %v2234 = vld [vmem:[#allocation4] sm:$0xff]
      %2236 = vrot.lane.b32.xlu0 %v2234, 107
      %v2237 = vpop.permute.xlu0 %2236
      %2239 = vst.msk [vmem:[#allocation7 + $0xa8] sm:$0xff] %vm2045, %v2237
      %v2240 = vld [vmem:[#allocation4] sm:$0xff]
      %2242 = vrot.lane.b32.xlu0 %v2240, 106
      %v2243 = vpop.permute.xlu0 %2242
      %2245 = vst.msk [vmem:[#allocation7 + $0xc0] sm:$0xff] %vm2045, %v2243
      %2246 = vst.msk [vmem:[#allocation7 + $0xd8] sm:$0x1] %vm2095, 1.0
      %v2247 = vld [vmem:[%s1 + $0x78] sm:$0xff]
      %v2248 = vld [vmem:[%s1 + $0x90] sm:$0xff]
      %v2249 = vld [vmem:[#allocation7] sm:$0xff]
      %v2250 = vld [vmem:[#allocation7 + $0x18] sm:$0xff]
      %v2251 = vld [vmem:[#allocation7 + $0x30] sm:$0xff]
      %v2252 = vld [vmem:[#allocation7 + $0x48] sm:$0xff]
      %v2253 = vld [vmem:[#allocation7 + $0x60] sm:$0xff]
      %v2254 = vld [vmem:[#allocation7 + $0x78] sm:$0xff]
      %v2255 = vld [vmem:[#allocation7 + $0x90] sm:$0xff]
      %v2256 = vld [vmem:[#allocation7 + $0xa8] sm:$0xff]
      %v2257 = vld [vmem:[#allocation7 + $0xc0] sm:$0xff]
      %v2258 = vld [vmem:[#allocation7 + $0xd8] sm:$0x1]
      %v2260 = vsel %vm2108, %v2247, 0
      %v2263 = vsel %vm2108, %v2248, 0
      %v2266 = vsel %vm2112, %v2258, 0
      %2268 = vmatprep.subr.mxu0 0.0
      %2269 = vmatpush1.msra.mxu0 %v2249
      %2270 = vmatprep.subr.mxu0 0.0
      %2271 = vmatpush1.msra.mxu0 %v2250
      %2272 = vmatprep.subr.mxu0 0.0
      %2273 = vmatpush1.msra.mxu0 %v2251
      %2274 = vmatprep.subr.mxu0 0.0
      %2275 = vmatpush1.msra.mxu0 %v2252
      %2276 = vmatprep.subr.mxu0 0.0
      %2277 = vmatpush1.msra.mxu0 %v2253
      %2278 = vmatprep.subr.mxu0 0.0
      %2279 = vmatpush1.msra.mxu0 %v2254
      %2280 = vmatprep.subr.mxu0 0.0
      %2281 = vmatpush1.msra.mxu0 %v2255
      %2282 = vmatprep.subr.mxu0 0.0
      %2283 = vmatpush1.msra.mxu0 %v2256
      %2284 = vmatprep.subr.mxu0 0.0
      %2285 = vmatpush1.msra.mxu0 %v2257
      %2286 = vmatprep.subr.mxu0 0.0
      %2287 = vmatpush1.msra.mxu0 %v2266
      %2288 = vmatprep.subr.mxu0 0.0
      %2289 = vmatpush1.msra.mxu0 0.0
      %2290 = vmatprep.subr.mxu0 0.0
      %2291 = vmatpush1.msra.mxu0 0.0
      %2292 = vmatprep.subr.mxu0 0.0
      %2293 = vmatpush1.msra.mxu0 0.0
      %2294 = vmatprep.subr.mxu0 0.0
      %2295 = vmatpush1.msra.mxu0 0.0
      %2296 = vmatprep.subr.mxu0 0.0
      %2297 = vmatpush1.msra.mxu0 0.0
      %2298 = vmatprep.subr.mxu0 0.0
      %2299 = vmatpush1.msra.mxu0 0.0
      %2300 = vmatprep.subr.mxu0 0.0
      %2301 = vmatpush1.msra.mxu0 0.0
      %2302 = vmatprep.subr.mxu0 0.0
      %2303 = vmatpush1.msra.mxu0 0.0
      %2304 = vmatprep.subr.mxu0 0.0
      %2305 = vmatpush1.msra.mxu0 0.0
      %2306 = vmatprep.subr.mxu0 0.0
      %2307 = vmatpush1.msra.mxu0 0.0
      %2308 = vmatprep.subr.mxu0 0.0
      %2309 = vmatpush1.msra.mxu0 0.0
      %2310 = vmatprep.subr.mxu0 0.0
      %2311 = vmatpush1.msra.mxu0 0.0
      %2312 = vmatprep.subr.mxu0 0.0
      %2313 = vmatpush1.msra.mxu0 0.0
      %2314 = vmatprep.subr.mxu0 0.0
      %2315 = vmatpush1.msra.mxu0 0.0
      %2316 = vmatprep.subr.mxu0 0.0
      %2317 = vmatpush1.msra.mxu0 0.0
      %2318 = vmatprep.subr.mxu0 0.0
      %2319 = vmatpush1.msra.mxu0 0.0
      %2320 = vmatprep.subr.mxu0 0.0
      %2321 = vmatpush1.msra.mxu0 0.0
      %2322 = vmatprep.subr.mxu0 0.0
      %2323 = vmatpush1.msra.mxu0 0.0
      %2324 = vmatprep.subr.mxu0 0.0
      %2325 = vmatpush1.msra.mxu0 0.0
      %2326 = vmatprep.subr.mxu0 0.0
      %2327 = vmatpush1.msra.mxu0 0.0
      %2328 = vmatprep.subr.mxu0 0.0
      %2329 = vmatpush1.msra.mxu0 0.0
      %2330 = vmatprep.subr.mxu0 0.0
      %2331 = vmatpush1.msra.mxu0 0.0
      %2332 = vmatprep.mubr.f32.mxu0 0.0
      %2333 = vmatmul.mubr.f32.gmra.mrb[0].mxu0 %v2260
      %v2334 = vpop.f32.mrb[0].mxu0
      %v2335 = vadd.f32 0.0, %v2334
      %v2336 = vpop.f32.mrb[0].mxu0
      %2337 = vmatprep.mubr.f32.mxu0 0.0
      %2338 = vmatmul.mubr.f32.gmra.mrb[0].mxu0 %v2263
      %v2339 = vpop.f32.mrb[0].mxu0
      %v2340 = vadd.f32 0.0, %v2339
      %v2341 = vpop.f32.mrb[0].mxu0
      %2342 = vdwg.mxu0
      %2343 = vst.msk [vmem:[%s317] sm:$0xff] %vm2045, %v2335
      %2344 = vst.msk [vmem:[%s317 + $0x8] sm:$0xff] %vm2045, %v2340
      %vm2345 = vcmask 56320
      %2346 = vst.msk [vmem:[#allocation5] sm:$0xff] %vm2345, 0.0
      %2347 = vst.msk [vmem:[#allocation5 + $0x8] sm:$0xff] %vm2345, 0.0
      %vm2348 = vcmask 294120
      %2349 = vst.msk [vmem:[#allocation5] sm:$0xff] %vm2348, 0.0
      %2350 = vst.msk [vmem:[#allocation5 + $0x8] sm:$0xff] %vm2348, 0.0
      %v2351 = vld [vmem:[%s2 + $0x120] sm:$0xff]
      %v2352 = vld [vmem:[%s2 + $0x128] sm:$0xff]
      %v2353 = vld [vmem:[%s2 + $0x130] sm:$0xff]
      %v2354 = vld [vmem:[%s2 + $0x138] sm:$0xff]
      %v2355 = vld [vmem:[%s2 + $0x140] sm:$0xff]
      %v2356 = vld [vmem:[%s2 + $0x148] sm:$0xff]
      %v2357 = vld [vmem:[%s2 + $0x150] sm:$0xff]
      %v2358 = vld [vmem:[%s2 + $0x158] sm:$0xff]
      %v2359 = vld [vmem:[%s2 + $0x160] sm:$0xff]
      %v2360 = vld [vmem:[%s2 + $0x168] sm:$0x3f]
      %vm2361 = vcmp.ge.f32.partialorder %v2335, 0.0
      %vm2362 = vcmp.ge.f32.partialorder %v2340, 0.0
      %v2363 = vmul.f32 %v2335, 0.01
      %v2364 = vmul.f32 %v2340, 0.01
      %v2365 = vsel %vm2361, %v2335, %v2363
      %v2366 = vsel %vm2362, %v2340, %v2364
      %v2368 = vsel %vm2045, %v2365, 0
      %v2371 = vsel %vm2045, %v2366, 0
      %v2374 = vsel %vm1894, %v2360, 0
      %2376 = vmatprep.subr.mxu0 0.0
      %2377 = vmatpush1.msra.mxu0 %v2351
      %2378 = vmatprep.subr.mxu0 0.0
      %2379 = vmatpush1.msra.mxu0 %v2352
      %2380 = vmatprep.subr.mxu0 0.0
      %2381 = vmatpush1.msra.mxu0 %v2353
      %2382 = vmatprep.subr.mxu0 0.0
      %2383 = vmatpush1.msra.mxu0 %v2354
      %2384 = vmatprep.subr.mxu0 0.0
      %2385 = vmatpush1.msra.mxu0 %v2355
      %2386 = vmatprep.subr.mxu0 0.0
      %2387 = vmatpush1.msra.mxu0 %v2356
      %2388 = vmatprep.subr.mxu0 0.0
      %2389 = vmatpush1.msra.mxu0 %v2357
      %2390 = vmatprep.subr.mxu0 0.0
      %2391 = vmatpush1.msra.mxu0 %v2358
      %2392 = vmatprep.subr.mxu0 0.0
      %2393 = vmatpush1.msra.mxu0 %v2359
      %2394 = vmatprep.subr.mxu0 0.0
      %2395 = vmatpush1.msra.mxu0 %v2374
      %2396 = vmatprep.subr.mxu0 0.0
      %2397 = vmatpush1.msra.mxu0 0.0
      %2398 = vmatprep.subr.mxu0 0.0
      %2399 = vmatpush1.msra.mxu0 0.0
      %2400 = vmatprep.subr.mxu0 0.0
      %2401 = vmatpush1.msra.mxu0 0.0
      %2402 = vmatprep.subr.mxu0 0.0
      %2403 = vmatpush1.msra.mxu0 0.0
      %2404 = vmatprep.subr.mxu0 0.0
      %2405 = vmatpush1.msra.mxu0 0.0
      %2406 = vmatprep.subr.mxu0 0.0
      %2407 = vmatpush1.msra.mxu0 0.0
      %2408 = vmatprep.subr.mxu0 0.0
      %2409 = vmatpush1.msra.mxu0 0.0
      %2410 = vmatprep.subr.mxu0 0.0
      %2411 = vmatpush1.msra.mxu0 0.0
      %2412 = vmatprep.subr.mxu0 0.0
      %2413 = vmatpush1.msra.mxu0 0.0
      %2414 = vmatprep.subr.mxu0 0.0
      %2415 = vmatpush1.msra.mxu0 0.0
      %2416 = vmatprep.subr.mxu0 0.0
      %2417 = vmatpush1.msra.mxu0 0.0
      %2418 = vmatprep.subr.mxu0 0.0
      %2419 = vmatpush1.msra.mxu0 0.0
      %2420 = vmatprep.subr.mxu0 0.0
      %2421 = vmatpush1.msra.mxu0 0.0
      %2422 = vmatprep.subr.mxu0 0.0
      %2423 = vmatpush1.msra.mxu0 0.0
      %2424 = vmatprep.subr.mxu0 0.0
      %2425 = vmatpush1.msra.mxu0 0.0
      %2426 = vmatprep.subr.mxu0 0.0
      %2427 = vmatpush1.msra.mxu0 0.0
      %2428 = vmatprep.subr.mxu0 0.0
      %2429 = vmatpush1.msra.mxu0 0.0
      %2430 = vmatprep.subr.mxu0 0.0
      %2431 = vmatpush1.msra.mxu0 0.0
      %2432 = vmatprep.subr.mxu0 0.0
      %2433 = vmatpush1.msra.mxu0 0.0
      %2434 = vmatprep.subr.mxu0 0.0
      %2435 = vmatpush1.msra.mxu0 0.0
      %2436 = vmatprep.subr.mxu0 0.0
      %2437 = vmatpush1.msra.mxu0 0.0
      %2438 = vmatprep.subr.mxu0 0.0
      %2439 = vmatpush1.msra.mxu0 0.0
      %2440 = vmatprep.mubr.f32.mxu0 0.0
      %2441 = vmatmul.mubr.f32.gmra.mrb[0].mxu0 %v2368
      %v2442 = vpop.f32.mrb[0].mxu0
      %v2443 = vadd.f32 0.0, %v2442
      %v2444 = vpop.f32.mrb[0].mxu0
      %2445 = vmatprep.mubr.f32.mxu0 0.0
      %2446 = vmatmul.mubr.f32.gmra.mrb[0].mxu0 %v2371
      %v2447 = vpop.f32.mrb[0].mxu0
      %v2448 = vadd.f32 0.0, %v2447
      %v2449 = vpop.f32.mrb[0].mxu0
      %2450 = vdwg.mxu0
      %2453 = vrot.lane.b32.xlu0 %v2443, 7
      %v2454 = vpop.permute.xlu0 %2453
      %2455 = vrot.lane.b32.xlu0 %v2448, 7
      %v2456 = vpop.permute.xlu0 %2455
      %vm2459 = vcmask 236600
      %2460 = vst.msk [vmem:[#allocation5] sm:$0xff] %vm2459, %v2454
      %2461 = vst.msk [vmem:[#allocation5 + $0x8] sm:$0xff] %vm2459, %v2456
      %v2462 = vld [vmem:[#allocation5] sm:$0xff]
      %v2463 = vld [vmem:[#allocation5 + $0x8] sm:$0xff]
      %vm2464 = vcmask 179200
      %2465 = vst.msk [vmem:[#allocation7] sm:$0xff] %vm2464, %v2462
      %2466 = vst.msk [vmem:[#allocation7 + $0x18] sm:$0xff] %vm2464, %v2463
      %v2467 = vld [vmem:[#allocation5] sm:$0xff]
      %v2468 = vld [vmem:[#allocation5 + $0x8] sm:$0xff]
      %2471 = vrot.lane.b32.xlu0 %v2467, 127
      %v2472 = vpop.permute.xlu0 %2471
      %2473 = vrot.lane.b32.xlu0 %v2468, 127
      %v2474 = vpop.permute.xlu0 %2473
      %2477 = vst.msk [vmem:[#allocation7 + $0x30] sm:$0xff] %vm2464, %v2472
      %2478 = vst.msk [vmem:[#allocation7 + $0x48] sm:$0xff] %vm2464, %v2474
      %v2479 = vld [vmem:[#allocation5] sm:$0xff]
      %v2480 = vld [vmem:[#allocation5 + $0x8] sm:$0xff]
      %2483 = vrot.lane.b32.xlu0 %v2479, 126
      %v2484 = vpop.permute.xlu0 %2483
      %2485 = vrot.lane.b32.xlu0 %v2480, 126
      %v2486 = vpop.permute.xlu0 %2485
      %2489 = vst.msk [vmem:[#allocation7 + $0x60] sm:$0xff] %vm2464, %v2484
      %2490 = vst.msk [vmem:[#allocation7 + $0x78] sm:$0xff] %vm2464, %v2486
      %v2491 = vld [vmem:[#allocation5] sm:$0xff]
      %v2492 = vld [vmem:[#allocation5 + $0x8] sm:$0xff]
      %2495 = vrot.lane.b32.xlu0 %v2491, 122
      %v2496 = vpop.permute.xlu0 %2495
      %2497 = vrot.lane.b32.xlu0 %v2492, 122
      %v2498 = vpop.permute.xlu0 %2497
      %2501 = vst.msk [vmem:[#allocation7 + $0x90] sm:$0xff] %vm2464, %v2496
      %2502 = vst.msk [vmem:[#allocation7 + $0xa8] sm:$0xff] %vm2464, %v2498
      %v2503 = vld [vmem:[#allocation5] sm:$0xff]
      %v2504 = vld [vmem:[#allocation5 + $0x8] sm:$0xff]
      %2507 = vrot.lane.b32.xlu0 %v2503, 121
      %v2508 = vpop.permute.xlu0 %2507
      %2509 = vrot.lane.b32.xlu0 %v2504, 121
      %v2510 = vpop.permute.xlu0 %2509
      %2513 = vst.msk [vmem:[#allocation7 + $0xc0] sm:$0xff] %vm2464, %v2508
      %2514 = vst.msk [vmem:[#allocation7 + $0xd8] sm:$0xff] %vm2464, %v2510
      %v2515 = vld [vmem:[#allocation5] sm:$0xff]
      %v2516 = vld [vmem:[#allocation5 + $0x8] sm:$0xff]
      %2519 = vrot.lane.b32.xlu0 %v2515, 120
      %v2520 = vpop.permute.xlu0 %2519
      %2521 = vrot.lane.b32.xlu0 %v2516, 120
      %v2522 = vpop.permute.xlu0 %2521
      %2525 = vst.msk [vmem:[#allocation7 + $0xf0] sm:$0xff] %vm2464, %v2520
      %2526 = vst.msk [vmem:[#allocation7 + $0x108] sm:$0xff] %vm2464, %v2522
      %v2527 = vld [vmem:[#allocation5] sm:$0xff]
      %v2528 = vld [vmem:[#allocation5 + $0x8] sm:$0xff]
      %2531 = vrot.lane.b32.xlu0 %v2527, 116
      %v2532 = vpop.permute.xlu0 %2531
      %2533 = vrot.lane.b32.xlu0 %v2528, 116
      %v2534 = vpop.permute.xlu0 %2533
      %2537 = vst.msk [vmem:[#allocation7 + $0x120] sm:$0xff] %vm2464, %v2532
      %2538 = vst.msk [vmem:[#allocation7 + $0x138] sm:$0xff] %vm2464, %v2534
      %v2539 = vld [vmem:[#allocation5] sm:$0xff]
      %v2540 = vld [vmem:[#allocation5 + $0x8] sm:$0xff]
      %2543 = vrot.lane.b32.xlu0 %v2539, 115
      %v2544 = vpop.permute.xlu0 %2543
      %2545 = vrot.lane.b32.xlu0 %v2540, 115
      %v2546 = vpop.permute.xlu0 %2545
      %2549 = vst.msk [vmem:[#allocation7 + $0x150] sm:$0xff] %vm2464, %v2544
      %2550 = vst.msk [vmem:[#allocation7 + $0x168] sm:$0xff] %vm2464, %v2546
      %v2551 = vld [vmem:[#allocation5] sm:$0xff]
      %v2552 = vld [vmem:[#allocation5 + $0x8] sm:$0xff]
      %2555 = vrot.lane.b32.xlu0 %v2551, 114
      %v2556 = vpop.permute.xlu0 %2555
      %2557 = vrot.lane.b32.xlu0 %v2552, 114
      %v2558 = vpop.permute.xlu0 %2557
      %2561 = vst.msk [vmem:[#allocation7 + $0x180] sm:$0xff] %vm2464, %v2556
      %2562 = vst.msk [vmem:[#allocation7 + $0x198] sm:$0xff] %vm2464, %v2558
      %vm2563 = vcmask 172032
      %2564 = vst.msk [vmem:[#allocation7 + $0x1b0] sm:$0x1] %vm2563, 1.0
      %v2565 = vld [vmem:[%s1 + $0xa8] sm:$0xff]
      %v2566 = vld [vmem:[%s1 + $0xb0] sm:$0xff]
      %v2567 = vld [vmem:[%s1 + $0xc0] sm:$0xff]
      %v2568 = vld [vmem:[%s1 + $0xc8] sm:$0xff]
      %v2569 = vld [vmem:[#allocation7] sm:$0xff]
      %v2570 = vld [vmem:[#allocation7 + $0x18] sm:$0xff]
      %v2571 = vld [vmem:[#allocation7 + $0x30] sm:$0xff]
      %v2572 = vld [vmem:[#allocation7 + $0x48] sm:$0xff]
      %v2573 = vld [vmem:[#allocation7 + $0x60] sm:$0xff]
      %v2574 = vld [vmem:[#allocation7 + $0x78] sm:$0xff]
      %v2575 = vld [vmem:[#allocation7 + $0x90] sm:$0xff]
      %v2576 = vld [vmem:[#allocation7 + $0xa8] sm:$0xff]
      %v2577 = vld [vmem:[#allocation7 + $0xc0] sm:$0xff]
      %v2578 = vld [vmem:[#allocation7 + $0xd8] sm:$0xff]
      %v2579 = vld [vmem:[#allocation7 + $0xf0] sm:$0xff]
      %v2580 = vld [vmem:[#allocation7 + $0x108] sm:$0xff]
      %v2581 = vld [vmem:[#allocation7 + $0x120] sm:$0xff]
      %v2582 = vld [vmem:[#allocation7 + $0x138] sm:$0xff]
      %v2583 = vld [vmem:[#allocation7 + $0x150] sm:$0xff]
      %v2584 = vld [vmem:[#allocation7 + $0x168] sm:$0xff]
      %v2585 = vld [vmem:[#allocation7 + $0x180] sm:$0xff]
      %v2586 = vld [vmem:[#allocation7 + $0x198] sm:$0xff]
      %v2587 = vld [vmem:[#allocation7 + $0x1b0] sm:$0x1]
      %vm2588 = vcmask 138240
      %v2590 = vsel %vm2588, %v2566, 0
      %v2593 = vsel %vm2588, %v2568, 0
      %v2596 = vsel %vm2112, %v2587, 0
      %2598 = vmatprep.subr.mxu0 0.0
      %2599 = vmatpush1.msra.mxu0 %v2569
      %2600 = vmatprep.subr.mxu0 0.0
      %2601 = vmatpush1.msra.mxu0 %v2570
      %2602 = vmatprep.subr.mxu0 0.0
      %2603 = vmatpush1.msra.mxu0 %v2571
      %2604 = vmatprep.subr.mxu0 0.0
      %2605 = vmatpush1.msra.mxu0 %v2572
      %2606 = vmatprep.subr.mxu0 0.0
      %2607 = vmatpush1.msra.mxu0 %v2573
      %2608 = vmatprep.subr.mxu0 0.0
      %2609 = vmatpush1.msra.mxu0 %v2574
      %2610 = vmatprep.subr.mxu0 0.0
      %2611 = vmatpush1.msra.mxu0 %v2575
      %2612 = vmatprep.subr.mxu0 0.0
      %2613 = vmatpush1.msra.mxu0 %v2576
      %2614 = vmatprep.subr.mxu0 0.0
      %2615 = vmatpush1.msra.mxu0 %v2577
      %2616 = vmatprep.subr.mxu0 0.0
      %2617 = vmatpush1.msra.mxu0 %v2578
      %2618 = vmatprep.subr.mxu0 0.0
      %2619 = vmatpush1.msra.mxu0 %v2579
      %2620 = vmatprep.subr.mxu0 0.0
      %2621 = vmatpush1.msra.mxu0 %v2580
      %2622 = vmatprep.subr.mxu0 0.0
      %2623 = vmatpush1.msra.mxu0 %v2581
      %2624 = vmatprep.subr.mxu0 0.0
      %2625 = vmatpush1.msra.mxu0 %v2582
      %2626 = vmatprep.subr.mxu0 0.0
      %2627 = vmatpush1.msra.mxu0 %v2583
      %2628 = vmatprep.subr.mxu0 0.0
      %2629 = vmatpush1.msra.mxu0 %v2584
      %2630 = vmatprep.subr.mxu0 0.0
      %2631 = vmatpush1.msra.mxu0 %v2585
      %2632 = vmatprep.subr.mxu0 0.0
      %2633 = vmatpush1.msra.mxu0 %v2586
      %2634 = vmatprep.subr.mxu0 0.0
      %2635 = vmatpush1.msra.mxu0 %v2596
      %2636 = vmatprep.subr.mxu0 0.0
      %2637 = vmatpush1.msra.mxu0 0.0
      %2638 = vmatprep.subr.mxu0 0.0
      %2639 = vmatpush1.msra.mxu0 0.0
      %2640 = vmatprep.subr.mxu0 0.0
      %2641 = vmatpush1.msra.mxu0 0.0
      %2642 = vmatprep.subr.mxu0 0.0
      %2643 = vmatpush1.msra.mxu0 0.0
      %2644 = vmatprep.subr.mxu0 0.0
      %2645 = vmatpush1.msra.mxu0 0.0
      %2646 = vmatprep.subr.mxu0 0.0
      %2647 = vmatpush1.msra.mxu0 0.0
      %2648 = vmatprep.subr.mxu0 0.0
      %2649 = vmatpush1.msra.mxu0 0.0
      %2650 = vmatprep.subr.mxu0 0.0
      %2651 = vmatpush1.msra.mxu0 0.0
      %2652 = vmatprep.subr.mxu0 0.0
      %2653 = vmatpush1.msra.mxu0 0.0
      %2654 = vmatprep.subr.mxu0 0.0
      %2655 = vmatpush1.msra.mxu0 0.0
      %2656 = vmatprep.subr.mxu0 0.0
      %2657 = vmatpush1.msra.mxu0 0.0
      %2658 = vmatprep.subr.mxu0 0.0
      %2659 = vmatpush1.msra.mxu0 0.0
      %2660 = vmatprep.subr.mxu0 0.0
      %2661 = vmatpush1.msra.mxu0 0.0
      %2662 = vmatprep.mubr.f32.mxu0 %v2590
      %2663 = vmatmul.mubr.f32.gmra.mrb[0].mxu0 %v2565
      %v2664 = vpop.f32.mrb[0].mxu0
      %v2665 = vadd.f32 0.0, %v2664
      %v2666 = vpop.f32.mrb[0].mxu0
      %2667 = vmatprep.mubr.f32.mxu0 %v2593
      %2668 = vmatmul.mubr.f32.gmra.mrb[0].mxu0 %v2567
      %v2669 = vpop.f32.mrb[0].mxu0
      %v2670 = vadd.f32 0.0, %v2669
      %v2671 = vpop.f32.mrb[0].mxu0
      %2672 = vdwg.mxu0
      %vm2673 = vcmp.ge.f32.partialorder %v2665, 0.0
      %vm2674 = vcmp.ge.f32.partialorder %v2670, 0.0
      %v2675 = vmul.f32 %v2665, 0.01
      %v2676 = vmul.f32 %v2670, 0.01
      %v2677 = vsel %vm2673, %v2665, %v2675
      %v2678 = vsel %vm2674, %v2670, %v2676
      %v2679 = vld [vmem:[%s1 + $0x25a] ss:$0 sm:$0xff]
      %v2680 = vmul.f32 %v2677, %v2679
      %v2681 = vmul.f32 %v2678, %v2679
      %2684 = vrot.lane.b32.xlu0 %v2680, 7
      %v2685 = vpop.permute.xlu0 %2684
      %2686 = vrot.lane.b32.xlu0 %v2681, 7
      %v2687 = vpop.permute.xlu0 %2686
      %2690 = vst.msk [vmem:[#allocation5] sm:$0xff] %vm2459, %v2685
      %2691 = vst.msk [vmem:[#allocation5 + $0x8] sm:$0xff] %vm2459, %v2687
      %v2692 = vld [vmem:[#allocation5] sm:$0xff]
      %v2693 = vld [vmem:[#allocation5 + $0x8] sm:$0xff]
      %2694 = vst.msk [vmem:[#allocation7] sm:$0xff] %vm2464, %v2692
      %2695 = vst.msk [vmem:[#allocation7 + $0x18] sm:$0xff] %vm2464, %v2693
      %v2696 = vld [vmem:[#allocation5] sm:$0xff]
      %v2697 = vld [vmem:[#allocation5 + $0x8] sm:$0xff]
      %2700 = vrot.lane.b32.xlu0 %v2696, 127
      %v2701 = vpop.permute.xlu0 %2700
      %2702 = vrot.lane.b32.xlu0 %v2697, 127
      %v2703 = vpop.permute.xlu0 %2702
      %2706 = vst.msk [vmem:[#allocation7 + $0x30] sm:$0xff] %vm2464, %v2701
      %2707 = vst.msk [vmem:[#allocation7 + $0x48] sm:$0xff] %vm2464, %v2703
      %v2708 = vld [vmem:[#allocation5] sm:$0xff]
      %v2709 = vld [vmem:[#allocation5 + $0x8] sm:$0xff]
      %2712 = vrot.lane.b32.xlu0 %v2708, 126
      %v2713 = vpop.permute.xlu0 %2712
      %2714 = vrot.lane.b32.xlu0 %v2709, 126
      %v2715 = vpop.permute.xlu0 %2714
      %2718 = vst.msk [vmem:[#allocation7 + $0x60] sm:$0xff] %vm2464, %v2713
      %2719 = vst.msk [vmem:[#allocation7 + $0x78] sm:$0xff] %vm2464, %v2715
      %v2720 = vld [vmem:[#allocation5] sm:$0xff]
      %v2721 = vld [vmem:[#allocation5 + $0x8] sm:$0xff]
      %2724 = vrot.lane.b32.xlu0 %v2720, 122
      %v2725 = vpop.permute.xlu0 %2724
      %2726 = vrot.lane.b32.xlu0 %v2721, 122
      %v2727 = vpop.permute.xlu0 %2726
      %2730 = vst.msk [vmem:[#allocation7 + $0x90] sm:$0xff] %vm2464, %v2725
      %2731 = vst.msk [vmem:[#allocation7 + $0xa8] sm:$0xff] %vm2464, %v2727
      %v2732 = vld [vmem:[#allocation5] sm:$0xff]
      %v2733 = vld [vmem:[#allocation5 + $0x8] sm:$0xff]
      %2736 = vrot.lane.b32.xlu0 %v2732, 121
      %v2737 = vpop.permute.xlu0 %2736
      %2738 = vrot.lane.b32.xlu0 %v2733, 121
      %v2739 = vpop.permute.xlu0 %2738
      %2742 = vst.msk [vmem:[#allocation7 + $0xc0] sm:$0xff] %vm2464, %v2737
      %2743 = vst.msk [vmem:[#allocation7 + $0xd8] sm:$0xff] %vm2464, %v2739
      %v2744 = vld [vmem:[#allocation5] sm:$0xff]
      %v2745 = vld [vmem:[#allocation5 + $0x8] sm:$0xff]
      %2748 = vrot.lane.b32.xlu0 %v2744, 120
      %v2749 = vpop.permute.xlu0 %2748
      %2750 = vrot.lane.b32.xlu0 %v2745, 120
      %v2751 = vpop.permute.xlu0 %2750
      %2754 = vst.msk [vmem:[#allocation7 + $0xf0] sm:$0xff] %vm2464, %v2749
      %2755 = vst.msk [vmem:[#allocation7 + $0x108] sm:$0xff] %vm2464, %v2751
      %v2756 = vld [vmem:[#allocation5] sm:$0xff]
      %v2757 = vld [vmem:[#allocation5 + $0x8] sm:$0xff]
      %2760 = vrot.lane.b32.xlu0 %v2756, 116
      %v2761 = vpop.permute.xlu0 %2760
      %2762 = vrot.lane.b32.xlu0 %v2757, 116
      %v2763 = vpop.permute.xlu0 %2762
      %2766 = vst.msk [vmem:[#allocation7 + $0x120] sm:$0xff] %vm2464, %v2761
      %2767 = vst.msk [vmem:[#allocation7 + $0x138] sm:$0xff] %vm2464, %v2763
      %v2768 = vld [vmem:[#allocation5] sm:$0xff]
      %v2769 = vld [vmem:[#allocation5 + $0x8] sm:$0xff]
      %2772 = vrot.lane.b32.xlu0 %v2768, 115
      %v2773 = vpop.permute.xlu0 %2772
      %2774 = vrot.lane.b32.xlu0 %v2769, 115
      %v2775 = vpop.permute.xlu0 %2774
      %2778 = vst.msk [vmem:[#allocation7 + $0x150] sm:$0xff] %vm2464, %v2773
      %2779 = vst.msk [vmem:[#allocation7 + $0x168] sm:$0xff] %vm2464, %v2775
      %v2780 = vld [vmem:[#allocation5] sm:$0xff]
      %v2781 = vld [vmem:[#allocation5 + $0x8] sm:$0xff]
      %2784 = vrot.lane.b32.xlu0 %v2780, 114
      %v2785 = vpop.permute.xlu0 %2784
      %2786 = vrot.lane.b32.xlu0 %v2781, 114
      %v2787 = vpop.permute.xlu0 %2786
      %2790 = vst.msk [vmem:[#allocation7 + $0x180] sm:$0xff] %vm2464, %v2785
      %2791 = vst.msk [vmem:[#allocation7 + $0x198] sm:$0xff] %vm2464, %v2787
      %2792 = vst.msk [vmem:[#allocation7 + $0x1b0] sm:$0x1] %vm2563, 1.0
      %v2793 = vld [vmem:[%s1 + $0xd8] sm:$0xff]
      %v2794 = vld [vmem:[%s1 + $0xe0] sm:$0xff]
      %v2795 = vld [vmem:[%s1 + $0xf0] sm:$0xff]
      %v2796 = vld [vmem:[%s1 + $0xf8] sm:$0xff]
      %v2797 = vld [vmem:[%s1 + $0x108] sm:$0xff]
      %v2798 = vld [vmem:[%s1 + $0x110] sm:$0xff]
      %v2799 = vld [vmem:[%s1 + $0x120] sm:$0xff]
      %v2800 = vld [vmem:[%s1 + $0x128] sm:$0xff]
      %v2801 = vld [vmem:[#allocation7] sm:$0xff]
      %v2802 = vld [vmem:[#allocation7 + $0x18] sm:$0xff]
      %v2803 = vld [vmem:[#allocation7 + $0x30] sm:$0xff]
      %v2804 = vld [vmem:[#allocation7 + $0x48] sm:$0xff]
      %v2805 = vld [vmem:[#allocation7 + $0x60] sm:$0xff]
      %v2806 = vld [vmem:[#allocation7 + $0x78] sm:$0xff]
      %v2807 = vld [vmem:[#allocation7 + $0x90] sm:$0xff]
      %v2808 = vld [vmem:[#allocation7 + $0xa8] sm:$0xff]
      %v2809 = vld [vmem:[#allocation7 + $0xc0] sm:$0xff]
      %v2810 = vld [vmem:[#allocation7 + $0xd8] sm:$0xff]
      %v2811 = vld [vmem:[#allocation7 + $0xf0] sm:$0xff]
      %v2812 = vld [vmem:[#allocation7 + $0x108] sm:$0xff]
      %v2813 = vld [vmem:[#allocation7 + $0x120] sm:$0xff]
      %v2814 = vld [vmem:[#allocation7 + $0x138] sm:$0xff]
      %v2815 = vld [vmem:[#allocation7 + $0x150] sm:$0xff]
      %v2816 = vld [vmem:[#allocation7 + $0x168] sm:$0xff]
      %v2817 = vld [vmem:[#allocation7 + $0x180] sm:$0xff]
      %v2818 = vld [vmem:[#allocation7 + $0x198] sm:$0xff]
      %v2819 = vld [vmem:[#allocation7 + $0x1b0] sm:$0x1]
      %v2821 = vsel %vm2588, %v2794, 0
      %v2824 = vsel %vm2588, %v2796, 0
      %v2827 = vsel %vm2588, %v2798, 0
      %v2830 = vsel %vm2588, %v2800, 0
      %v2833 = vsel %vm2112, %v2819, 0
      %2835 = vmatprep.subr.mxu0 0.0
      %2836 = vmatpush1.msra.mxu0 %v2801
      %2837 = vmatprep.subr.mxu0 0.0
      %2838 = vmatpush1.msra.mxu0 %v2802
      %2839 = vmatprep.subr.mxu0 0.0
      %2840 = vmatpush1.msra.mxu0 %v2803
      %2841 = vmatprep.subr.mxu0 0.0
      %2842 = vmatpush1.msra.mxu0 %v2804
      %2843 = vmatprep.subr.mxu0 0.0
      %2844 = vmatpush1.msra.mxu0 %v2805
      %2845 = vmatprep.subr.mxu0 0.0
      %2846 = vmatpush1.msra.mxu0 %v2806
      %2847 = vmatprep.subr.mxu0 0.0
      %2848 = vmatpush1.msra.mxu0 %v2807
      %2849 = vmatprep.subr.mxu0 0.0
      %2850 = vmatpush1.msra.mxu0 %v2808
      %2851 = vmatprep.subr.mxu0 0.0
      %2852 = vmatpush1.msra.mxu0 %v2809
      %2853 = vmatprep.subr.mxu0 0.0
      %2854 = vmatpush1.msra.mxu0 %v2810
      %2855 = vmatprep.subr.mxu0 0.0
      %2856 = vmatpush1.msra.mxu0 %v2811
      %2857 = vmatprep.subr.mxu0 0.0
      %2858 = vmatpush1.msra.mxu0 %v2812
      %2859 = vmatprep.subr.mxu0 0.0
      %2860 = vmatpush1.msra.mxu0 %v2813
      %2861 = vmatprep.subr.mxu0 0.0
      %2862 = vmatpush1.msra.mxu0 %v2814
      %2863 = vmatprep.subr.mxu0 0.0
      %2864 = vmatpush1.msra.mxu0 %v2815
      %2865 = vmatprep.subr.mxu0 0.0
      %2866 = vmatpush1.msra.mxu0 %v2816
      %2867 = vmatprep.subr.mxu0 0.0
      %2868 = vmatpush1.msra.mxu0 %v2817
      %2869 = vmatprep.subr.mxu0 0.0
      %2870 = vmatpush1.msra.mxu0 %v2818
      %2871 = vmatprep.subr.mxu0 0.0
      %2872 = vmatpush1.msra.mxu0 %v2833
      %2873 = vmatprep.subr.mxu0 0.0
      %2874 = vmatpush1.msra.mxu0 0.0
      %2875 = vmatprep.subr.mxu0 0.0
      %2876 = vmatpush1.msra.mxu0 0.0
      %2877 = vmatprep.subr.mxu0 0.0
      %2878 = vmatpush1.msra.mxu0 0.0
      %2879 = vmatprep.subr.mxu0 0.0
      %2880 = vmatpush1.msra.mxu0 0.0
      %2881 = vmatprep.subr.mxu0 0.0
      %2882 = vmatpush1.msra.mxu0 0.0
      %2883 = vmatprep.subr.mxu0 0.0
      %2884 = vmatpush1.msra.mxu0 0.0
      %2885 = vmatprep.subr.mxu0 0.0
      %2886 = vmatpush1.msra.mxu0 0.0
      %2887 = vmatprep.subr.mxu0 0.0
      %2888 = vmatpush1.msra.mxu0 0.0
      %2889 = vmatprep.subr.mxu0 0.0
      %2890 = vmatpush1.msra.mxu0 0.0
      %2891 = vmatprep.subr.mxu0 0.0
      %2892 = vmatpush1.msra.mxu0 0.0
      %2893 = vmatprep.subr.mxu0 0.0
      %2894 = vmatpush1.msra.mxu0 0.0
      %2895 = vmatprep.subr.mxu0 0.0
      %2896 = vmatpush1.msra.mxu0 0.0
      %2897 = vmatprep.subr.mxu0 0.0
      %2898 = vmatpush1.msra.mxu0 0.0
      %2899 = vmatprep.mubr.f32.mxu0 %v2821
      %2900 = vmatmul.mubr.f32.gmra.mrb[0].mxu0 %v2793
      %v2901 = vpop.f32.mrb[0].mxu0
      %v2902 = vadd.f32 0.0, %v2901
      %v2903 = vpop.f32.mrb[0].mxu0
      %2904 = vmatprep.mubr.f32.mxu0 %v2824
      %2905 = vmatmul.mubr.f32.gmra.mrb[0].mxu0 %v2795
      %v2906 = vpop.f32.mrb[0].mxu0
      %v2907 = vadd.f32 0.0, %v2906
      %v2908 = vpop.f32.mrb[0].mxu0
      %2909 = vmatprep.mubr.f32.mxu0 %v2827
      %2910 = vmatmul.mubr.f32.gmra.mrb[0].mxu0 %v2797
      %v2911 = vpop.f32.mrb[0].mxu0
      %v2912 = vadd.f32 0.0, %v2911
      %v2913 = vpop.f32.mrb[0].mxu0
      %2914 = vmatprep.mubr.f32.mxu0 %v2830
      %2915 = vmatmul.mubr.f32.gmra.mrb[0].mxu0 %v2799
      %v2916 = vpop.f32.mrb[0].mxu0
      %v2917 = vadd.f32 0.0, %v2916
      %v2918 = vpop.f32.mrb[0].mxu0
      %2919 = vdwg.mxu0
      %2920 = vst.msk [vmem:[%s322] sm:$0xff] %vm2464, %v2902
      %2921 = vst.msk [vmem:[%s322 + $0x8] sm:$0xff] %vm2464, %v2907
      %2922 = vst.msk [vmem:[%s322 + $0x10] sm:$0xff] %vm2464, %v2912
      %2923 = vst.msk [vmem:[%s322 + $0x18] sm:$0xff] %vm2464, %v2917
      %vm2924 = vcmask 39936
      %2925 = vst.msk [vmem:[#allocation6] sm:$0xff] %vm2924, 0.0
      %2926 = vst.msk [vmem:[#allocation6 + $0x8] sm:$0xff] %vm2924, 0.0
      %2927 = vst.msk [vmem:[#allocation6 + $0x10] sm:$0xff] %vm2924, 0.0
      %2928 = vst.msk [vmem:[#allocation6 + $0x18] sm:$0xff] %vm2924, 0.0
      %vm2929 = vcmask 130136
      %2930 = vst.msk [vmem:[#allocation6] sm:$0xff] %vm2929, 0.0
      %2931 = vst.msk [vmem:[#allocation6 + $0x8] sm:$0xff] %vm2929, 0.0
      %2932 = vst.msk [vmem:[#allocation6 + $0x10] sm:$0xff] %vm2929, 0.0
      %2933 = vst.msk [vmem:[#allocation6 + $0x18] sm:$0xff] %vm2929, 0.0
      %v2934 = vld [vmem:[%s2 + $0x170] sm:$0xff]
      %v2935 = vld [vmem:[%s2 + $0x178] sm:$0xff]
      %v2936 = vld [vmem:[%s2 + $0x180] sm:$0x3f]
      %vm2937 = vcmp.ge.f32.partialorder %v2902, 0.0
      %vm2938 = vcmp.ge.f32.partialorder %v2907, 0.0
      %vm2939 = vcmp.ge.f32.partialorder %v2912, 0.0
      %vm2940 = vcmp.ge.f32.partialorder %v2917, 0.0
      %v2941 = vmul.f32 %v2902, 0.01
      %v2942 = vmul.f32 %v2907, 0.01
      %v2943 = vmul.f32 %v2912, 0.01
      %v2944 = vmul.f32 %v2917, 0.01
      %v2945 = vsel %vm2937, %v2902, %v2941
      %v2946 = vsel %vm2938, %v2907, %v2942
      %v2947 = vsel %vm2939, %v2912, %v2943
      %v2948 = vsel %vm2940, %v2917, %v2944
      %v2950 = vsel %vm2464, %v2945, 0
      %v2953 = vsel %vm2464, %v2946, 0
      %v2956 = vsel %vm2464, %v2947, 0
      %v2959 = vsel %vm2464, %v2948, 0
      %v2962 = vsel %vm1894, %v2936, 0
      %2964 = vmatprep.subr.mxu0 0.0
      %2965 = vmatpush1.msra.mxu0 %v2934
      %2966 = vmatprep.subr.mxu0 0.0
      %2967 = vmatpush1.msra.mxu0 %v2935
      %2968 = vmatprep.subr.mxu0 0.0
      %2969 = vmatpush1.msra.mxu0 %v2962
      %2970 = vmatprep.subr.mxu0 0.0
      %2971 = vmatpush1.msra.mxu0 0.0
      %2972 = vmatprep.subr.mxu0 0.0
      %2973 = vmatpush1.msra.mxu0 0.0
      %2974 = vmatprep.subr.mxu0 0.0
      %2975 = vmatpush1.msra.mxu0 0.0
      %2976 = vmatprep.subr.mxu0 0.0
      %2977 = vmatpush1.msra.mxu0 0.0
      %2978 = vmatprep.subr.mxu0 0.0
      %2979 = vmatpush1.msra.mxu0 0.0
      %2980 = vmatprep.subr.mxu0 0.0
      %2981 = vmatpush1.msra.mxu0 0.0
      %2982 = vmatprep.subr.mxu0 0.0
      %2983 = vmatpush1.msra.mxu0 0.0
      %2984 = vmatprep.subr.mxu0 0.0
      %2985 = vmatpush1.msra.mxu0 0.0
      %2986 = vmatprep.subr.mxu0 0.0
      %2987 = vmatpush1.msra.mxu0 0.0
      %2988 = vmatprep.subr.mxu0 0.0
      %2989 = vmatpush1.msra.mxu0 0.0
      %2990 = vmatprep.subr.mxu0 0.0
      %2991 = vmatpush1.msra.mxu0 0.0
      %2992 = vmatprep.subr.mxu0 0.0
      %2993 = vmatpush1.msra.mxu0 0.0
      %2994 = vmatprep.subr.mxu0 0.0
      %2995 = vmatpush1.msra.mxu0 0.0
      %2996 = vmatprep.subr.mxu0 0.0
      %2997 = vmatpush1.msra.mxu0 0.0
      %2998 = vmatprep.subr.mxu0 0.0
      %2999 = vmatpush1.msra.mxu0 0.0
      %3000 = vmatprep.subr.mxu0 0.0
      %3001 = vmatpush1.msra.mxu0 0.0
      %3002 = vmatprep.subr.mxu0 0.0
      %3003 = vmatpush1.msra.mxu0 0.0
      %3004 = vmatprep.subr.mxu0 0.0
      %3005 = vmatpush1.msra.mxu0 0.0
      %3006 = vmatprep.subr.mxu0 0.0
      %3007 = vmatpush1.msra.mxu0 0.0
      %3008 = vmatprep.subr.mxu0 0.0
      %3009 = vmatpush1.msra.mxu0 0.0
      %3010 = vmatprep.subr.mxu0 0.0
      %3011 = vmatpush1.msra.mxu0 0.0
      %3012 = vmatprep.subr.mxu0 0.0
      %3013 = vmatpush1.msra.mxu0 0.0
      %3014 = vmatprep.subr.mxu0 0.0
      %3015 = vmatpush1.msra.mxu0 0.0
      %3016 = vmatprep.subr.mxu0 0.0
      %3017 = vmatpush1.msra.mxu0 0.0
      %3018 = vmatprep.subr.mxu0 0.0
      %3019 = vmatpush1.msra.mxu0 0.0
      %3020 = vmatprep.subr.mxu0 0.0
      %3021 = vmatpush1.msra.mxu0 0.0
      %3022 = vmatprep.subr.mxu0 0.0
      %3023 = vmatpush1.msra.mxu0 0.0
      %3024 = vmatprep.subr.mxu0 0.0
      %3025 = vmatpush1.msra.mxu0 0.0
      %3026 = vmatprep.subr.mxu0 0.0
      %3027 = vmatpush1.msra.mxu0 0.0
      %3028 = vmatprep.mubr.f32.mxu0 0.0
      %3029 = vmatmul.mubr.f32.gmra.mrb[0].mxu0 %v2950
      %v3030 = vpop.f32.mrb[0].mxu0
      %v3031 = vadd.f32 0.0, %v3030
      %v3032 = vpop.f32.mrb[0].mxu0
      %3033 = vmatprep.mubr.f32.mxu0 0.0
      %3034 = vmatmul.mubr.f32.gmra.mrb[0].mxu0 %v2953
      %v3035 = vpop.f32.mrb[0].mxu0
      %v3036 = vadd.f32 0.0, %v3035
      %v3037 = vpop.f32.mrb[0].mxu0
      %3038 = vmatprep.mubr.f32.mxu0 0.0
      %3039 = vmatmul.mubr.f32.gmra.mrb[0].mxu0 %v2956
      %v3040 = vpop.f32.mrb[0].mxu0
      %v3041 = vadd.f32 0.0, %v3040
      %v3042 = vpop.f32.mrb[0].mxu0
      %3043 = vmatprep.mubr.f32.mxu0 0.0
      %3044 = vmatmul.mubr.f32.gmra.mrb[0].mxu0 %v2959
      %v3045 = vpop.f32.mrb[0].mxu0
      %v3046 = vadd.f32 0.0, %v3045
      %v3047 = vpop.f32.mrb[0].mxu0
      %3048 = vdwg.mxu0
      %3053 = vrot.lane.b32.xlu0 %v3031, 5
      %v3054 = vpop.permute.xlu0 %3053
      %3055 = vrot.lane.b32.xlu0 %v3036, 5
      %v3056 = vpop.permute.xlu0 %3055
      %3057 = vrot.lane.b32.xlu0 %v3041, 5
      %v3058 = vpop.permute.xlu0 %3057
      %3059 = vrot.lane.b32.xlu0 %v3046, 5
      %v3060 = vpop.permute.xlu0 %3059
      %vm3065 = vcmask 89128
      %3066 = vst.msk [vmem:[#allocation6] sm:$0xff] %vm3065, %v3054
      %3067 = vst.msk [vmem:[#allocation6 + $0x8] sm:$0xff] %vm3065, %v3056
      %3068 = vst.msk [vmem:[#allocation6 + $0x10] sm:$0xff] %vm3065, %v3058
      %3069 = vst.msk [vmem:[#allocation6 + $0x18] sm:$0xff] %vm3065, %v3060
      %v3070 = vld [vmem:[#allocation6] sm:$0xff]
      %v3071 = vld [vmem:[#allocation6 + $0x8] sm:$0xff]
      %v3072 = vld [vmem:[#allocation6 + $0x10] sm:$0xff]
      %v3073 = vld [vmem:[#allocation6 + $0x18] sm:$0xff]
      %vm3074 = vcmask 48128
      %3075 = vst.msk [vmem:[#allocation7] sm:$0xff] %vm3074, %v3070
      %3076 = vst.msk [vmem:[#allocation7 + $0x18] sm:$0xff] %vm3074, %v3071
      %3077 = vst.msk [vmem:[#allocation7 + $0x30] sm:$0xff] %vm3074, %v3072
      %3078 = vst.msk [vmem:[#allocation7 + $0x48] sm:$0xff] %vm3074, %v3073
      %v3079 = vld [vmem:[#allocation6] sm:$0xff]
      %v3080 = vld [vmem:[#allocation6 + $0x8] sm:$0xff]
      %v3081 = vld [vmem:[#allocation6 + $0x10] sm:$0xff]
      %v3082 = vld [vmem:[#allocation6 + $0x18] sm:$0xff]
      %3087 = vrot.lane.b32.xlu0 %v3079, 127
      %v3088 = vpop.permute.xlu0 %3087
      %3089 = vrot.lane.b32.xlu0 %v3080, 127
      %v3090 = vpop.permute.xlu0 %3089
      %3091 = vrot.lane.b32.xlu0 %v3081, 127
      %v3092 = vpop.permute.xlu0 %3091
      %3093 = vrot.lane.b32.xlu0 %v3082, 127
      %v3094 = vpop.permute.xlu0 %3093
      %3099 = vst.msk [vmem:[#allocation7 + $0x60] sm:$0xff] %vm3074, %v3088
      %3100 = vst.msk [vmem:[#allocation7 + $0x78] sm:$0xff] %vm3074, %v3090
      %3101 = vst.msk [vmem:[#allocation7 + $0x90] sm:$0xff] %vm3074, %v3092
      %3102 = vst.msk [vmem:[#allocation7 + $0xa8] sm:$0xff] %vm3074, %v3094
      %v3103 = vld [vmem:[#allocation6] sm:$0xff]
      %v3104 = vld [vmem:[#allocation6 + $0x8] sm:$0xff]
      %v3105 = vld [vmem:[#allocation6 + $0x10] sm:$0xff]
      %v3106 = vld [vmem:[#allocation6 + $0x18] sm:$0xff]
      %3111 = vrot.lane.b32.xlu0 %v3103, 126
      %v3112 = vpop.permute.xlu0 %3111
      %3113 = vrot.lane.b32.xlu0 %v3104, 126
      %v3114 = vpop.permute.xlu0 %3113
      %3115 = vrot.lane.b32.xlu0 %v3105, 126
      %v3116 = vpop.permute.xlu0 %3115
      %3117 = vrot.lane.b32.xlu0 %v3106, 126
      %v3118 = vpop.permute.xlu0 %3117
      %3123 = vst.msk [vmem:[#allocation7 + $0xc0] sm:$0xff] %vm3074, %v3112
      %3124 = vst.msk [vmem:[#allocation7 + $0xd8] sm:$0xff] %vm3074, %v3114
      %3125 = vst.msk [vmem:[#allocation7 + $0xf0] sm:$0xff] %vm3074, %v3116
      %3126 = vst.msk [vmem:[#allocation7 + $0x108] sm:$0xff] %vm3074, %v3118
      %v3127 = vld [vmem:[#allocation6] sm:$0xff]
      %v3128 = vld [vmem:[#allocation6 + $0x8] sm:$0xff]
      %v3129 = vld [vmem:[#allocation6 + $0x10] sm:$0xff]
      %v3130 = vld [vmem:[#allocation6 + $0x18] sm:$0xff]
      %3135 = vrot.lane.b32.xlu0 %v3127, 124
      %v3136 = vpop.permute.xlu0 %3135
      %3137 = vrot.lane.b32.xlu0 %v3128, 124
      %v3138 = vpop.permute.xlu0 %3137
      %3139 = vrot.lane.b32.xlu0 %v3129, 124
      %v3140 = vpop.permute.xlu0 %3139
      %3141 = vrot.lane.b32.xlu0 %v3130, 124
      %v3142 = vpop.permute.xlu0 %3141
      %3147 = vst.msk [vmem:[#allocation7 + $0x120] sm:$0xff] %vm3074, %v3136
      %3148 = vst.msk [vmem:[#allocation7 + $0x138] sm:$0xff] %vm3074, %v3138
      %3149 = vst.msk [vmem:[#allocation7 + $0x150] sm:$0xff] %vm3074, %v3140
      %3150 = vst.msk [vmem:[#allocation7 + $0x168] sm:$0xff] %vm3074, %v3142
      %v3151 = vld [vmem:[#allocation6] sm:$0xff]
      %v3152 = vld [vmem:[#allocation6 + $0x8] sm:$0xff]
      %v3153 = vld [vmem:[#allocation6 + $0x10] sm:$0xff]
      %v3154 = vld [vmem:[#allocation6 + $0x18] sm:$0xff]
      %3159 = vrot.lane.b32.xlu0 %v3151, 123
      %v3160 = vpop.permute.xlu0 %3159
      %3161 = vrot.lane.b32.xlu0 %v3152, 123
      %v3162 = vpop.permute.xlu0 %3161
      %3163 = vrot.lane.b32.xlu0 %v3153, 123
      %v3164 = vpop.permute.xlu0 %3163
      %3165 = vrot.lane.b32.xlu0 %v3154, 123
      %v3166 = vpop.permute.xlu0 %3165
      %3171 = vst.msk [vmem:[#allocation7 + $0x180] sm:$0xff] %vm3074, %v3160
      %3172 = vst.msk [vmem:[#allocation7 + $0x198] sm:$0xff] %vm3074, %v3162
      %3173 = vst.msk [vmem:[#allocation7 + $0x1b0] sm:$0xff] %vm3074, %v3164
      %3174 = vst.msk [vmem:[#allocation7 + $0x1c8] sm:$0xff] %vm3074, %v3166
      %v3175 = vld [vmem:[#allocation6] sm:$0xff]
      %v3176 = vld [vmem:[#allocation6 + $0x8] sm:$0xff]
      %v3177 = vld [vmem:[#allocation6 + $0x10] sm:$0xff]
      %v3178 = vld [vmem:[#allocation6 + $0x18] sm:$0xff]
      %3183 = vrot.lane.b32.xlu0 %v3175, 122
      %v3184 = vpop.permute.xlu0 %3183
      %3185 = vrot.lane.b32.xlu0 %v3176, 122
      %v3186 = vpop.permute.xlu0 %3185
      %3187 = vrot.lane.b32.xlu0 %v3177, 122
      %v3188 = vpop.permute.xlu0 %3187
      %3189 = vrot.lane.b32.xlu0 %v3178, 122
      %v3190 = vpop.permute.xlu0 %3189
      %3195 = vst.msk [vmem:[#allocation7 + $0x1e0] sm:$0xff] %vm3074, %v3184
      %3196 = vst.msk [vmem:[#allocation7 + $0x1f8] sm:$0xff] %vm3074, %v3186
      %3197 = vst.msk [vmem:[#allocation7 + $0x210] sm:$0xff] %vm3074, %v3188
      %3198 = vst.msk [vmem:[#allocation7 + $0x228] sm:$0xff] %vm3074, %v3190
      %v3199 = vld [vmem:[#allocation6] sm:$0xff]
      %v3200 = vld [vmem:[#allocation6 + $0x8] sm:$0xff]
      %v3201 = vld [vmem:[#allocation6 + $0x10] sm:$0xff]
      %v3202 = vld [vmem:[#allocation6 + $0x18] sm:$0xff]
      %3207 = vrot.lane.b32.xlu0 %v3199, 120
      %v3208 = vpop.permute.xlu0 %3207
      %3209 = vrot.lane.b32.xlu0 %v3200, 120
      %v3210 = vpop.permute.xlu0 %3209
      %3211 = vrot.lane.b32.xlu0 %v3201, 120
      %v3212 = vpop.permute.xlu0 %3211
      %3213 = vrot.lane.b32.xlu0 %v3202, 120
      %v3214 = vpop.permute.xlu0 %3213
      %3219 = vst.msk [vmem:[#allocation7 + $0x240] sm:$0xff] %vm3074, %v3208
      %3220 = vst.msk [vmem:[#allocation7 + $0x258] sm:$0xff] %vm3074, %v3210
      %3221 = vst.msk [vmem:[#allocation7 + $0x270] sm:$0xff] %vm3074, %v3212
      %3222 = vst.msk [vmem:[#allocation7 + $0x288] sm:$0xff] %vm3074, %v3214
      %v3223 = vld [vmem:[#allocation6] sm:$0xff]
      %v3224 = vld [vmem:[#allocation6 + $0x8] sm:$0xff]
      %v3225 = vld [vmem:[#allocation6 + $0x10] sm:$0xff]
      %v3226 = vld [vmem:[#allocation6 + $0x18] sm:$0xff]
      %3231 = vrot.lane.b32.xlu0 %v3223, 119
      %v3232 = vpop.permute.xlu0 %3231
      %3233 = vrot.lane.b32.xlu0 %v3224, 119
      %v3234 = vpop.permute.xlu0 %3233
      %3235 = vrot.lane.b32.xlu0 %v3225, 119
      %v3236 = vpop.permute.xlu0 %3235
      %3237 = vrot.lane.b32.xlu0 %v3226, 119
      %v3238 = vpop.permute.xlu0 %3237
      %3243 = vst.msk [vmem:[#allocation7 + $0x2a0] sm:$0xff] %vm3074, %v3232
      %3244 = vst.msk [vmem:[#allocation7 + $0x2b8] sm:$0xff] %vm3074, %v3234
      %3245 = vst.msk [vmem:[#allocation7 + $0x2d0] sm:$0xff] %vm3074, %v3236
      %3246 = vst.msk [vmem:[#allocation7 + $0x2e8] sm:$0xff] %vm3074, %v3238
      %v3247 = vld [vmem:[#allocation6] sm:$0xff]
      %v3248 = vld [vmem:[#allocation6 + $0x8] sm:$0xff]
      %v3249 = vld [vmem:[#allocation6 + $0x10] sm:$0xff]
      %v3250 = vld [vmem:[#allocation6 + $0x18] sm:$0xff]
      %3255 = vrot.lane.b32.xlu0 %v3247, 118
      %v3256 = vpop.permute.xlu0 %3255
      %3257 = vrot.lane.b32.xlu0 %v3248, 118
      %v3258 = vpop.permute.xlu0 %3257
      %3259 = vrot.lane.b32.xlu0 %v3249, 118
      %v3260 = vpop.permute.xlu0 %3259
      %3261 = vrot.lane.b32.xlu0 %v3250, 118
      %v3262 = vpop.permute.xlu0 %3261
      %3267 = vst.msk [vmem:[#allocation7 + $0x300] sm:$0xff] %vm3074, %v3256
      %3268 = vst.msk [vmem:[#allocation7 + $0x318] sm:$0xff] %vm3074, %v3258
      %3269 = vst.msk [vmem:[#allocation7 + $0x330] sm:$0xff] %vm3074, %v3260
      %3270 = vst.msk [vmem:[#allocation7 + $0x348] sm:$0xff] %vm3074, %v3262
      %vm3271 = vcmask 40960
      %3272 = vst.msk [vmem:[#allocation7 + $0x360] sm:$0x1] %vm3271, 1.0
      %v3273 = vld [vmem:[%s1 + $0x138] sm:$0xff]
      %v3274 = vld [vmem:[%s1 + $0x140] sm:$0xff]
      %v3275 = vld [vmem:[%s1 + $0x148] sm:$0xff]
      %v3276 = vld [vmem:[%s1 + $0x150] sm:$0xff]
      %v3277 = vld [vmem:[%s1 + $0x158] sm:$0xff]
      %v3278 = vld [vmem:[%s1 + $0x160] sm:$0xff]
      %v3279 = vld [vmem:[%s1 + $0x168] sm:$0xff]
      %v3280 = vld [vmem:[%s1 + $0x170] sm:$0xff]
      %v3281 = vld [vmem:[%s1 + $0x178] sm:$0xff]
      %v3282 = vld [vmem:[%s1 + $0x180] sm:$0xff]
      %v3283 = vld [vmem:[%s1 + $0x188] sm:$0xff]
      %v3284 = vld [vmem:[%s1 + $0x190] sm:$0xff]
      %v3285 = vld [vmem:[#allocation7] sm:$0xff]
      %v3286 = vld [vmem:[#allocation7 + $0x18] sm:$0xff]
      %v3287 = vld [vmem:[#allocation7 + $0x30] sm:$0xff]
      %v3288 = vld [vmem:[#allocation7 + $0x48] sm:$0xff]
      %v3289 = vld [vmem:[#allocation7 + $0x60] sm:$0xff]
      %v3290 = vld [vmem:[#allocation7 + $0x78] sm:$0xff]
      %v3291 = vld [vmem:[#allocation7 + $0x90] sm:$0xff]
      %v3292 = vld [vmem:[#allocation7 + $0xa8] sm:$0xff]
      %v3293 = vld [vmem:[#allocation7 + $0xc0] sm:$0xff]
      %v3294 = vld [vmem:[#allocation7 + $0xd8] sm:$0xff]
      %v3295 = vld [vmem:[#allocation7 + $0xf0] sm:$0xff]
      %v3296 = vld [vmem:[#allocation7 + $0x108] sm:$0xff]
      %v3297 = vld [vmem:[#allocation7 + $0x120] sm:$0xff]
      %v3298 = vld [vmem:[#allocation7 + $0x138] sm:$0xff]
      %v3299 = vld [vmem:[#allocation7 + $0x150] sm:$0xff]
      %v3300 = vld [vmem:[#allocation7 + $0x168] sm:$0xff]
      %v3301 = vld [vmem:[#allocation7 + $0x180] sm:$0xff]
      %v3302 = vld [vmem:[#allocation7 + $0x198] sm:$0xff]
      %v3303 = vld [vmem:[#allocation7 + $0x1b0] sm:$0xff]
      %v3304 = vld [vmem:[#allocation7 + $0x1c8] sm:$0xff]
      %v3305 = vld [vmem:[#allocation7 + $0x1e0] sm:$0xff]
      %v3306 = vld [vmem:[#allocation7 + $0x1f8] sm:$0xff]
      %v3307 = vld [vmem:[#allocation7 + $0x210] sm:$0xff]
      %v3308 = vld [vmem:[#allocation7 + $0x228] sm:$0xff]
      %v3309 = vld [vmem:[#allocation7 + $0x240] sm:$0xff]
      %v3310 = vld [vmem:[#allocation7 + $0x258] sm:$0xff]
      %v3311 = vld [vmem:[#allocation7 + $0x270] sm:$0xff]
      %v3312 = vld [vmem:[#allocation7 + $0x288] sm:$0xff]
      %v3313 = vld [vmem:[#allocation7 + $0x2a0] sm:$0xff]
      %v3314 = vld [vmem:[#allocation7 + $0x2b8] sm:$0xff]
      %v3315 = vld [vmem:[#allocation7 + $0x2d0] sm:$0xff]
      %v3316 = vld [vmem:[#allocation7 + $0x2e8] sm:$0xff]
      %v3317 = vld [vmem:[#allocation7 + $0x300] sm:$0xff]
      %v3318 = vld [vmem:[#allocation7 + $0x318] sm:$0xff]
      %v3319 = vld [vmem:[#allocation7 + $0x330] sm:$0xff]
      %v3320 = vld [vmem:[#allocation7 + $0x348] sm:$0xff]
      %v3321 = vld [vmem:[#allocation7 + $0x360] sm:$0x1]
      %vm3322 = vcmask 269312
      %v3324 = vsel %vm3322, %v3275, 0
      %v3327 = vsel %vm3322, %v3278, 0
      %v3330 = vsel %vm3322, %v3281, 0
      %v3333 = vsel %vm3322, %v3284, 0
      %v3336 = vsel %vm2112, %v3321, 0
      %3338 = vmatprep.subr.mxu0 0.0
      %3339 = vmatpush1.msra.mxu0 %v3285
      %3340 = vmatprep.subr.mxu0 0.0
      %3341 = vmatpush1.msra.mxu0 %v3286
      %3342 = vmatprep.subr.mxu0 0.0
      %3343 = vmatpush1.msra.mxu0 %v3287
      %3344 = vmatprep.subr.mxu0 0.0
      %3345 = vmatpush1.msra.mxu0 %v3288
      %3346 = vmatprep.subr.mxu0 0.0
      %3347 = vmatpush1.msra.mxu0 %v3289
      %3348 = vmatprep.subr.mxu0 0.0
      %3349 = vmatpush1.msra.mxu0 %v3290
      %3350 = vmatprep.subr.mxu0 0.0
      %3351 = vmatpush1.msra.mxu0 %v3291
      %3352 = vmatprep.subr.mxu0 0.0
      %3353 = vmatpush1.msra.mxu0 %v3292
      %3354 = vmatprep.subr.mxu0 0.0
      %3355 = vmatpush1.msra.mxu0 %v3293
      %3356 = vmatprep.subr.mxu0 0.0
      %3357 = vmatpush1.msra.mxu0 %v3294
      %3358 = vmatprep.subr.mxu0 0.0
      %3359 = vmatpush1.msra.mxu0 %v3295
      %3360 = vmatprep.subr.mxu0 0.0
      %3361 = vmatpush1.msra.mxu0 %v3296
      %3362 = vmatprep.subr.mxu0 0.0
      %3363 = vmatpush1.msra.mxu0 %v3297
      %3364 = vmatprep.subr.mxu0 0.0
      %3365 = vmatpush1.msra.mxu0 %v3298
      %3366 = vmatprep.subr.mxu0 0.0
      %3367 = vmatpush1.msra.mxu0 %v3299
      %3368 = vmatprep.subr.mxu0 0.0
      %3369 = vmatpush1.msra.mxu0 %v3300
      %3370 = vmatprep.subr.mxu0 0.0
      %3371 = vmatpush1.msra.mxu0 %v3301
      %3372 = vmatprep.subr.mxu0 0.0
      %3373 = vmatpush1.msra.mxu0 %v3302
      %3374 = vmatprep.subr.mxu0 0.0
      %3375 = vmatpush1.msra.mxu0 %v3303
      %3376 = vmatprep.subr.mxu0 0.0
      %3377 = vmatpush1.msra.mxu0 %v3304
      %3378 = vmatprep.subr.mxu0 0.0
      %3379 = vmatpush1.msra.mxu0 %v3305
      %3380 = vmatprep.subr.mxu0 0.0
      %3381 = vmatpush1.msra.mxu0 %v3306
      %3382 = vmatprep.subr.mxu0 0.0
      %3383 = vmatpush1.msra.mxu0 %v3307
      %3384 = vmatprep.subr.mxu0 0.0
      %3385 = vmatpush1.msra.mxu0 %v3308
      %3386 = vmatprep.subr.mxu0 0.0
      %3387 = vmatpush1.msra.mxu0 %v3309
      %3388 = vmatprep.subr.mxu0 0.0
      %3389 = vmatpush1.msra.mxu0 %v3310
      %3390 = vmatprep.subr.mxu0 0.0
      %3391 = vmatpush1.msra.mxu0 %v3311
      %3392 = vmatprep.subr.mxu0 0.0
      %3393 = vmatpush1.msra.mxu0 %v3312
      %3394 = vmatprep.subr.mxu0 0.0
      %3395 = vmatpush1.msra.mxu0 %v3313
      %3396 = vmatprep.subr.mxu0 0.0
      %3397 = vmatpush1.msra.mxu0 %v3314
      %3398 = vmatprep.subr.mxu0 0.0
      %3399 = vmatpush1.msra.mxu0 %v3315
      %3400 = vmatprep.subr.mxu0 0.0
      %3401 = vmatpush1.msra.mxu0 %v3316
      %3402 = vmatprep.mubr.f32.mxu0 %v3274
      %3403 = vmatmul.mubr.f32.gmra.mrb[0].mxu0 %v3273
      %v3404 = vpop.f32.mrb[0].mxu0
      %v3405 = vadd.f32 0.0, %v3404
      %v3406 = vpop.f32.mrb[0].mxu0
      %3407 = vmatprep.mubr.f32.mxu0 %v3277
      %3408 = vmatmul.mubr.f32.gmra.mrb[0].mxu0 %v3276
      %v3409 = vpop.f32.mrb[0].mxu0
      %v3410 = vadd.f32 0.0, %v3409
      %v3411 = vpop.f32.mrb[0].mxu0
      %3412 = vmatprep.mubr.f32.mxu0 %v3280
      %3413 = vmatmul.mubr.f32.gmra.mrb[0].mxu0 %v3279
      %v3414 = vpop.f32.mrb[0].mxu0
      %v3415 = vadd.f32 0.0, %v3414
      %v3416 = vpop.f32.mrb[0].mxu0
      %3417 = vmatprep.mubr.f32.mxu0 %v3283
      %3418 = vmatmul.mubr.f32.gmra.mrb[0].mxu0 %v3282
      %v3419 = vpop.f32.mrb[0].mxu0
      %v3420 = vadd.f32 0.0, %v3419
      %v3421 = vpop.f32.mrb[0].mxu0
      %3422 = vdwg.mxu0
      %3423 = vmatprep.subr.mxu0 0.0
      %3424 = vmatpush1.msra.mxu0 %v3317
      %3425 = vmatprep.subr.mxu0 0.0
      %3426 = vmatpush1.msra.mxu0 %v3318
      %3427 = vmatprep.subr.mxu0 0.0
      %3428 = vmatpush1.msra.mxu0 %v3319
      %3429 = vmatprep.subr.mxu0 0.0
      %3430 = vmatpush1.msra.mxu0 %v3320
      %3431 = vmatprep.subr.mxu0 0.0
      %3432 = vmatpush1.msra.mxu0 %v3336
      %3433 = vmatprep.subr.mxu0 0.0
      %3434 = vmatpush1.msra.mxu0 0.0
      %3435 = vmatprep.subr.mxu0 0.0
      %3436 = vmatpush1.msra.mxu0 0.0
      %3437 = vmatprep.subr.mxu0 0.0
      %3438 = vmatpush1.msra.mxu0 0.0
      %3439 = vmatprep.subr.mxu0 0.0
      %3440 = vmatpush1.msra.mxu0 0.0
      %3441 = vmatprep.subr.mxu0 0.0
      %3442 = vmatpush1.msra.mxu0 0.0
      %3443 = vmatprep.subr.mxu0 0.0
      %3444 = vmatpush1.msra.mxu0 0.0
      %3445 = vmatprep.subr.mxu0 0.0
      %3446 = vmatpush1.msra.mxu0 0.0
      %3447 = vmatprep.subr.mxu0 0.0
      %3448 = vmatpush1.msra.mxu0 0.0
      %3449 = vmatprep.subr.mxu0 0.0
      %3450 = vmatpush1.msra.mxu0 0.0
      %3451 = vmatprep.subr.mxu0 0.0
      %3452 = vmatpush1.msra.mxu0 0.0
      %3453 = vmatprep.subr.mxu0 0.0
      %3454 = vmatpush1.msra.mxu0 0.0
      %3455 = vmatprep.subr.mxu0 0.0
      %3456 = vmatpush1.msra.mxu0 0.0
      %3457 = vmatprep.subr.mxu0 0.0
      %3458 = vmatpush1.msra.mxu0 0.0
      %3459 = vmatprep.subr.mxu0 0.0
      %3460 = vmatpush1.msra.mxu0 0.0
      %3461 = vmatprep.subr.mxu0 0.0
      %3462 = vmatpush1.msra.mxu0 0.0
      %3463 = vmatprep.subr.mxu0 0.0
      %3464 = vmatpush1.msra.mxu0 0.0
      %3465 = vmatprep.subr.mxu0 0.0
      %3466 = vmatpush1.msra.mxu0 0.0
      %3467 = vmatprep.subr.mxu0 0.0
      %3468 = vmatpush1.msra.mxu0 0.0
      %3469 = vmatprep.subr.mxu0 0.0
      %3470 = vmatpush1.msra.mxu0 0.0
      %3471 = vmatprep.subr.mxu0 0.0
      %3472 = vmatpush1.msra.mxu0 0.0
      %3473 = vmatprep.subr.mxu0 0.0
      %3474 = vmatpush1.msra.mxu0 0.0
      %3475 = vmatprep.subr.mxu0 0.0
      %3476 = vmatpush1.msra.mxu0 0.0
      %3477 = vmatprep.subr.mxu0 0.0
      %3478 = vmatpush1.msra.mxu0 0.0
      %3479 = vmatprep.subr.mxu0 0.0
      %3480 = vmatpush1.msra.mxu0 0.0
      %3481 = vmatprep.subr.mxu0 0.0
      %3482 = vmatpush1.msra.mxu0 0.0
      %3483 = vmatprep.subr.mxu0 0.0
      %3484 = vmatpush1.msra.mxu0 0.0
      %3485 = vmatprep.subr.mxu0 0.0
      %3486 = vmatpush1.msra.mxu0 0.0
      %3487 = vmatprep.mubr.f32.mxu0 0.0
      %3488 = vmatmul.mubr.f32.gmra.mrb[0].mxu0 %v3324
      %v3489 = vpop.f32.mrb[0].mxu0
      %v3490 = vadd.f32 %v3405, %v3489
      %v3491 = vpop.f32.mrb[0].mxu0
      %3492 = vmatprep.mubr.f32.mxu0 0.0
      %3493 = vmatmul.mubr.f32.gmra.mrb[0].mxu0 %v3327
      %v3494 = vpop.f32.mrb[0].mxu0
      %v3495 = vadd.f32 %v3410, %v3494
      %v3496 = vpop.f32.mrb[0].mxu0
      %3497 = vmatprep.mubr.f32.mxu0 0.0
      %3498 = vmatmul.mubr.f32.gmra.mrb[0].mxu0 %v3330
      %v3499 = vpop.f32.mrb[0].mxu0
      %v3500 = vadd.f32 %v3415, %v3499
      %v3501 = vpop.f32.mrb[0].mxu0
      %3502 = vmatprep.mubr.f32.mxu0 0.0
      %3503 = vmatmul.mubr.f32.gmra.mrb[0].mxu0 %v3333
      %v3504 = vpop.f32.mrb[0].mxu0
      %v3505 = vadd.f32 %v3420, %v3504
      %v3506 = vpop.f32.mrb[0].mxu0
      %3507 = vdwg.mxu0
      %vm3508 = vcmp.ge.f32.partialorder %v3490, 0.0
      %vm3509 = vcmp.ge.f32.partialorder %v3495, 0.0
      %vm3510 = vcmp.ge.f32.partialorder %v3500, 0.0
      %vm3511 = vcmp.ge.f32.partialorder %v3505, 0.0
      %v3512 = vmul.f32 %v3490, 0.01
      %v3513 = vmul.f32 %v3495, 0.01
      %v3514 = vmul.f32 %v3500, 0.01
      %v3515 = vmul.f32 %v3505, 0.01
      %v3516 = vsel %vm3508, %v3490, %v3512
      %v3517 = vsel %vm3509, %v3495, %v3513
      %v3518 = vsel %vm3510, %v3500, %v3514
      %v3519 = vsel %vm3511, %v3505, %v3515
      %v3520 = vld [vmem:[%s1 + $0x25b] ss:$0 sm:$0xff]
      %v3521 = vmul.f32 %v3516, %v3520
      %v3522 = vmul.f32 %v3517, %v3520
      %v3523 = vmul.f32 %v3518, %v3520
      %v3524 = vmul.f32 %v3519, %v3520
      %3529 = vrot.lane.b32.xlu0 %v3521, 5
      %v3530 = vpop.permute.xlu0 %3529
      %3531 = vrot.lane.b32.xlu0 %v3522, 5
      %v3532 = vpop.permute.xlu0 %3531
      %3533 = vrot.lane.b32.xlu0 %v3523, 5
      %v3534 = vpop.permute.xlu0 %3533
      %3535 = vrot.lane.b32.xlu0 %v3524, 5
      %v3536 = vpop.permute.xlu0 %3535
      %3541 = vst.msk [vmem:[#allocation6] sm:$0xff] %vm3065, %v3530
      %3542 = vst.msk [vmem:[#allocation6 + $0x8] sm:$0xff] %vm3065, %v3532
      %3543 = vst.msk [vmem:[#allocation6 + $0x10] sm:$0xff] %vm3065, %v3534
      %3544 = vst.msk [vmem:[#allocation6 + $0x18] sm:$0xff] %vm3065, %v3536
      %v3545 = vld [vmem:[#allocation6] sm:$0xff]
      %v3546 = vld [vmem:[#allocation6 + $0x8] sm:$0xff]
      %v3547 = vld [vmem:[#allocation6 + $0x10] sm:$0xff]
      %v3548 = vld [vmem:[#allocation6 + $0x18] sm:$0xff]
      %3549 = vst.msk [vmem:[#allocation7] sm:$0xff] %vm3074, %v3545
      %3550 = vst.msk [vmem:[#allocation7 + $0x18] sm:$0xff] %vm3074, %v3546
      %3551 = vst.msk [vmem:[#allocation7 + $0x30] sm:$0xff] %vm3074, %v3547
      %3552 = vst.msk [vmem:[#allocation7 + $0x48] sm:$0xff] %vm3074, %v3548
      %v3553 = vld [vmem:[#allocation6] sm:$0xff]
      %v3554 = vld [vmem:[#allocation6 + $0x8] sm:$0xff]
      %v3555 = vld [vmem:[#allocation6 + $0x10] sm:$0xff]
      %v3556 = vld [vmem:[#allocation6 + $0x18] sm:$0xff]
      %3561 = vrot.lane.b32.xlu0 %v3553, 127
      %v3562 = vpop.permute.xlu0 %3561
      %3563 = vrot.lane.b32.xlu0 %v3554, 127
      %v3564 = vpop.permute.xlu0 %3563
      %3565 = vrot.lane.b32.xlu0 %v3555, 127
      %v3566 = vpop.permute.xlu0 %3565
      %3567 = vrot.lane.b32.xlu0 %v3556, 127
      %v3568 = vpop.permute.xlu0 %3567
      %3573 = vst.msk [vmem:[#allocation7 + $0x60] sm:$0xff] %vm3074, %v3562
      %3574 = vst.msk [vmem:[#allocation7 + $0x78] sm:$0xff] %vm3074, %v3564
      %3575 = vst.msk [vmem:[#allocation7 + $0x90] sm:$0xff] %vm3074, %v3566
      %3576 = vst.msk [vmem:[#allocation7 + $0xa8] sm:$0xff] %vm3074, %v3568
      %v3577 = vld [vmem:[#allocation6] sm:$0xff]
      %v3578 = vld [vmem:[#allocation6 + $0x8] sm:$0xff]
      %v3579 = vld [vmem:[#allocation6 + $0x10] sm:$0xff]
      %v3580 = vld [vmem:[#allocation6 + $0x18] sm:$0xff]
      %3585 = vrot.lane.b32.xlu0 %v3577, 126
      %v3586 = vpop.permute.xlu0 %3585
      %3587 = vrot.lane.b32.xlu0 %v3578, 126
      %v3588 = vpop.permute.xlu0 %3587
      %3589 = vrot.lane.b32.xlu0 %v3579, 126
      %v3590 = vpop.permute.xlu0 %3589
      %3591 = vrot.lane.b32.xlu0 %v3580, 126
      %v3592 = vpop.permute.xlu0 %3591
      %3597 = vst.msk [vmem:[#allocation7 + $0xc0] sm:$0xff] %vm3074, %v3586
      %3598 = vst.msk [vmem:[#allocation7 + $0xd8] sm:$0xff] %vm3074, %v3588
      %3599 = vst.msk [vmem:[#allocation7 + $0xf0] sm:$0xff] %vm3074, %v3590
      %3600 = vst.msk [vmem:[#allocation7 + $0x108] sm:$0xff] %vm3074, %v3592
      %v3601 = vld [vmem:[#allocation6] sm:$0xff]
      %v3602 = vld [vmem:[#allocation6 + $0x8] sm:$0xff]
      %v3603 = vld [vmem:[#allocation6 + $0x10] sm:$0xff]
      %v3604 = vld [vmem:[#allocation6 + $0x18] sm:$0xff]
      %3609 = vrot.lane.b32.xlu0 %v3601, 124
      %v3610 = vpop.permute.xlu0 %3609
      %3611 = vrot.lane.b32.xlu0 %v3602, 124
      %v3612 = vpop.permute.xlu0 %3611
      %3613 = vrot.lane.b32.xlu0 %v3603, 124
      %v3614 = vpop.permute.xlu0 %3613
      %3615 = vrot.lane.b32.xlu0 %v3604, 124
      %v3616 = vpop.permute.xlu0 %3615
      %3621 = vst.msk [vmem:[#allocation7 + $0x120] sm:$0xff] %vm3074, %v3610
      %3622 = vst.msk [vmem:[#allocation7 + $0x138] sm:$0xff] %vm3074, %v3612
      %3623 = vst.msk [vmem:[#allocation7 + $0x150] sm:$0xff] %vm3074, %v3614
      %3624 = vst.msk [vmem:[#allocation7 + $0x168] sm:$0xff] %vm3074, %v3616
      %v3625 = vld [vmem:[#allocation6] sm:$0xff]
      %v3626 = vld [vmem:[#allocation6 + $0x8] sm:$0xff]
      %v3627 = vld [vmem:[#allocation6 + $0x10] sm:$0xff]
      %v3628 = vld [vmem:[#allocation6 + $0x18] sm:$0xff]
      %3633 = vrot.lane.b32.xlu0 %v3625, 123
      %v3634 = vpop.permute.xlu0 %3633
      %3635 = vrot.lane.b32.xlu0 %v3626, 123
      %v3636 = vpop.permute.xlu0 %3635
      %3637 = vrot.lane.b32.xlu0 %v3627, 123
      %v3638 = vpop.permute.xlu0 %3637
      %3639 = vrot.lane.b32.xlu0 %v3628, 123
      %v3640 = vpop.permute.xlu0 %3639
      %3645 = vst.msk [vmem:[#allocation7 + $0x180] sm:$0xff] %vm3074, %v3634
      %3646 = vst.msk [vmem:[#allocation7 + $0x198] sm:$0xff] %vm3074, %v3636
      %3647 = vst.msk [vmem:[#allocation7 + $0x1b0] sm:$0xff] %vm3074, %v3638
      %3648 = vst.msk [vmem:[#allocation7 + $0x1c8] sm:$0xff] %vm3074, %v3640
      %v3649 = vld [vmem:[#allocation6] sm:$0xff]
      %v3650 = vld [vmem:[#allocation6 + $0x8] sm:$0xff]
      %v3651 = vld [vmem:[#allocation6 + $0x10] sm:$0xff]
      %v3652 = vld [vmem:[#allocation6 + $0x18] sm:$0xff]
      %3657 = vrot.lane.b32.xlu0 %v3649, 122
      %v3658 = vpop.permute.xlu0 %3657
      %3659 = vrot.lane.b32.xlu0 %v3650, 122
      %v3660 = vpop.permute.xlu0 %3659
      %3661 = vrot.lane.b32.xlu0 %v3651, 122
      %v3662 = vpop.permute.xlu0 %3661
      %3663 = vrot.lane.b32.xlu0 %v3652, 122
      %v3664 = vpop.permute.xlu0 %3663
      %3669 = vst.msk [vmem:[#allocation7 + $0x1e0] sm:$0xff] %vm3074, %v3658
      %3670 = vst.msk [vmem:[#allocation7 + $0x1f8] sm:$0xff] %vm3074, %v3660
      %3671 = vst.msk [vmem:[#allocation7 + $0x210] sm:$0xff] %vm3074, %v3662
      %3672 = vst.msk [vmem:[#allocation7 + $0x228] sm:$0xff] %vm3074, %v3664
      %v3673 = vld [vmem:[#allocation6] sm:$0xff]
      %v3674 = vld [vmem:[#allocation6 + $0x8] sm:$0xff]
      %v3675 = vld [vmem:[#allocation6 + $0x10] sm:$0xff]
      %v3676 = vld [vmem:[#allocation6 + $0x18] sm:$0xff]
      %3681 = vrot.lane.b32.xlu0 %v3673, 120
      %v3682 = vpop.permute.xlu0 %3681
      %3683 = vrot.lane.b32.xlu0 %v3674, 120
      %v3684 = vpop.permute.xlu0 %3683
      %3685 = vrot.lane.b32.xlu0 %v3675, 120
      %v3686 = vpop.permute.xlu0 %3685
      %3687 = vrot.lane.b32.xlu0 %v3676, 120
      %v3688 = vpop.permute.xlu0 %3687
      %3693 = vst.msk [vmem:[#allocation7 + $0x240] sm:$0xff] %vm3074, %v3682
      %3694 = vst.msk [vmem:[#allocation7 + $0x258] sm:$0xff] %vm3074, %v3684
      %3695 = vst.msk [vmem:[#allocation7 + $0x270] sm:$0xff] %vm3074, %v3686
      %3696 = vst.msk [vmem:[#allocation7 + $0x288] sm:$0xff] %vm3074, %v3688
      %v3697 = vld [vmem:[#allocation6] sm:$0xff]
      %v3698 = vld [vmem:[#allocation6 + $0x8] sm:$0xff]
      %v3699 = vld [vmem:[#allocation6 + $0x10] sm:$0xff]
      %v3700 = vld [vmem:[#allocation6 + $0x18] sm:$0xff]
      %3705 = vrot.lane.b32.xlu0 %v3697, 119
      %v3706 = vpop.permute.xlu0 %3705
      %3707 = vrot.lane.b32.xlu0 %v3698, 119
      %v3708 = vpop.permute.xlu0 %3707
      %3709 = vrot.lane.b32.xlu0 %v3699, 119
      %v3710 = vpop.permute.xlu0 %3709
      %3711 = vrot.lane.b32.xlu0 %v3700, 119
      %v3712 = vpop.permute.xlu0 %3711
      %3717 = vst.msk [vmem:[#allocation7 + $0x2a0] sm:$0xff] %vm3074, %v3706
      %3718 = vst.msk [vmem:[#allocation7 + $0x2b8] sm:$0xff] %vm3074, %v3708
      %3719 = vst.msk [vmem:[#allocation7 + $0x2d0] sm:$0xff] %vm3074, %v3710
      %3720 = vst.msk [vmem:[#allocation7 + $0x2e8] sm:$0xff] %vm3074, %v3712
      %v3721 = vld [vmem:[#allocation6] sm:$0xff]
      %v3722 = vld [vmem:[#allocation6 + $0x8] sm:$0xff]
      %v3723 = vld [vmem:[#allocation6 + $0x10] sm:$0xff]
      %v3724 = vld [vmem:[#allocation6 + $0x18] sm:$0xff]
      %3729 = vrot.lane.b32.xlu0 %v3721, 118
      %v3730 = vpop.permute.xlu0 %3729
      %3731 = vrot.lane.b32.xlu0 %v3722, 118
      %v3732 = vpop.permute.xlu0 %3731
      %3733 = vrot.lane.b32.xlu0 %v3723, 118
      %v3734 = vpop.permute.xlu0 %3733
      %3735 = vrot.lane.b32.xlu0 %v3724, 118
      %v3736 = vpop.permute.xlu0 %3735
      %3741 = vst.msk [vmem:[#allocation7 + $0x300] sm:$0xff] %vm3074, %v3730
      %3742 = vst.msk [vmem:[#allocation7 + $0x318] sm:$0xff] %vm3074, %v3732
      %3743 = vst.msk [vmem:[#allocation7 + $0x330] sm:$0xff] %vm3074, %v3734
      %3744 = vst.msk [vmem:[#allocation7 + $0x348] sm:$0xff] %vm3074, %v3736
      %3745 = vst.msk [vmem:[#allocation7 + $0x360] sm:$0x1] %vm3271, 1.0
      %v3746 = vld [vmem:[%s1 + $0x198] sm:$0xff]
      %v3747 = vld [vmem:[%s1 + $0x1a0] sm:$0xff]
      %v3748 = vld [vmem:[%s1 + $0x1a8] sm:$0xff]
      %v3749 = vld [vmem:[%s1 + $0x1b0] sm:$0xff]
      %v3750 = vld [vmem:[%s1 + $0x1b8] sm:$0xff]
      %v3751 = vld [vmem:[%s1 + $0x1c0] sm:$0xff]
      %v3752 = vld [vmem:[%s1 + $0x1c8] sm:$0xff]
      %v3753 = vld [vmem:[%s1 + $0x1d0] sm:$0xff]
      %v3754 = vld [vmem:[%s1 + $0x1d8] sm:$0xff]
      %v3755 = vld [vmem:[%s1 + $0x1e0] sm:$0xff]
      %v3756 = vld [vmem:[%s1 + $0x1e8] sm:$0xff]
      %v3757 = vld [vmem:[%s1 + $0x1f0] sm:$0xff]
      %v3758 = vld [vmem:[%s1 + $0x1f8] sm:$0xff]
      %v3759 = vld [vmem:[%s1 + $0x200] sm:$0xff]
      %v3760 = vld [vmem:[%s1 + $0x208] sm:$0xff]
      %v3761 = vld [vmem:[%s1 + $0x210] sm:$0xff]
      %v3762 = vld [vmem:[%s1 + $0x218] sm:$0xff]
      %v3763 = vld [vmem:[%s1 + $0x220] sm:$0xff]
      %v3764 = vld [vmem:[%s1 + $0x228] sm:$0xff]
      %v3765 = vld [vmem:[%s1 + $0x230] sm:$0xff]
      %v3766 = vld [vmem:[%s1 + $0x238] sm:$0xff]
      %v3767 = vld [vmem:[%s1 + $0x240] sm:$0xff]
      %v3768 = vld [vmem:[%s1 + $0x248] sm:$0xff]
      %v3769 = vld [vmem:[%s1 + $0x250] sm:$0xff]
      %v3770 = vld [vmem:[#allocation7] sm:$0xff]
      %v3771 = vld [vmem:[#allocation7 + $0x18] sm:$0xff]
      %v3772 = vld [vmem:[#allocation7 + $0x30] sm:$0xff]
      %v3773 = vld [vmem:[#allocation7 + $0x48] sm:$0xff]
      %v3774 = vld [vmem:[#allocation7 + $0x60] sm:$0xff]
      %v3775 = vld [vmem:[#allocation7 + $0x78] sm:$0xff]
      %v3776 = vld [vmem:[#allocation7 + $0x90] sm:$0xff]
      %v3777 = vld [vmem:[#allocation7 + $0xa8] sm:$0xff]
      %v3778 = vld [vmem:[#allocation7 + $0xc0] sm:$0xff]
      %v3779 = vld [vmem:[#allocation7 + $0xd8] sm:$0xff]
      %v3780 = vld [vmem:[#allocation7 + $0xf0] sm:$0xff]
      %v3781 = vld [vmem:[#allocation7 + $0x108] sm:$0xff]
      %v3782 = vld [vmem:[#allocation7 + $0x120] sm:$0xff]
      %v3783 = vld [vmem:[#allocation7 + $0x138] sm:$0xff]
      %v3784 = vld [vmem:[#allocation7 + $0x150] sm:$0xff]
      %v3785 = vld [vmem:[#allocation7 + $0x168] sm:$0xff]
      %v3786 = vld [vmem:[#allocation7 + $0x180] sm:$0xff]
      %v3787 = vld [vmem:[#allocation7 + $0x198] sm:$0xff]
      %v3788 = vld [vmem:[#allocation7 + $0x1b0] sm:$0xff]
      %v3789 = vld [vmem:[#allocation7 + $0x1c8] sm:$0xff]
      %v3790 = vld [vmem:[#allocation7 + $0x1e0] sm:$0xff]
      %v3791 = vld [vmem:[#allocation7 + $0x1f8] sm:$0xff]
      %v3792 = vld [vmem:[#allocation7 + $0x210] sm:$0xff]
      %v3793 = vld [vmem:[#allocation7 + $0x228] sm:$0xff]
      %v3794 = vld [vmem:[#allocation7 + $0x240] sm:$0xff]
      %v3795 = vld [vmem:[#allocation7 + $0x258] sm:$0xff]
      %v3796 = vld [vmem:[#allocation7 + $0x270] sm:$0xff]
      %v3797 = vld [vmem:[#allocation7 + $0x288] sm:$0xff]
      %v3798 = vld [vmem:[#allocation7 + $0x2a0] sm:$0xff]
      %v3799 = vld [vmem:[#allocation7 + $0x2b8] sm:$0xff]
      %v3800 = vld [vmem:[#allocation7 + $0x2d0] sm:$0xff]
      %v3801 = vld [vmem:[#allocation7 + $0x2e8] sm:$0xff]
      %v3802 = vld [vmem:[#allocation7 + $0x300] sm:$0xff]
      %v3803 = vld [vmem:[#allocation7 + $0x318] sm:$0xff]
      %v3804 = vld [vmem:[#allocation7 + $0x330] sm:$0xff]
      %v3805 = vld [vmem:[#allocation7 + $0x348] sm:$0xff]
      %v3806 = vld [vmem:[#allocation7 + $0x360] sm:$0x1]
      %v3808 = vsel %vm3322, %v3748, 0
      %v3811 = vsel %vm3322, %v3751, 0
      %v3814 = vsel %vm3322, %v3754, 0
      %v3817 = vsel %vm3322, %v3757, 0
      %v3820 = vsel %vm3322, %v3760, 0
      %v3823 = vsel %vm3322, %v3763, 0
      %v3826 = vsel %vm3322, %v3766, 0
      %v3829 = vsel %vm3322, %v3769, 0
      %v3832 = vsel %vm2112, %v3806, 0
      %3834 = vmatprep.subr.mxu0 0.0
      %3835 = vmatpush1.msra.mxu0 %v3770
      %3836 = vmatprep.subr.mxu0 0.0
      %3837 = vmatpush1.msra.mxu0 %v3771
      %3838 = vmatprep.subr.mxu0 0.0
      %3839 = vmatpush1.msra.mxu0 %v3772
      %3840 = vmatprep.subr.mxu0 0.0
      %3841 = vmatpush1.msra.mxu0 %v3773
      %3842 = vmatprep.subr.mxu0 0.0
      %3843 = vmatpush1.msra.mxu0 %v3774
      %3844 = vmatprep.subr.mxu0 0.0
      %3845 = vmatpush1.msra.mxu0 %v3775
      %3846 = vmatprep.subr.mxu0 0.0
      %3847 = vmatpush1.msra.mxu0 %v3776
      %3848 = vmatprep.subr.mxu0 0.0
      %3849 = vmatpush1.msra.mxu0 %v3777
      %3850 = vmatprep.subr.mxu0 0.0
      %3851 = vmatpush1.msra.mxu0 %v3778
      %3852 = vmatprep.subr.mxu0 0.0
      %3853 = vmatpush1.msra.mxu0 %v3779
      %3854 = vmatprep.subr.mxu0 0.0
      %3855 = vmatpush1.msra.mxu0 %v3780
      %3856 = vmatprep.subr.mxu0 0.0
      %3857 = vmatpush1.msra.mxu0 %v3781
      %3858 = vmatprep.subr.mxu0 0.0
      %3859 = vmatpush1.msra.mxu0 %v3782
      %3860 = vmatprep.subr.mxu0 0.0
      %3861 = vmatpush1.msra.mxu0 %v3783
      %3862 = vmatprep.subr.mxu0 0.0
      %3863 = vmatpush1.msra.mxu0 %v3784
      %3864 = vmatprep.subr.mxu0 0.0
      %3865 = vmatpush1.msra.mxu0 %v3785
      %3866 = vmatprep.subr.mxu0 0.0
      %3867 = vmatpush1.msra.mxu0 %v3786
      %3868 = vmatprep.subr.mxu0 0.0
      %3869 = vmatpush1.msra.mxu0 %v3787
      %3870 = vmatprep.subr.mxu0 0.0
      %3871 = vmatpush1.msra.mxu0 %v3788
      %3872 = vmatprep.subr.mxu0 0.0
      %3873 = vmatpush1.msra.mxu0 %v3789
      %3874 = vmatprep.subr.mxu0 0.0
      %3875 = vmatpush1.msra.mxu0 %v3790
      %3876 = vmatprep.subr.mxu0 0.0
      %3877 = vmatpush1.msra.mxu0 %v3791
      %3878 = vmatprep.subr.mxu0 0.0
      %3879 = vmatpush1.msra.mxu0 %v3792
      %3880 = vmatprep.subr.mxu0 0.0
      %3881 = vmatpush1.msra.mxu0 %v3793
      %3882 = vmatprep.subr.mxu0 0.0
      %3883 = vmatpush1.msra.mxu0 %v3794
      %3884 = vmatprep.subr.mxu0 0.0
      %3885 = vmatpush1.msra.mxu0 %v3795
      %3886 = vmatprep.subr.mxu0 0.0
      %3887 = vmatpush1.msra.mxu0 %v3796
      %3888 = vmatprep.subr.mxu0 0.0
      %3889 = vmatpush1.msra.mxu0 %v3797
      %3890 = vmatprep.subr.mxu0 0.0
      %3891 = vmatpush1.msra.mxu0 %v3798
      %3892 = vmatprep.subr.mxu0 0.0
      %3893 = vmatpush1.msra.mxu0 %v3799
      %3894 = vmatprep.subr.mxu0 0.0
      %3895 = vmatpush1.msra.mxu0 %v3800
      %3896 = vmatprep.subr.mxu0 0.0
      %3897 = vmatpush1.msra.mxu0 %v3801
      %3898 = vmatprep.mubr.f32.mxu0 %v3747
      %3899 = vmatmul.mubr.f32.gmra.mrb[0].mxu0 %v3746
      %v3900 = vpop.f32.mrb[0].mxu0
      %v3901 = vadd.f32 0.0, %v3900
      %v3902 = vpop.f32.mrb[0].mxu0
      %3903 = vmatprep.mubr.f32.mxu0 %v3750
      %3904 = vmatmul.mubr.f32.gmra.mrb[0].mxu0 %v3749
      %v3905 = vpop.f32.mrb[0].mxu0
      %v3906 = vadd.f32 0.0, %v3905
      %v3907 = vpop.f32.mrb[0].mxu0
      %3908 = vmatprep.mubr.f32.mxu0 %v3753
      %3909 = vmatmul.mubr.f32.gmra.mrb[0].mxu0 %v3752
      %v3910 = vpop.f32.mrb[0].mxu0
      %v3911 = vadd.f32 0.0, %v3910
      %v3912 = vpop.f32.mrb[0].mxu0
      %3913 = vmatprep.mubr.f32.mxu0 %v3756
      %3914 = vmatmul.mubr.f32.gmra.mrb[0].mxu0 %v3755
      %v3915 = vpop.f32.mrb[0].mxu0
      %v3916 = vadd.f32 0.0, %v3915
      %v3917 = vpop.f32.mrb[0].mxu0
      %3918 = vmatprep.mubr.f32.mxu0 %v3759
      %3919 = vmatmul.mubr.f32.gmra.mrb[0].mxu0 %v3758
      %v3920 = vpop.f32.mrb[0].mxu0
      %v3921 = vadd.f32 0.0, %v3920
      %v3922 = vpop.f32.mrb[0].mxu0
      %3923 = vmatprep.mubr.f32.mxu0 %v3762
      %3924 = vmatmul.mubr.f32.gmra.mrb[0].mxu0 %v3761
      %v3925 = vpop.f32.mrb[0].mxu0
      %v3926 = vadd.f32 0.0, %v3925
      %v3927 = vpop.f32.mrb[0].mxu0
      %3928 = vmatprep.mubr.f32.mxu0 %v3765
      %3929 = vmatmul.mubr.f32.gmra.mrb[0].mxu0 %v3764
      %v3930 = vpop.f32.mrb[0].mxu0
      %v3931 = vadd.f32 0.0, %v3930
      %v3932 = vpop.f32.mrb[0].mxu0
      %3933 = vmatprep.mubr.f32.mxu0 %v3768
      %3934 = vmatmul.mubr.f32.gmra.mrb[0].mxu0 %v3767
      %v3935 = vpop.f32.mrb[0].mxu0
      %v3936 = vadd.f32 0.0, %v3935
      %v3937 = vpop.f32.mrb[0].mxu0
      %3938 = vdwg.mxu0
      %3939 = vmatprep.subr.mxu0 0.0
      %3940 = vmatpush1.msra.mxu0 %v3802
      %3941 = vmatprep.subr.mxu0 0.0
      %3942 = vmatpush1.msra.mxu0 %v3803
      %3943 = vmatprep.subr.mxu0 0.0
      %3944 = vmatpush1.msra.mxu0 %v3804
      %3945 = vmatprep.subr.mxu0 0.0
      %3946 = vmatpush1.msra.mxu0 %v3805
      %3947 = vmatprep.subr.mxu0 0.0
      %3948 = vmatpush1.msra.mxu0 %v3832
      %3949 = vmatprep.subr.mxu0 0.0
      %3950 = vmatpush1.msra.mxu0 0.0
      %3951 = vmatprep.subr.mxu0 0.0
      %3952 = vmatpush1.msra.mxu0 0.0
      %3953 = vmatprep.subr.mxu0 0.0
      %3954 = vmatpush1.msra.mxu0 0.0
      %3955 = vmatprep.subr.mxu0 0.0
      %3956 = vmatpush1.msra.mxu0 0.0
      %3957 = vmatprep.subr.mxu0 0.0
      %3958 = vmatpush1.msra.mxu0 0.0
      %3959 = vmatprep.subr.mxu0 0.0
      %3960 = vmatpush1.msra.mxu0 0.0
      %3961 = vmatprep.subr.mxu0 0.0
      %3962 = vmatpush1.msra.mxu0 0.0
      %3963 = vmatprep.subr.mxu0 0.0
      %3964 = vmatpush1.msra.mxu0 0.0
      %3965 = vmatprep.subr.mxu0 0.0
      %3966 = vmatpush1.msra.mxu0 0.0
      %3967 = vmatprep.subr.mxu0 0.0
      %3968 = vmatpush1.msra.mxu0 0.0
      %3969 = vmatprep.subr.mxu0 0.0
      %3970 = vmatpush1.msra.mxu0 0.0
      %3971 = vmatprep.subr.mxu0 0.0
      %3972 = vmatpush1.msra.mxu0 0.0
      %3973 = vmatprep.subr.mxu0 0.0
      %3974 = vmatpush1.msra.mxu0 0.0
      %3975 = vmatprep.subr.mxu0 0.0
      %3976 = vmatpush1.msra.mxu0 0.0
      %3977 = vmatprep.subr.mxu0 0.0
      %3978 = vmatpush1.msra.mxu0 0.0
      %3979 = vmatprep.subr.mxu0 0.0
      %3980 = vmatpush1.msra.mxu0 0.0
      %3981 = vmatprep.subr.mxu0 0.0
      %3982 = vmatpush1.msra.mxu0 0.0
      %3983 = vmatprep.subr.mxu0 0.0
      %3984 = vmatpush1.msra.mxu0 0.0
      %3985 = vmatprep.subr.mxu0 0.0
      %3986 = vmatpush1.msra.mxu0 0.0
      %3987 = vmatprep.subr.mxu0 0.0
      %3988 = vmatpush1.msra.mxu0 0.0
      %3989 = vmatprep.subr.mxu0 0.0
      %3990 = vmatpush1.msra.mxu0 0.0
      %3991 = vmatprep.subr.mxu0 0.0
      %3992 = vmatpush1.msra.mxu0 0.0
      %3993 = vmatprep.subr.mxu0 0.0
      %3994 = vmatpush1.msra.mxu0 0.0
      %3995 = vmatprep.subr.mxu0 0.0
      %3996 = vmatpush1.msra.mxu0 0.0
      %3997 = vmatprep.subr.mxu0 0.0
      %3998 = vmatpush1.msra.mxu0 0.0
      %3999 = vmatprep.subr.mxu0 0.0
      %4000 = vmatpush1.msra.mxu0 0.0
      %4001 = vmatprep.subr.mxu0 0.0
      %4002 = vmatpush1.msra.mxu0 0.0
      %4003 = vmatprep.mubr.f32.mxu0 0.0
      %4004 = vmatmul.mubr.f32.gmra.mrb[0].mxu0 %v3808
      %v4005 = vpop.f32.mrb[0].mxu0
      %v4006 = vadd.f32 %v3901, %v4005
      %v4007 = vpop.f32.mrb[0].mxu0
      %4008 = vmatprep.mubr.f32.mxu0 0.0
      %4009 = vmatmul.mubr.f32.gmra.mrb[0].mxu0 %v3811
      %v4010 = vpop.f32.mrb[0].mxu0
      %v4011 = vadd.f32 %v3906, %v4010
      %v4012 = vpop.f32.mrb[0].mxu0
      %4013 = vmatprep.mubr.f32.mxu0 0.0
      %4014 = vmatmul.mubr.f32.gmra.mrb[0].mxu0 %v3814
      %v4015 = vpop.f32.mrb[0].mxu0
      %v4016 = vadd.f32 %v3911, %v4015
      %v4017 = vpop.f32.mrb[0].mxu0
      %4018 = vmatprep.mubr.f32.mxu0 0.0
      %4019 = vmatmul.mubr.f32.gmra.mrb[0].mxu0 %v3817
      %v4020 = vpop.f32.mrb[0].mxu0
      %v4021 = vadd.f32 %v3916, %v4020
      %v4022 = vpop.f32.mrb[0].mxu0
      %4023 = vmatprep.mubr.f32.mxu0 0.0
      %4024 = vmatmul.mubr.f32.gmra.mrb[0].mxu0 %v3820
      %v4025 = vpop.f32.mrb[0].mxu0
      %v4026 = vadd.f32 %v3921, %v4025
      %v4027 = vpop.f32.mrb[0].mxu0
      %4028 = vmatprep.mubr.f32.mxu0 0.0
      %4029 = vmatmul.mubr.f32.gmra.mrb[0].mxu0 %v3823
      %v4030 = vpop.f32.mrb[0].mxu0
      %v4031 = vadd.f32 %v3926, %v4030
      %v4032 = vpop.f32.mrb[0].mxu0
      %4033 = vmatprep.mubr.f32.mxu0 0.0
      %4034 = vmatmul.mubr.f32.gmra.mrb[0].mxu0 %v3826
      %v4035 = vpop.f32.mrb[0].mxu0
      %v4036 = vadd.f32 %v3931, %v4035
      %v4037 = vpop.f32.mrb[0].mxu0
      %4038 = vmatprep.mubr.f32.mxu0 0.0
      %4039 = vmatmul.mubr.f32.gmra.mrb[0].mxu0 %v3829
      %v4040 = vpop.f32.mrb[0].mxu0
      %v4041 = vadd.f32 %v3936, %v4040
      %v4042 = vpop.f32.mrb[0].mxu0
      %4043 = vdwg.mxu0
      %4044 = vst.msk [vmem:[%s327] sm:$0xff] %vm3074, %v4006
      %4045 = vst.msk [vmem:[%s327 + $0x8] sm:$0xff] %vm3074, %v4011
      %4046 = vst.msk [vmem:[%s327 + $0x10] sm:$0xff] %vm3074, %v4016
      %4047 = vst.msk [vmem:[%s327 + $0x18] sm:$0xff] %vm3074, %v4021
      %4048 = vst.msk [vmem:[%s327 + $0x20] sm:$0xff] %vm3074, %v4026
      %4049 = vst.msk [vmem:[%s327 + $0x28] sm:$0xff] %vm3074, %v4031
      %4050 = vst.msk [vmem:[%s327 + $0x30] sm:$0xff] %vm3074, %v4036
      %4051 = vst.msk [vmem:[%s327 + $0x38] sm:$0xff] %vm3074, %v4041
      %p4052 = scmp.lt.s32.totalorder %s19, 1
      %s4053 = scalar_select %p4052, %s19, 1
      %s4054 = smul.addr %s4053, 3
      %s4055 = smul.addr %s4054, 4
      %s4056 = scalar_lea.vmem %s3, %s4055
      %p4057 = scmp.lt.s32.totalorder %s19, 1
      %s4058 = scalar_select %p4057, %s19, 1
      %s4059 = smul.addr %s4058, 3
      %s4060 = smul.addr %s4059, 8
      %s4061 = scalar_lea.vmem %s4, %s4060
      %p4062 = scmp.lt.s32.totalorder %s19, 1
      %s4063 = scalar_select %p4062, %s19, 1
      %s4064 = smul.addr %s4063, 2
      %s4065 = smul.addr %s4064, 8
      %s4066 = scalar_lea.vmem %s5, %s4065
      %p4067 = scmp.lt.s32.totalorder %s19, 1
      %s4068 = scalar_select %p4067, %s19, 1
      %s4069 = smul.addr %s4068, 4
      %s4070 = smul.addr %s4069, 8
      %s4071 = scalar_lea.vmem %s6, %s4070
      %p4072 = scmp.lt.s32.totalorder %s19, 1
      %s4073 = scalar_select %p4072, %s19, 1
      %s4074 = smul.addr %s4073, 8
      %s4075 = smul.addr %s4074, 8
      %s4076 = scalar_lea.vmem %s7, %s4075
      // Predicated region
      $region33: #{condnet3_forward.1} parent=31 // pred_check
        %p4077 = pneg %p105
      $region34: #{condnet3_forward.1} parent=31 // pred_check_branch
        %4079 = sbr.rel (%p4077) target = $region36
      $region35: #{condnet3_forward.1} parent=31 // pred_region
        _
      $region36: #{condnet3_forward.1} parent=31 // pred_fallthru
        _
      // Predicated region
      $region37: #{condnet3_forward.1} parent=31 // pred_check
        %p4080 = pneg %p131
      $region38: #{condnet3_forward.1} parent=31 // pred_check_branch
        %4082 = sbr.rel (%p4080) target = $region40
      $region39: #{condnet3_forward.1} parent=31 // pred_region
        _
      $region40: #{condnet3_forward.1} parent=31 // pred_fallthru
        _
      // Predicated region
      $region41: #{condnet3_forward.1} parent=31 // pred_check
        %p4083 = pneg %p157
      $region42: #{condnet3_forward.1} parent=31 // pred_check_branch
        %4085 = sbr.rel (%p4083) target = $region44
      $region43: #{condnet3_forward.1} parent=31 // pred_region
        _
      $region44: #{condnet3_forward.1} parent=31 // pred_fallthru
        _
      // Predicated region
      $region45: #{condnet3_forward.1} parent=31 // pred_check
        %p4086 = pneg %p183
      $region46: #{condnet3_forward.1} parent=31 // pred_check_branch
        %4088 = sbr.rel (%p4086) target = $region48
      $region47: #{condnet3_forward.1} parent=31 // pred_region
        _
      $region48: #{condnet3_forward.1} parent=31 // pred_fallthru
        _
      // Predicated region
      $region49: #{condnet3_forward.1} parent=31 // pred_check
        %p4089 = pneg %p209
      $region50: #{condnet3_forward.1} parent=31 // pred_check_branch
        %4091 = sbr.rel (%p4089) target = $region52
      $region51: #{condnet3_forward.1} parent=31 // pred_region
        _
      $region52: #{condnet3_forward.1} parent=31 // pred_fallthru
        _
    $region32: #{condnet3_forward.1} parent=5 // pred_fallthru
      _
    %p4092 = scmp.le.s32.totalorder 2, %s14
    // Predicated region
    $region53: #{condnet3_forward.1} parent=5 // pred_check
      %p4093 = pneg %p4092
    $region54: #{condnet3_forward.1} parent=5 // pred_check_branch
      %4095 = sbr.rel (%p4093) target = $region56
    $region55: #{condnet3_forward.1} parent=5 // pred_region
      %s4096 = ssub.s32 %s14, 2
      // Predicated region
      $region57: #{condnet3_forward.1} parent=55 // pred_check
        %p4097 = pneg %p111
      $region58: #{condnet3_forward.1} parent=55 // pred_check_branch
        %4099 = sbr.rel (%p4097) target = $region60
      $region59: #{condnet3_forward.1} parent=55 // pred_region
        %p4100 = scmp.lt.s32.totalorder %s20, 1
        %s4101 = scalar_select %p4100, %s20, 1
        %s4102 = smul.addr %s4101, 3
        %s4103 = smul.addr %s4102, 4
        %s4104 = scalar_lea.vmem %s3, %s4103
      $region60: #{condnet3_forward.1} parent=55 // pred_fallthru
        _
      // Predicated region
      $region61: #{condnet3_forward.1} parent=55 // pred_check
        %p4105 = pneg %p137
      $region62: #{condnet3_forward.1} parent=55 // pred_check_branch
        %4107 = sbr.rel (%p4105) target = $region64
      $region63: #{condnet3_forward.1} parent=55 // pred_region
        %p4108 = scmp.lt.s32.totalorder %s20, 1
        %s4109 = scalar_select %p4108, %s20, 1
        %s4110 = smul.addr %s4109, 3
        %s4111 = smul.addr %s4110, 8
        %s4112 = scalar_lea.vmem %s4, %s4111
      $region64: #{condnet3_forward.1} parent=55 // pred_fallthru
        _
      // Predicated region
      $region65: #{condnet3_forward.1} parent=55 // pred_check
        %p4113 = pneg %p163
      $region66: #{condnet3_forward.1} parent=55 // pred_check_branch
        %4115 = sbr.rel (%p4113) target = $region68
      $region67: #{condnet3_forward.1} parent=55 // pred_region
        %p4116 = scmp.lt.s32.totalorder %s20, 1
        %s4117 = scalar_select %p4116, %s20, 1
        %s4118 = smul.addr %s4117, 2
        %s4119 = smul.addr %s4118, 8
        %s4120 = scalar_lea.vmem %s5, %s4119
      $region68: #{condnet3_forward.1} parent=55 // pred_fallthru
        _
      // Predicated region
      $region69: #{condnet3_forward.1} parent=55 // pred_check
        %p4121 = pneg %p189
      $region70: #{condnet3_forward.1} parent=55 // pred_check_branch
        %4123 = sbr.rel (%p4121) target = $region72
      $region71: #{condnet3_forward.1} parent=55 // pred_region
        %p4124 = scmp.lt.s32.totalorder %s20, 1
        %s4125 = scalar_select %p4124, %s20, 1
        %s4126 = smul.addr %s4125, 4
        %s4127 = smul.addr %s4126, 8
        %s4128 = scalar_lea.vmem %s6, %s4127
      $region72: #{condnet3_forward.1} parent=55 // pred_fallthru
        _
      // Predicated region
      $region73: #{condnet3_forward.1} parent=55 // pred_check
        %p4129 = pneg %p215
      $region74: #{condnet3_forward.1} parent=55 // pred_check_branch
        %4131 = sbr.rel (%p4129) target = $region76
      $region75: #{condnet3_forward.1} parent=55 // pred_region
        %p4132 = scmp.lt.s32.totalorder %s20, 1
        %s4133 = scalar_select %p4132, %s20, 1
        %s4134 = smul.addr %s4133, 8
        %s4135 = smul.addr %s4134, 8
        %s4136 = scalar_lea.vmem %s7, %s4135
      $region76: #{condnet3_forward.1} parent=55 // pred_fallthru
        _
    $region56: #{condnet3_forward.1} parent=5 // pred_fallthru
      _
  $region6: #{condnet3_forward.1} parent=0 // loop_footer
    %s18 = sadd.s32 1, %s14
  $region7: #{condnet3_forward.1} parent=0 // loop_footer_branch
    %13 = sbr.rel target = $region3
  $region8: #{condnet3_forward.1} parent=0 // loop_exit
    _

</llo_original>
